<compile_context>
chip_gen: v7x
topology: tpu7x:2x2x1
jax: 0.10.0
libtpu: 0.0.40
codegen_flags: <defaults>
</compile_context>

<pallas_src>
import functools
import math

import jax
import jax.numpy as jnp
from jax import lax
from jax.experimental import pallas as pl
from jax.experimental.pallas import tpu as pltpu


# ----------------------------- Pallas kernel -----------------------------

def _cnn_blocks_kernel(*refs, n_conv, pad, h_in, w_in, cp):
    """Fused n_conv x (conv3x3 + folded-BN shift + ReLU) for one batch element.

    refs layout:
      refs[0]                      x_ref   (1, H, W, Cp) bf16   channel-padded input
      refs[1 : 1+n_conv]           w_refs  (9*Cp, Cp)    bf16   im2col weights, BN scale folded
      refs[1+n_conv : 1+2*n_conv]  s_refs  (1, Cp)       f32    folded BN shift
      refs[1+2*n_conv]             o_ref   (1, Ho, Wo, Cp) f32  lane-dense output
      refs[2+2*n_conv : ]          bufs    2 x (H+2p, W+2p, Cp) f32 VMEM scratch
    """
    x_ref = refs[0]
    w_refs = refs[1:1 + n_conv]
    s_refs = refs[1 + n_conv:1 + 2 * n_conv]
    o_ref = refs[1 + 2 * n_conv]
    bufs = refs[2 + 2 * n_conv:4 + 2 * n_conv]

    # Stage the input into the halo'd scratch buffer (zero border = spatial pad).
    src = bufs[0]
    src[...] = jnp.zeros_like(src)
    src[pad:pad + h_in, pad:pad + w_in, :] = x_ref[0].astype(jnp.float32)

    h, w = h_in, w_in
    for l in range(n_conv):
        ho, wo = h + 2 * pad - 2, w + 2 * pad - 2
        # im2col: 9 shifted static views -> one (Ho*Wo, 9*Cp) bf16 patch matrix.
        cols = [src[ky:ky + ho, kx:kx + wo, :]
                for ky in range(3) for kx in range(3)]
        patches = (jnp.concatenate(cols, axis=-1)
                   .astype(jnp.bfloat16)
                   .reshape(ho * wo, 9 * cp))
        acc = jnp.dot(patches, w_refs[l][...],
                      preferred_element_type=jnp.float32)        # (Ho*Wo, Cp) f32
        acc = jnp.maximum(acc + s_refs[l][...], 0.0)             # BN shift + ReLU
        if l == n_conv - 1:
            o_ref[0] = acc.reshape(ho, wo, cp).astype(o_ref.dtype)
        else:
            dst = bufs[(l + 1) % 2]
            dst[...] = jnp.zeros_like(dst)                       # zero halo for next layer
            dst[pad:pad + ho, pad:pad + wo, :] = acc.reshape(ho, wo, cp)
            src = dst
        h, w = ho, wo


# ----------------------------- wrapper -----------------------------

def cnn_blocks_pallas(x_nchw, params, padding):
    """x_nchw: (N, Cin, H, W) f32 -> (N, Cout, Ho, Wo) f32."""
    n, cin, h, w = x_nchw.shape
    n_conv = len(params)
    cp = 128  # lane-dense padded channel count
    assert cin <= cp and all(p["cout"] <= cp for p in params), "channels > 128 not supported"

    x = jnp.transpose(x_nchw, (0, 2, 3, 1)).astype(jnp.bfloat16)       # NCHW -> NHWC, bf16
    x = jnp.pad(x, ((0, 0), (0, 0), (0, 0), (0, cp - cin)))            # channel pad to 128

    w_mats = [p["w_im2col"] for p in params]     # (9*cp, cp) bf16, BN scale folded
    shifts = [p["shift_p"] for p in params]      # (1, cp) f32
    cout = params[-1]["cout"]

    ho = h + n_conv * (2 * padding - 2)
    wo = w + n_conv * (2 * padding - 2)
    hp, wp = h + 2 * padding, w + 2 * padding

    kernel = functools.partial(_cnn_blocks_kernel, n_conv=n_conv, pad=padding,
                               h_in=h, w_in=w, cp=cp)
    out = pl.pallas_call(
        kernel,
        out_shape=jax.ShapeDtypeStruct((n, ho, wo, cp), jnp.float32),
        grid=(n,),
        in_specs=[pl.BlockSpec((1, h, w, cp), lambda i: (i, 0, 0, 0))]
                + [pl.BlockSpec(m.shape, lambda i: (0, 0)) for m in w_mats]
                + [pl.BlockSpec(s.shape, lambda i: (0, 0)) for s in shifts],
        out_specs=pl.BlockSpec((1, ho, wo, cp), lambda i: (i, 0, 0, 0)),
        scratch_shapes=[pltpu.VMEM((hp, wp, cp), jnp.float32),
                        pltpu.VMEM((hp, wp, cp), jnp.float32)],
        compiler_params=pltpu.CompilerParams(
            dimension_semantics=("parallel",)),
    )(x, *w_mats, *shifts)

    out = out[..., :cout]                       # drop channel padding
    return jnp.transpose(out, (0, 3, 1, 2))     # NHWC -> NCHW


# ----------------------------- parameters -----------------------------

def make_cnn_block_params(key, cin, cout, cp=128, eps=1e-5):
    """Conv2d(bias=False) + eval-mode BatchNorm2d. Returns raw params (for the
    reference) and fused/padded kernel params (BN scale folded, im2col layout)."""
    kconv, kg, kb, km, kv = jax.random.split(key, 5)
    w = jax.random.normal(kconv, (cout, cin, 3, 3), jnp.float32) / math.sqrt(9 * cin)
    gamma = 1.0 + 0.1 * jax.random.normal(kg, (cout,), jnp.float32)
    beta = 0.1 * jax.random.normal(kb, (cout,), jnp.float32)
    rmean = 0.1 * jax.random.normal(km, (cout,), jnp.float32)
    rvar = 1.0 + 0.1 * jax.random.uniform(kv, (cout,), jnp.float32)

    scale = gamma / jnp.sqrt(rvar + eps)
    shift = beta - rmean * scale

    w_folded = w * scale[:, None, None, None]                 # fold BN scale into weights
    w_hwio = jnp.transpose(w_folded, (2, 3, 1, 0))            # (3,3,cin,cout)
    w_p = jnp.pad(w_hwio, ((0, 0), (0, 0), (0, cp - cin), (0, cp - cout)))
    w_im2col = w_p.reshape(9 * cp, cp).astype(jnp.bfloat16)   # (9*cp, cp)
    shift_p = jnp.pad(shift, (0, cp - cout)).reshape(1, cp).astype(jnp.float32)

    return dict(w=w, gamma=gamma, beta=beta, rmean=rmean, rvar=rvar,
                w_im2col=w_im2col, shift_p=shift_p, cin=cin, cout=cout)


# ----------------------------- pure-JAX reference -----------------------------

def cnn_blocks_ref(x_nchw, params, padding, eps=1e-5):
    x = x_nchw.astype(jnp.float32)
    for p in params:
        y = lax.conv_general_dilated(
            x, p["w"], (1, 1), [(padding, padding), (padding, padding)],
            dimension_numbers=("NCHW", "OIHW", "NCHW"))
        scale = p["gamma"] / jnp.sqrt(p["rvar"] + eps)
        shift = p["beta"] - p["rmean"] * scale
        y = y * scale[None, :, None, None] + shift[None, :, None, None]
        x = jnp.maximum(y, 0.0)
    return x


# ------------------------------------ main ------------------------------------

if __name__ == "__main__":
    n_conv, in_channels, out_channels, padding = 2, 4, 8, 1
    batch, spatial = 2, 16

    key = jax.random.PRNGKey(0)
    kx, *klayers = jax.random.split(key, 1 + n_conv)

    params = []
    cin = in_channels
    for l in range(n_conv):
        params.append(make_cnn_block_params(klayers[l], cin, out_channels))
        cin = out_channels

    x = jax.random.normal(kx, (batch, in_channels, spatial, spatial), jnp.float32)

    out = jax.block_until_ready(cnn_blocks_pallas(x, params, padding))
    assert out.shape == (batch, out_channels, spatial, spatial), out.shape

    ref = jax.block_until_ready(cnn_blocks_ref(x, params, padding))
    rel_err = float(jnp.max(jnp.abs(out - ref)) / (jnp.max(jnp.abs(ref)) + 1e-6))
    assert rel_err < 2e-2, f"Pallas/ref mismatch, relative error {rel_err}"

    print("KERNEL_OK")
</pallas_src>

<mosaic_0001>
module attributes {stable_mosaic.version = 11 : i64} {
  func.func @_cnn_blocks_kernel(%arg0: i32, %arg1: memref<1x16x16x128xbf16, #tpu.memory_space<vmem>>, %arg2: memref<1152x128xbf16, #tpu.memory_space<vmem>>, %arg3: memref<1152x128xbf16, #tpu.memory_space<vmem>>, %arg4: memref<1x128xf32, #tpu.memory_space<vmem>>, %arg5: memref<1x128xf32, #tpu.memory_space<vmem>>, %arg6: memref<1x16x16x128xf32, #tpu.memory_space<vmem>>, %arg7: memref<18x18x128xf32, #tpu.memory_space<vmem>>, %arg8: memref<18x18x128xf32, #tpu.memory_space<vmem>>) attributes {dimension_semantics = [#tpu.dimension_semantics<parallel>], iteration_bounds = array<i64: 2>, scalar_prefetch = 0 : i64, scratch_operands = 2 : i64, tpu.core_type = #tpu.core_type<tc>, window_params = [{transform_indices = @transform_0, window_bounds = array<i64: 1, 16, 16, 128>}, {pipeline_mode = #tpu.pipeline_mode<synchronous>, transform_indices = @transform_1, window_bounds = array<i64: 1152, 128>}, {pipeline_mode = #tpu.pipeline_mode<synchronous>, transform_indices = @transform_2, window_bounds = array<i64: 1152, 128>}, {pipeline_mode = #tpu.pipeline_mode<synchronous>, transform_indices = @transform_3, window_bounds = array<i64: 1, 128>}, {pipeline_mode = #tpu.pipeline_mode<synchronous>, transform_indices = @transform_4, window_bounds = array<i64: 1, 128>}, {transform_indices = @transform_5, window_bounds = array<i64: 1, 16, 16, 128>}]} {
    %cst = arith.constant 0.000000e+00 : f32
    %0 = vector.broadcast %cst : f32 to vector<18x18x128xf32>
    %c0 = arith.constant 0 : index
    %c0_0 = arith.constant 0 : index
    %c0_1 = arith.constant 0 : index
    %1 = vector.load %arg7[%c0, %c0_0, %c0_1] : memref<18x18x128xf32, #tpu.memory_space<vmem>>, vector<18x18x128xf32>
    tpu.vector_store %arg7[%c0, %c0_0, %c0_1], %0 {strides = array<i32>} : memref<18x18x128xf32, #tpu.memory_space<vmem>>, vector<18x18x128xf32>,
    %c0_2 = arith.constant 0 : index
    %c0_3 = arith.constant 0 : index
    %c0_4 = arith.constant 0 : index
    %c0_5 = arith.constant 0 : index
    %2 = vector.load %arg1[%c0_2, %c0_3, %c0_4, %c0_5] : memref<1x16x16x128xbf16, #tpu.memory_space<vmem>>, vector<1x16x16x128xbf16>
    %3 = vector.shape_cast %2 : vector<1x16x16x128xbf16> to vector<16x16x128xbf16>
    %4 = arith.extf %3 : vector<16x16x128xbf16> to vector<16x16x128xf32>
    %c1 = arith.constant 1 : index
    %c1_6 = arith.constant 1 : index
    %c0_7 = arith.constant 0 : index
    %5 = vector.load %arg7[%c1, %c1_6, %c0_7] : memref<18x18x128xf32, #tpu.memory_space<vmem>>, vector<16x16x128xf32>
    tpu.vector_store %arg7[%c1, %c1_6, %c0_7], %4 {strides = array<i32>} : memref<18x18x128xf32, #tpu.memory_space<vmem>>, vector<16x16x128xf32>,
    %c0_8 = arith.constant 0 : index
    %c0_9 = arith.constant 0 : index
    %c0_10 = arith.constant 0 : index
    %6 = vector.load %arg7[%c0_8, %c0_9, %c0_10] : memref<18x18x128xf32, #tpu.memory_space<vmem>>, vector<16x16x128xf32>
    %c0_11 = arith.constant 0 : index
    %c1_12 = arith.constant 1 : index
    %c0_13 = arith.constant 0 : index
    %7 = vector.load %arg7[%c0_11, %c1_12, %c0_13] : memref<18x18x128xf32, #tpu.memory_space<vmem>>, vector<16x16x128xf32>
    %c0_14 = arith.constant 0 : index
    %c2 = arith.constant 2 : index
    %c0_15 = arith.constant 0 : index
    %8 = vector.load %arg7[%c0_14, %c2, %c0_15] : memref<18x18x128xf32, #tpu.memory_space<vmem>>, vector<16x16x128xf32>
    %c1_16 = arith.constant 1 : index
    %c0_17 = arith.constant 0 : index
    %c0_18 = arith.constant 0 : index
    %9 = vector.load %arg7[%c1_16, %c0_17, %c0_18] : memref<18x18x128xf32, #tpu.memory_space<vmem>>, vector<16x16x128xf32>
    %c1_19 = arith.constant 1 : index
    %c1_20 = arith.constant 1 : index
    %c0_21 = arith.constant 0 : index
    %10 = vector.load %arg7[%c1_19, %c1_20, %c0_21] : memref<18x18x128xf32, #tpu.memory_space<vmem>>, vector<16x16x128xf32>
    %c1_22 = arith.constant 1 : index
    %c2_23 = arith.constant 2 : index
    %c0_24 = arith.constant 0 : index
    %11 = vector.load %arg7[%c1_22, %c2_23, %c0_24] : memref<18x18x128xf32, #tpu.memory_space<vmem>>, vector<16x16x128xf32>
    %c2_25 = arith.constant 2 : index
    %c0_26 = arith.constant 0 : index
    %c0_27 = arith.constant 0 : index
    %12 = vector.load %arg7[%c2_25, %c0_26, %c0_27] : memref<18x18x128xf32, #tpu.memory_space<vmem>>, vector<16x16x128xf32>
    %c2_28 = arith.constant 2 : index
    %c1_29 = arith.constant 1 : index
    %c0_30 = arith.constant 0 : index
    %13 = vector.load %arg7[%c2_28, %c1_29, %c0_30] : memref<18x18x128xf32, #tpu.memory_space<vmem>>, vector<16x16x128xf32>
    %c2_31 = arith.constant 2 : index
    %c2_32 = arith.constant 2 : index
    %c0_33 = arith.constant 0 : index
    %14 = vector.load %arg7[%c2_31, %c2_32, %c0_33] : memref<18x18x128xf32, #tpu.memory_space<vmem>>, vector<16x16x128xf32>
    %15 = tpu.concatenate %6, %7, %8, %9, %10, %11, %12, %13, %14 in 2 : vector<16x16x128xf32>, vector<16x16x128xf32>, vector<16x16x128xf32>, vector<16x16x128xf32>, vector<16x16x128xf32>, vector<16x16x128xf32>, vector<16x16x128xf32>, vector<16x16x128xf32>, vector<16x16x128xf32> -> vector<16x16x1152xf32>
    %16 = arith.truncf %15 : vector<16x16x1152xf32> to vector<16x16x1152xbf16>
    %17 = vector.shape_cast %16 : vector<16x16x1152xbf16> to vector<256x1152xbf16>
    %c0_34 = arith.constant 0 : index
    %c0_35 = arith.constant 0 : index
    %18 = vector.load %arg2[%c0_34, %c0_35] : memref<1152x128xbf16, #tpu.memory_space<vmem>>, vector<1152x128xbf16>
    %cst_36 = arith.constant dense<0.000000e+00> : vector<256x128xf32>
    %19 = tpu.matmul %17, %18, %cst_36 {dimension_numbers = #tpu.dot_dimension_numbers<[1], [0], [0], [1], [0, 0, 1, 1], [], []>} : vector<256x1152xbf16>, vector<1152x128xbf16>, vector<256x128xf32> -> vector<256x128xf32>
    %c0_37 = arith.constant 0 : index
    %c0_38 = arith.constant 0 : index
    %20 = vector.load %arg4[%c0_37, %c0_38] : memref<1x128xf32, #tpu.memory_space<vmem>>, vector<1x128xf32>
    %21 = vector.broadcast %20 : vector<1x128xf32> to vector<256x128xf32>
    %22 = arith.addf %19, %21 : vector<256x128xf32>
    %cst_39 = arith.constant 0.000000e+00 : f32
    %23 = vector.broadcast %cst_39 : f32 to vector<256x128xf32>
    %24 = arith.maximumf %22, %23 : vector<256x128xf32>
    %cst_40 = arith.constant 0.000000e+00 : f32
    %25 = vector.broadcast %cst_40 : f32 to vector<18x18x128xf32>
    %c0_41 = arith.constant 0 : index
    %c0_42 = arith.constant 0 : index
    %c0_43 = arith.constant 0 : index
    %26 = vector.load %arg8[%c0_41, %c0_42, %c0_43] : memref<18x18x128xf32, #tpu.memory_space<vmem>>, vector<18x18x128xf32>
    tpu.vector_store %arg8[%c0_41, %c0_42, %c0_43], %25 {strides = array<i32>} : memref<18x18x128xf32, #tpu.memory_space<vmem>>, vector<18x18x128xf32>,
    %27 = vector.shape_cast %24 : vector<256x128xf32> to vector<16x16x128xf32>
    %c1_44 = arith.constant 1 : index
    %c1_45 = arith.constant 1 : index
    %c0_46 = arith.constant 0 : index
    %28 = vector.load %arg8[%c1_44, %c1_45, %c0_46] : memref<18x18x128xf32, #tpu.memory_space<vmem>>, vector<16x16x128xf32>
    tpu.vector_store %arg8[%c1_44, %c1_45, %c0_46], %27 {strides = array<i32>} : memref<18x18x128xf32, #tpu.memory_space<vmem>>, vector<16x16x128xf32>,
    %c0_47 = arith.constant 0 : index
    %c0_48 = arith.constant 0 : index
    %c0_49 = arith.constant 0 : index
    %29 = vector.load %arg8[%c0_47, %c0_48, %c0_49] : memref<18x18x128xf32, #tpu.memory_space<vmem>>, vector<16x16x128xf32>
    %c0_50 = arith.constant 0 : index
    %c1_51 = arith.constant 1 : index
    %c0_52 = arith.constant 0 : index
    %30 = vector.load %arg8[%c0_50, %c1_51, %c0_52] : memref<18x18x128xf32, #tpu.memory_space<vmem>>, vector<16x16x128xf32>
    %c0_53 = arith.constant 0 : index
    %c2_54 = arith.constant 2 : index
    %c0_55 = arith.constant 0 : index
    %31 = vector.load %arg8[%c0_53, %c2_54, %c0_55] : memref<18x18x128xf32, #tpu.memory_space<vmem>>, vector<16x16x128xf32>
    %c1_56 = arith.constant 1 : index
    %c0_57 = arith.constant 0 : index
    %c0_58 = arith.constant 0 : index
    %32 = vector.load %arg8[%c1_56, %c0_57, %c0_58] : memref<18x18x128xf32, #tpu.memory_space<vmem>>, vector<16x16x128xf32>
    %c1_59 = arith.constant 1 : index
    %c1_60 = arith.constant 1 : index
    %c0_61 = arith.constant 0 : index
    %33 = vector.load %arg8[%c1_59, %c1_60, %c0_61] : memref<18x18x128xf32, #tpu.memory_space<vmem>>, vector<16x16x128xf32>
    %c1_62 = arith.constant 1 : index
    %c2_63 = arith.constant 2 : index
    %c0_64 = arith.constant 0 : index
    %34 = vector.load %arg8[%c1_62, %c2_63, %c0_64] : memref<18x18x128xf32, #tpu.memory_space<vmem>>, vector<16x16x128xf32>
    %c2_65 = arith.constant 2 : index
    %c0_66 = arith.constant 0 : index
    %c0_67 = arith.constant 0 : index
    %35 = vector.load %arg8[%c2_65, %c0_66, %c0_67] : memref<18x18x128xf32, #tpu.memory_space<vmem>>, vector<16x16x128xf32>
    %c2_68 = arith.constant 2 : index
    %c1_69 = arith.constant 1 : index
    %c0_70 = arith.constant 0 : index
    %36 = vector.load %arg8[%c2_68, %c1_69, %c0_70] : memref<18x18x128xf32, #tpu.memory_space<vmem>>, vector<16x16x128xf32>
    %c2_71 = arith.constant 2 : index
    %c2_72 = arith.constant 2 : index
    %c0_73 = arith.constant 0 : index
    %37 = vector.load %arg8[%c2_71, %c2_72, %c0_73] : memref<18x18x128xf32, #tpu.memory_space<vmem>>, vector<16x16x128xf32>
    %38 = tpu.concatenate %29, %30, %31, %32, %33, %34, %35, %36, %37 in 2 : vector<16x16x128xf32>, vector<16x16x128xf32>, vector<16x16x128xf32>, vector<16x16x128xf32>, vector<16x16x128xf32>, vector<16x16x128xf32>, vector<16x16x128xf32>, vector<16x16x128xf32>, vector<16x16x128xf32> -> vector<16x16x1152xf32>
    %39 = arith.truncf %38 : vector<16x16x1152xf32> to vector<16x16x1152xbf16>
    %40 = vector.shape_cast %39 : vector<16x16x1152xbf16> to vector<256x1152xbf16>
    %c0_74 = arith.constant 0 : index
    %c0_75 = arith.constant 0 : index
    %41 = vector.load %arg3[%c0_74, %c0_75] : memref<1152x128xbf16, #tpu.memory_space<vmem>>, vector<1152x128xbf16>
    %cst_76 = arith.constant dense<0.000000e+00> : vector<256x128xf32>
    %42 = tpu.matmul %40, %41, %cst_76 {dimension_numbers = #tpu.dot_dimension_numbers<[1], [0], [0], [1], [0, 0, 1, 1], [], []>} : vector<256x1152xbf16>, vector<1152x128xbf16>, vector<256x128xf32> -> vector<256x128xf32>
    %c0_77 = arith.constant 0 : index
    %c0_78 = arith.constant 0 : index
    %43 = vector.load %arg5[%c0_77, %c0_78] : memref<1x128xf32, #tpu.memory_space<vmem>>, vector<1x128xf32>
    %44 = vector.broadcast %43 : vector<1x128xf32> to vector<256x128xf32>
    %45 = arith.addf %42, %44 : vector<256x128xf32>
    %cst_79 = arith.constant 0.000000e+00 : f32
    %46 = vector.broadcast %cst_79 : f32 to vector<256x128xf32>
    %47 = arith.maximumf %45, %46 : vector<256x128xf32>
    %48 = vector.shape_cast %47 : vector<256x128xf32> to vector<16x16x128xf32>
    %c0_80 = arith.constant 0 : index
    %c0_81 = arith.constant 0 : index
    %c0_82 = arith.constant 0 : index
    %c0_83 = arith.constant 0 : index
    %49 = vector.load %arg6[%c0_80, %c0_81, %c0_82, %c0_83] : memref<1x16x16x128xf32, #tpu.memory_space<vmem>>, vector<1x16x16x128xf32>
    %50 = vector.shape_cast %49 : vector<1x16x16x128xf32> to vector<16x16x128xf32>
    %51 = vector.shape_cast %48 : vector<16x16x128xf32> to vector<1x16x16x128xf32>
    tpu.vector_store %arg6[%c0_80, %c0_81, %c0_82, %c0_83], %51 {strides = array<i32>} : memref<1x16x16x128xf32, #tpu.memory_space<vmem>>, vector<1x16x16x128xf32>,
    return
  }
  func.func @transform_0(%arg0: i32) -> (i32, i32, i32, i32) {
    %c0_i32 = arith.constant 0 : i32
    %c0_i32_0 = arith.constant 0 : i32
    %c0_i32_1 = arith.constant 0 : i32
    %c0_i32_2 = arith.constant 0 : i32
    return %arg0, %c0_i32, %c0_i32_0, %c0_i32_1 : i32, i32, i32, i32
  }
  func.func @transform_1(%arg0: i32) -> (i32, i32) {
    %c0_i32 = arith.constant 0 : i32
    %c0_i32_0 = arith.constant 0 : i32
    %c0_i32_1 = arith.constant 0 : i32
    return %c0_i32, %c0_i32_0 : i32, i32
  }
  func.func @transform_2(%arg0: i32) -> (i32, i32) {
    %c0_i32 = arith.constant 0 : i32
    %c0_i32_0 = arith.constant 0 : i32
    %c0_i32_1 = arith.constant 0 : i32
    return %c0_i32, %c0_i32_0 : i32, i32
  }
  func.func @transform_3(%arg0: i32) -> (i32, i32) {
    %c0_i32 = arith.constant 0 : i32
    %c0_i32_0 = arith.constant 0 : i32
    %c0_i32_1 = arith.constant 0 : i32
    return %c0_i32, %c0_i32_0 : i32, i32
  }
  func.func @transform_4(%arg0: i32) -> (i32, i32) {
    %c0_i32 = arith.constant 0 : i32
    %c0_i32_0 = arith.constant 0 : i32
    %c0_i32_1 = arith.constant 0 : i32
    return %c0_i32, %c0_i32_0 : i32, i32
  }
  func.func @transform_5(%arg0: i32) -> (i32, i32, i32, i32) {
    %c0_i32 = arith.constant 0 : i32
    %c0_i32_0 = arith.constant 0 : i32
    %c0_i32_1 = arith.constant 0 : i32
    %c0_i32_2 = arith.constant 0 : i32
    return %arg0, %c0_i32, %c0_i32_0, %c0_i32_1 : i32, i32, i32, i32
  }
}

</mosaic_0001>

<llo_original>
// kernel: tpu_custom_call.1
$region0: #{tpu_custom_call.1}
  #allocation0 [shape = 'u32[]', space=smem, size = 0x4, offset = 0x4, fixed_abs, tag = 'smem constant byte address 0x4 - core index']
  #allocation1 [shape = 'u32[144,128]{1,0:T(1,128)}', space=vmem, size = 0x12000, scoped, tag = 'internal scratch']
  #allocation2 [shape = 'f32[18,18,128]{2,1,0:T(8,128)}', space=vmem, size = 0x36000, scoped, tag = 'scratch operand']
  #allocation3 [shape = 'f32[18,18,128]{2,1,0:T(8,128)}', space=vmem, size = 0x36000, scoped, tag = 'scratch operand']
  %s0 = inlined_call_operand.hbm [shape: bf16[2,16,16,128], index: 0, kind: input, shape index: {}]
  %s1 = inlined_call_operand.hbm [shape: bf16[1152,128], index: 1, kind: input, shape index: {}]
  %s2 = inlined_call_operand.hbm [shape: bf16[1152,128], index: 2, kind: input, shape index: {}]
  %s3 = inlined_call_operand.vmem [shape: f32[1,128], index: 3, kind: input, shape index: {}]
  %s4 = inlined_call_operand.vmem [shape: f32[1,128], index: 4, kind: input, shape index: {}]
  %s5 = inlined_call_operand.hbm [shape: f32[2,16,16,128], index: 5, kind: output, shape index: {}]
  %s6 = sld [smem:[#allocation0]]
  $region65: #{tpu_custom_call.1} parent=0
    _
  %s8 = ssub.s32 1, %s6
  %s9 = scalar_select 0, %s8, %s6
  $region1: #{tpu_custom_call.1} parent=0
    #allocation4 [shape = 'u8[131072]{0}', space=vmem, size = 0x20000, scoped, tag = 'input window, operand 0']
    #allocation5 [shape = 's32[2]{0}', space=sflag, size = 0x8, scoped, tag = 'scoped memory for tpu_custom_call.1']
    #allocation6 [shape = 's32[2]{0}', space=sflag, size = 0x8, scoped, tag = 'scoped memory for tpu_custom_call.1']
    #allocation7 [shape = 'u8[294912]{0}', space=vmem, size = 0x48000, scoped, tag = 'input window, operand 1, single buffered']
    #allocation8 [shape = 's32[1]{0}', space=sflag, size = 0x4, scoped, tag = 'scoped memory for tpu_custom_call.1']
    #allocation9 [shape = 'u8[294912]{0}', space=vmem, size = 0x48000, scoped, tag = 'input window, operand 2, single buffered']
    #allocation10 [shape = 'u8[262144]{0}', space=vmem, size = 0x40000, scoped, tag = 'output window, operand 0']
    %10 = vsyncpa [#allocation5], 0
    %s11 = scalar_lea.sflag [#allocation5], 1
    %12 = vsyncpa %s11, 0
    %13 = vsyncpa [#allocation8], 0
    %14 = vsyncpa [#allocation6], 0
    %s15 = scalar_lea.sflag [#allocation6], 1
    %16 = vsyncpa %s15, 0
    loop: start=0, step=1, limit=4
    $region2: #{tpu_custom_call.1} parent=1 // loop_pre_header
      _
    $region3: #{tpu_custom_call.1} parent=1 // loop_header
      %s18 = sphi 0, %s22
      %p19 = scmp.ge.s32.totalorder %s18, 4
      %s28 = sphi 0, %s30
      %s31 = sphi 0, %s28
      %s32 = sphi 0, %s31
      %s48 = sphi 0, %s32
      %s52 = sphi 0, %s52
      %s54 = sphi 0, %s52
      %s55 = sphi 0, %s54
      %s69 = sphi 0, %s55
      %s73 = sphi 0, %s73
      %s75 = sphi 0, %s73
      %s76 = sphi 0, %s75
      %s90 = sphi 0, %s76
      %s94 = sphi 0, %s94
      %s96 = sphi 0, %s94
      %s97 = sphi 0, %s96
      %s111 = sphi 0, %s97
      %s115 = sphi 0, %s115
      %s117 = sphi 0, %s115
      %s118 = sphi 0, %s117
      %s132 = sphi 0, %s118
      %s138 = sphi 0, %s140
      %s141 = sphi 0, %s138
      %s142 = sphi 0, %s141
      %s158 = sphi 0, %s142
    $region4: #{tpu_custom_call.1} parent=1 // loop_header_branch
      %21 = sbr.rel (%p19) target = $region8
    $region5: #{tpu_custom_call.1} parent=1 // loop_body
      %s23 = ssub.s32 %s18, 1
      %s24 = ssub.s32 %s18, 2
      %s25 = sadd.s32 %s18, 1
      %s26 = ssub.s32 %s18, %s25
      %p27 = scmp.eq.s32.totalorder %s26, 0
      %s29 = sadd.s32 %s28, 1
      %s30 = scalar_select %p27, %s28, %s29
      %p33 = pneg %p27
      %p34 = scmp.eq.s32.totalorder %s18, 1
      %p35 = por %p33, %p34
      %p36 = scmp.ne.s32.totalorder %s28, %s31
      %p37 = scmp.eq.s32.totalorder %s18, 0
      %p38 = por %p36, %p37
      %p39 = scmp.ne.s32.totalorder %s28, %s31
      %p40 = scmp.eq.s32.totalorder %s23, 1
      %p41 = por %p39, %p40
      %p42 = scmp.ne.s32.totalorder %s31, %s32
      %p43 = scmp.eq.s32.totalorder %s23, 0
      %p44 = por %p42, %p43
      %p45 = scmp.ne.s32.totalorder %s31, %s32
      %p46 = scmp.eq.s32.totalorder %s24, 1
      %p47 = por %p45, %p46
      %p49 = scmp.ne.s32.totalorder %s32, %s48
      %p50 = scmp.eq.s32.totalorder %s24, 0
      %p51 = por %p49, %p50
      %s53 = sadd.s32 %s52, 1
      %p56 = scmp.eq.s32.totalorder %s18, 1
      %p57 = scmp.ne.s32.totalorder %s52, %s54
      %p58 = scmp.eq.s32.totalorder %s18, 0
      %p59 = por %p57, %p58
      %p60 = scmp.ne.s32.totalorder %s52, %s54
      %p61 = scmp.eq.s32.totalorder %s23, 1
      %p62 = por %p60, %p61
      %p63 = scmp.ne.s32.totalorder %s54, %s55
      %p64 = scmp.eq.s32.totalorder %s23, 0
      %p65 = por %p63, %p64
      %p66 = scmp.ne.s32.totalorder %s54, %s55
      %p67 = scmp.eq.s32.totalorder %s24, 1
      %p68 = por %p66, %p67
      %p70 = scmp.ne.s32.totalorder %s55, %s69
      %p71 = scmp.eq.s32.totalorder %s24, 0
      %p72 = por %p70, %p71
      %s74 = sadd.s32 %s73, 1
      %p77 = scmp.eq.s32.totalorder %s18, 1
      %p78 = scmp.ne.s32.totalorder %s73, %s75
      %p79 = scmp.eq.s32.totalorder %s18, 0
      %p80 = por %p78, %p79
      %p81 = scmp.ne.s32.totalorder %s73, %s75
      %p82 = scmp.eq.s32.totalorder %s23, 1
      %p83 = por %p81, %p82
      %p84 = scmp.ne.s32.totalorder %s75, %s76
      %p85 = scmp.eq.s32.totalorder %s23, 0
      %p86 = por %p84, %p85
      %p87 = scmp.ne.s32.totalorder %s75, %s76
      %p88 = scmp.eq.s32.totalorder %s24, 1
      %p89 = por %p87, %p88
      %p91 = scmp.ne.s32.totalorder %s76, %s90
      %p92 = scmp.eq.s32.totalorder %s24, 0
      %p93 = por %p91, %p92
      %s95 = sadd.s32 %s94, 1
      %p98 = scmp.eq.s32.totalorder %s18, 1
      %p99 = scmp.ne.s32.totalorder %s94, %s96
      %p100 = scmp.eq.s32.totalorder %s18, 0
      %p101 = por %p99, %p100
      %p102 = scmp.ne.s32.totalorder %s94, %s96
      %p103 = scmp.eq.s32.totalorder %s23, 1
      %p104 = por %p102, %p103
      %p105 = scmp.ne.s32.totalorder %s96, %s97
      %p106 = scmp.eq.s32.totalorder %s23, 0
      %p107 = por %p105, %p106
      %p108 = scmp.ne.s32.totalorder %s96, %s97
      %p109 = scmp.eq.s32.totalorder %s24, 1
      %p110 = por %p108, %p109
      %p112 = scmp.ne.s32.totalorder %s97, %s111
      %p113 = scmp.eq.s32.totalorder %s24, 0
      %p114 = por %p112, %p113
      %s116 = sadd.s32 %s115, 1
      %p119 = scmp.eq.s32.totalorder %s18, 1
      %p120 = scmp.ne.s32.totalorder %s115, %s117
      %p121 = scmp.eq.s32.totalorder %s18, 0
      %p122 = por %p120, %p121
      %p123 = scmp.ne.s32.totalorder %s115, %s117
      %p124 = scmp.eq.s32.totalorder %s23, 1
      %p125 = por %p123, %p124
      %p126 = scmp.ne.s32.totalorder %s117, %s118
      %p127 = scmp.eq.s32.totalorder %s23, 0
      %p128 = por %p126, %p127
      %p129 = scmp.ne.s32.totalorder %s117, %s118
      %p130 = scmp.eq.s32.totalorder %s24, 1
      %p131 = por %p129, %p130
      %p133 = scmp.ne.s32.totalorder %s118, %s132
      %p134 = scmp.eq.s32.totalorder %s24, 0
      %p135 = por %p133, %p134
      %s136 = ssub.s32 %s18, %s25
      %p137 = scmp.eq.s32.totalorder %s136, 0
      %s139 = sadd.s32 %s138, 1
      %s140 = scalar_select %p137, %s138, %s139
      %p143 = pneg %p137
      %p144 = scmp.eq.s32.totalorder %s18, 1
      %p145 = por %p143, %p144
      %p146 = scmp.ne.s32.totalorder %s138, %s141
      %p147 = scmp.eq.s32.totalorder %s18, 0
      %p148 = por %p146, %p147
      %p149 = scmp.ne.s32.totalorder %s138, %s141
      %p150 = scmp.eq.s32.totalorder %s23, 1
      %p151 = por %p149, %p150
      %p152 = scmp.ne.s32.totalorder %s141, %s142
      %p153 = scmp.eq.s32.totalorder %s23, 0
      %p154 = por %p152, %p153
      %p155 = scmp.ne.s32.totalorder %s141, %s142
      %p156 = scmp.eq.s32.totalorder %s24, 1
      %p157 = por %p155, %p156
      %p159 = scmp.ne.s32.totalorder %s142, %s158
      %p160 = scmp.eq.s32.totalorder %s24, 0
      %p161 = por %p159, %p160
      %p162 = scmp.le.s32.totalorder 1, %s18
      %p163 = scmp.lt.s32.totalorder %s18, 3
      %p164 = pnand %p162, %p163
      %p165 = pneg %p164
      // Predicated region
      $region9: #{tpu_custom_call.1} parent=5 // pred_check
        _
      $region10: #{tpu_custom_call.1} parent=5 // pred_check_branch
        %167 = sbr.rel (%p164) target = $region12
      $region11: #{tpu_custom_call.1} parent=5 // pred_region
        %s168 = ssub.s32 %s18, 1
        // Predicated region
        $region13: #{tpu_custom_call.1} parent=11 // pred_check
          %p169 = pneg %p65
        $region14: #{tpu_custom_call.1} parent=11 // pred_check_branch
          %171 = sbr.rel (%p169) target = $region16
        $region15: #{tpu_custom_call.1} parent=11 // pred_region
          %s173 = ssub.s32 9216, 9216
          %174 = vsyncadd [#allocation8], %s173
          %s175 = sshll.u32 [#allocation7], 4
          %s176 = int_to_ptr.vmem [resolvable:$true] %s175
          %181 = dma.hbm_to_vmem [thread:$0]  %s1, 9216, %s176, [#allocation8], 64, 64, 4
        $region16: #{tpu_custom_call.1} parent=11 // pred_fallthru
          _
        // Predicated region
        $region17: #{tpu_custom_call.1} parent=11 // pred_check
          %p182 = pneg %p86
        $region18: #{tpu_custom_call.1} parent=11 // pred_check_branch
          %184 = sbr.rel (%p182) target = $region20
        $region19: #{tpu_custom_call.1} parent=11 // pred_region
          %s186 = ssub.s32 9216, 9216
          %187 = vsyncadd [#allocation8], %s186
          %s188 = sshll.u32 [#allocation9], 4
          %s189 = int_to_ptr.vmem [resolvable:$true] %s188
          %194 = dma.hbm_to_vmem [thread:$0]  %s2, 9216, %s189, [#allocation8], 64, 64, 4
        $region20: #{tpu_custom_call.1} parent=11 // pred_fallthru
          _
        // Predicated region
        $region21: #{tpu_custom_call.1} parent=11 // pred_check
          %p195 = pneg %p107
        $region22: #{tpu_custom_call.1} parent=11 // pred_check_branch
          %197 = sbr.rel (%p195) target = $region24
        $region23: #{tpu_custom_call.1} parent=11 // pred_region
          _
        $region24: #{tpu_custom_call.1} parent=11 // pred_fallthru
          _
        // Predicated region
        $region25: #{tpu_custom_call.1} parent=11 // pred_check
          %p198 = pneg %p128
        $region26: #{tpu_custom_call.1} parent=11 // pred_check_branch
          %200 = sbr.rel (%p198) target = $region28
        $region27: #{tpu_custom_call.1} parent=11 // pred_region
          _
        $region28: #{tpu_custom_call.1} parent=11 // pred_fallthru
          _
      $region12: #{tpu_custom_call.1} parent=5 // pred_fallthru
        _
      %p201 = scmp.lt.s32.totalorder %s18, 2
      // Predicated region
      $region29: #{tpu_custom_call.1} parent=5 // pred_check
        %p202 = pneg %p201
      $region30: #{tpu_custom_call.1} parent=5 // pred_check_branch
        %204 = sbr.rel (%p202) target = $region32
      $region31: #{tpu_custom_call.1} parent=5 // pred_region
        // Predicated region
        $region33: #{tpu_custom_call.1} parent=31 // pred_check
          %p205 = pneg %p38
        $region34: #{tpu_custom_call.1} parent=31 // pred_check_branch
          %207 = sbr.rel (%p205) target = $region36
        $region35: #{tpu_custom_call.1} parent=31 // pred_region
          %s208 = sand.u32 %s28, 1
          %s209 = scalar_lea.sflag [#allocation5], %s208
          %s210 = sand.u32 %s28, 1
          %s211 = smul.addr %s210, 128
          %s212 = scalar_lea.vmem [#allocation4], %s211
          %s214 = ssub.s32 2048, 2048
          %215 = vsyncadd %s209, %s214
          %s216 = smul.addr %s18, 32
          %s217 = smul.addr %s216, 64
          %s218 = scalar_lea.hbm %s0, %s217
          %s219 = sshll.u32 %s212, 4
          %s220 = int_to_ptr.vmem [resolvable:$true] %s219
          %225 = dma.hbm_to_vmem [thread:$0]  %s218, 2048, %s220, %s209, 64, 64, 4
        $region36: #{tpu_custom_call.1} parent=31 // pred_fallthru
          _
      $region32: #{tpu_custom_call.1} parent=5 // pred_fallthru
        _
      %p226 = scmp.le.s32.totalorder 1, %s18
      %p227 = scmp.lt.s32.totalorder %s18, 3
      %p228 = pnand %p226, %p227
      %p229 = pneg %p228
      // Predicated region
      $region37: #{tpu_custom_call.1} parent=5 // pred_check
        _
      $region38: #{tpu_custom_call.1} parent=5 // pred_check_branch
        %231 = sbr.rel (%p228) target = $region40
      $region39: #{tpu_custom_call.1} parent=5 // pred_region
        %s232 = ssub.s32 %s18, 1
        %s233 = sand.u32 %s31, 1
        %s234 = scalar_lea.sflag [#allocation5], %s233
        %s235 = sand.u32 %s31, 1
        %s236 = smul.addr %s235, 128
        %s237 = scalar_lea.vmem [#allocation4], %s236
        // Predicated region
        $region41: #{tpu_custom_call.1} parent=39 // pred_check
          %p238 = pneg %p44
        $region42: #{tpu_custom_call.1} parent=39 // pred_check_branch
          %240 = sbr.rel (%p238) target = $region44
        $region43: #{tpu_custom_call.1} parent=39 // pred_region
          %241 = dma.done %s234, 2048
        $region44: #{tpu_custom_call.1} parent=39 // pred_fallthru
          _
        // Predicated region
        $region45: #{tpu_custom_call.1} parent=39 // pred_check
          %p242 = pneg %p65
        $region46: #{tpu_custom_call.1} parent=39 // pred_check_branch
          %244 = sbr.rel (%p242) target = $region48
        $region47: #{tpu_custom_call.1} parent=39 // pred_region
          %245 = dma.done [#allocation8], 9216
        $region48: #{tpu_custom_call.1} parent=39 // pred_fallthru
          _
        // Predicated region
        $region49: #{tpu_custom_call.1} parent=39 // pred_check
          %p246 = pneg %p86
        $region50: #{tpu_custom_call.1} parent=39 // pred_check_branch
          %248 = sbr.rel (%p246) target = $region52
        $region51: #{tpu_custom_call.1} parent=39 // pred_region
          %249 = dma.done [#allocation8], 9216
        $region52: #{tpu_custom_call.1} parent=39 // pred_fallthru
          _
        %s250 = sand.u32 %s31, 1
        %s251 = scalar_lea.sflag [#allocation5], %s250
        %s252 = sand.u32 %s31, 1
        %s253 = smul.addr %s252, 128
        %s254 = scalar_lea.vmem [#allocation4], %s253
        %p255 = pneg %p44
        %p256 = pneg %p41
        %p257 = pneg %p65
        %p258 = pneg %p62
        %p259 = pneg %p86
        %p260 = pneg %p83
        %p261 = pneg %p107
        %p262 = pneg %p104
        %p263 = pneg %p128
        %p264 = pneg %p125
        %p265 = pneg %p154
        %p266 = pneg %p151
        %s267 = sand.u32 %s141, 1
        %s268 = scalar_lea.sflag [#allocation6], %s267
        %s269 = sand.u32 %s141, 1
        %s270 = smul.addr %s269, 256
        %s271 = scalar_lea.vmem [#allocation10], %s270
        %273 = vst [vmem:[#allocation2] sm:$0xff] 0.0
        %274 = vst [vmem:[#allocation2 + $0x8] sm:$0xff] 0.0
        %275 = vst [vmem:[#allocation2 + $0x10] sm:$0x3] 0.0
        %276 = vst [vmem:[#allocation2 + $0x18] sm:$0xff] 0.0
        %277 = vst [vmem:[#allocation2 + $0x20] sm:$0xff] 0.0
        %278 = vst [vmem:[#allocation2 + $0x28] sm:$0x3] 0.0
        %279 = vst [vmem:[#allocation2 + $0x30] sm:$0xff] 0.0
        %280 = vst [vmem:[#allocation2 + $0x38] sm:$0xff] 0.0
        %281 = vst [vmem:[#allocation2 + $0x40] sm:$0x3] 0.0
        %282 = vst [vmem:[#allocation2 + $0x48] sm:$0xff] 0.0
        %283 = vst [vmem:[#allocation2 + $0x50] sm:$0xff] 0.0
        %284 = vst [vmem:[#allocation2 + $0x58] sm:$0x3] 0.0
        %285 = vst [vmem:[#allocation2 + $0x60] sm:$0xff] 0.0
        %286 = vst [vmem:[#allocation2 + $0x68] sm:$0xff] 0.0
        %287 = vst [vmem:[#allocation2 + $0x70] sm:$0x3] 0.0
        %288 = vst [vmem:[#allocation2 + $0x78] sm:$0xff] 0.0
        %289 = vst [vmem:[#allocation2 + $0x80] sm:$0xff] 0.0
        %290 = vst [vmem:[#allocation2 + $0x88] sm:$0x3] 0.0
        %291 = vst [vmem:[#allocation2 + $0x90] sm:$0xff] 0.0
        %292 = vst [vmem:[#allocation2 + $0x98] sm:$0xff] 0.0
        %293 = vst [vmem:[#allocation2 + $0xa0] sm:$0x3] 0.0
        %294 = vst [vmem:[#allocation2 + $0xa8] sm:$0xff] 0.0
        %295 = vst [vmem:[#allocation2 + $0xb0] sm:$0xff] 0.0
        %296 = vst [vmem:[#allocation2 + $0xb8] sm:$0x3] 0.0
        %297 = vst [vmem:[#allocation2 + $0xc0] sm:$0xff] 0.0
        %298 = vst [vmem:[#allocation2 + $0xc8] sm:$0xff] 0.0
        %299 = vst [vmem:[#allocation2 + $0xd0] sm:$0x3] 0.0
        %300 = vst [vmem:[#allocation2 + $0xd8] sm:$0xff] 0.0
        %301 = vst [vmem:[#allocation2 + $0xe0] sm:$0xff] 0.0
        %302 = vst [vmem:[#allocation2 + $0xe8] sm:$0x3] 0.0
        %303 = vst [vmem:[#allocation2 + $0xf0] sm:$0xff] 0.0
        %304 = vst [vmem:[#allocation2 + $0xf8] sm:$0xff] 0.0
        %305 = vst [vmem:[#allocation2 + $0x100] sm:$0x3] 0.0
        %306 = vst [vmem:[#allocation2 + $0x108] sm:$0xff] 0.0
        %307 = vst [vmem:[#allocation2 + $0x110] sm:$0xff] 0.0
        %308 = vst [vmem:[#allocation2 + $0x118] sm:$0x3] 0.0
        %309 = vst [vmem:[#allocation2 + $0x120] sm:$0xff] 0.0
        %310 = vst [vmem:[#allocation2 + $0x128] sm:$0xff] 0.0
        %311 = vst [vmem:[#allocation2 + $0x130] sm:$0x3] 0.0
        %312 = vst [vmem:[#allocation2 + $0x138] sm:$0xff] 0.0
        %313 = vst [vmem:[#allocation2 + $0x140] sm:$0xff] 0.0
        %314 = vst [vmem:[#allocation2 + $0x148] sm:$0x3] 0.0
        %315 = vst [vmem:[#allocation2 + $0x150] sm:$0xff] 0.0
        %316 = vst [vmem:[#allocation2 + $0x158] sm:$0xff] 0.0
        %317 = vst [vmem:[#allocation2 + $0x160] sm:$0x3] 0.0
        %318 = vst [vmem:[#allocation2 + $0x168] sm:$0xff] 0.0
        %319 = vst [vmem:[#allocation2 + $0x170] sm:$0xff] 0.0
        %320 = vst [vmem:[#allocation2 + $0x178] sm:$0x3] 0.0
        %321 = vst [vmem:[#allocation2 + $0x180] sm:$0xff] 0.0
        %322 = vst [vmem:[#allocation2 + $0x188] sm:$0xff] 0.0
        %323 = vst [vmem:[#allocation2 + $0x190] sm:$0x3] 0.0
        %324 = vst [vmem:[#allocation2 + $0x198] sm:$0xff] 0.0
        %325 = vst [vmem:[#allocation2 + $0x1a0] sm:$0xff] 0.0
        %326 = vst [vmem:[#allocation2 + $0x1a8] sm:$0x3] 0.0
        %v327 = vld [vmem:[%s237] sm:$0xf]
        %v328 = vld [vmem:[%s237 + $0x4] sm:$0xf]
        %v329 = vld [vmem:[%s237 + $0x8] sm:$0xf]
        %v330 = vld [vmem:[%s237 + $0xc] sm:$0xf]
        %v331 = vld [vmem:[%s237 + $0x10] sm:$0xf]
        %v332 = vld [vmem:[%s237 + $0x14] sm:$0xf]
        %v333 = vld [vmem:[%s237 + $0x18] sm:$0xf]
        %v334 = vld [vmem:[%s237 + $0x1c] sm:$0xf]
        %v335 = vld [vmem:[%s237 + $0x20] sm:$0xf]
        %v336 = vld [vmem:[%s237 + $0x24] sm:$0xf]
        %v337 = vld [vmem:[%s237 + $0x28] sm:$0xf]
        %v338 = vld [vmem:[%s237 + $0x2c] sm:$0xf]
        %v339 = vld [vmem:[%s237 + $0x30] sm:$0xf]
        %v340 = vld [vmem:[%s237 + $0x34] sm:$0xf]
        %v341 = vld [vmem:[%s237 + $0x38] sm:$0xf]
        %v342 = vld [vmem:[%s237 + $0x3c] sm:$0xf]
        %v343 = vld [vmem:[%s237 + $0x40] sm:$0xf]
        %v344 = vld [vmem:[%s237 + $0x44] sm:$0xf]
        %v345 = vld [vmem:[%s237 + $0x48] sm:$0xf]
        %v346 = vld [vmem:[%s237 + $0x4c] sm:$0xf]
        %v347 = vld [vmem:[%s237 + $0x50] sm:$0xf]
        %v348 = vld [vmem:[%s237 + $0x54] sm:$0xf]
        %v349 = vld [vmem:[%s237 + $0x58] sm:$0xf]
        %v350 = vld [vmem:[%s237 + $0x5c] sm:$0xf]
        %v351 = vld [vmem:[%s237 + $0x60] sm:$0xf]
        %v352 = vld [vmem:[%s237 + $0x64] sm:$0xf]
        %v353 = vld [vmem:[%s237 + $0x68] sm:$0xf]
        %v354 = vld [vmem:[%s237 + $0x6c] sm:$0xf]
        %v355 = vld [vmem:[%s237 + $0x70] sm:$0xf]
        %v356 = vld [vmem:[%s237 + $0x74] sm:$0xf]
        %v357 = vld [vmem:[%s237 + $0x78] sm:$0xf]
        %v358 = vld [vmem:[%s237 + $0x7c] sm:$0xf]
        %v359 = vunpack.c.l.bf16 %v327
        %v360 = vunpack.c.l.bf16 %v328
        %v361 = vunpack.c.l.bf16 %v329
        %v362 = vunpack.c.l.bf16 %v330
        %v363 = vunpack.c.l.bf16 %v331
        %v364 = vunpack.c.l.bf16 %v332
        %v365 = vunpack.c.l.bf16 %v333
        %v366 = vunpack.c.l.bf16 %v334
        %v367 = vunpack.c.l.bf16 %v335
        %v368 = vunpack.c.l.bf16 %v336
        %v369 = vunpack.c.l.bf16 %v337
        %v370 = vunpack.c.l.bf16 %v338
        %v371 = vunpack.c.l.bf16 %v339
        %v372 = vunpack.c.l.bf16 %v340
        %v373 = vunpack.c.l.bf16 %v341
        %v374 = vunpack.c.l.bf16 %v342
        %v375 = vunpack.c.l.bf16 %v343
        %v376 = vunpack.c.l.bf16 %v344
        %v377 = vunpack.c.l.bf16 %v345
        %v378 = vunpack.c.l.bf16 %v346
        %v379 = vunpack.c.l.bf16 %v347
        %v380 = vunpack.c.l.bf16 %v348
        %v381 = vunpack.c.l.bf16 %v349
        %v382 = vunpack.c.l.bf16 %v350
        %v383 = vunpack.c.l.bf16 %v351
        %v384 = vunpack.c.l.bf16 %v352
        %v385 = vunpack.c.l.bf16 %v353
        %v386 = vunpack.c.l.bf16 %v354
        %v387 = vunpack.c.l.bf16 %v355
        %v388 = vunpack.c.l.bf16 %v356
        %v389 = vunpack.c.l.bf16 %v357
        %v390 = vunpack.c.l.bf16 %v358
        %s391 = scalar_lea.vmem [#allocation2], 24
        %392 = vst [vmem:[%s391 + $0x1] sm:$0xff] %v359
        %393 = vst [vmem:[%s391 + $0x9] sm:$0xff] %v360
        %394 = vst [vmem:[%s391 + $0x19] sm:$0xff] %v361
        %395 = vst [vmem:[%s391 + $0x21] sm:$0xff] %v362
        %396 = vst [vmem:[%s391 + $0x31] sm:$0xff] %v363
        %397 = vst [vmem:[%s391 + $0x39] sm:$0xff] %v364
        %398 = vst [vmem:[%s391 + $0x49] sm:$0xff] %v365
        %399 = vst [vmem:[%s391 + $0x51] sm:$0xff] %v366
        %400 = vst [vmem:[%s391 + $0x61] sm:$0xff] %v367
        %401 = vst [vmem:[%s391 + $0x69] sm:$0xff] %v368
        %402 = vst [vmem:[%s391 + $0x79] sm:$0xff] %v369
        %403 = vst [vmem:[%s391 + $0x81] sm:$0xff] %v370
        %404 = vst [vmem:[%s391 + $0x91] sm:$0xff] %v371
        %405 = vst [vmem:[%s391 + $0x99] sm:$0xff] %v372
        %406 = vst [vmem:[%s391 + $0xa9] sm:$0xff] %v373
        %407 = vst [vmem:[%s391 + $0xb1] sm:$0xff] %v374
        %408 = vst [vmem:[%s391 + $0xc1] sm:$0xff] %v375
        %409 = vst [vmem:[%s391 + $0xc9] sm:$0xff] %v376
        %410 = vst [vmem:[%s391 + $0xd9] sm:$0xff] %v377
        %411 = vst [vmem:[%s391 + $0xe1] sm:$0xff] %v378
        %412 = vst [vmem:[%s391 + $0xf1] sm:$0xff] %v379
        %413 = vst [vmem:[%s391 + $0xf9] sm:$0xff] %v380
        %414 = vst [vmem:[%s391 + $0x109] sm:$0xff] %v381
        %415 = vst [vmem:[%s391 + $0x111] sm:$0xff] %v382
        %416 = vst [vmem:[%s391 + $0x121] sm:$0xff] %v383
        %417 = vst [vmem:[%s391 + $0x129] sm:$0xff] %v384
        %418 = vst [vmem:[%s391 + $0x139] sm:$0xff] %v385
        %419 = vst [vmem:[%s391 + $0x141] sm:$0xff] %v386
        %420 = vst [vmem:[%s391 + $0x151] sm:$0xff] %v387
        %421 = vst [vmem:[%s391 + $0x159] sm:$0xff] %v388
        %422 = vst [vmem:[%s391 + $0x169] sm:$0xff] %v389
        %423 = vst [vmem:[%s391 + $0x171] sm:$0xff] %v390
        %v424 = vld [vmem:[#allocation2] sm:$0xff]
        %v425 = vld [vmem:[#allocation2 + $0x8] sm:$0xff]
        %v426 = vld [vmem:[#allocation2 + $0x18] sm:$0xff]
        %v427 = vld [vmem:[#allocation2 + $0x20] sm:$0xff]
        %v428 = vld [vmem:[#allocation2 + $0x30] sm:$0xff]
        %v429 = vld [vmem:[#allocation2 + $0x38] sm:$0xff]
        %v430 = vld [vmem:[#allocation2 + $0x48] sm:$0xff]
        %v431 = vld [vmem:[#allocation2 + $0x50] sm:$0xff]
        %v432 = vld [vmem:[#allocation2 + $0x60] sm:$0xff]
        %v433 = vld [vmem:[#allocation2 + $0x68] sm:$0xff]
        %v434 = vld [vmem:[#allocation2 + $0x78] sm:$0xff]
        %v435 = vld [vmem:[#allocation2 + $0x80] sm:$0xff]
        %v436 = vld [vmem:[#allocation2 + $0x90] sm:$0xff]
        %v437 = vld [vmem:[#allocation2 + $0x98] sm:$0xff]
        %v438 = vld [vmem:[#allocation2 + $0xa8] sm:$0xff]
        %v439 = vld [vmem:[#allocation2 + $0xb0] sm:$0xff]
        %v440 = vld [vmem:[#allocation2 + $0xc0] sm:$0xff]
        %v441 = vld [vmem:[#allocation2 + $0xc8] sm:$0xff]
        %v442 = vld [vmem:[#allocation2 + $0xd8] sm:$0xff]
        %v443 = vld [vmem:[#allocation2 + $0xe0] sm:$0xff]
        %v444 = vld [vmem:[#allocation2 + $0xf0] sm:$0xff]
        %v445 = vld [vmem:[#allocation2 + $0xf8] sm:$0xff]
        %v446 = vld [vmem:[#allocation2 + $0x108] sm:$0xff]
        %v447 = vld [vmem:[#allocation2 + $0x110] sm:$0xff]
        %v448 = vld [vmem:[#allocation2 + $0x120] sm:$0xff]
        %v449 = vld [vmem:[#allocation2 + $0x128] sm:$0xff]
        %v450 = vld [vmem:[#allocation2 + $0x138] sm:$0xff]
        %v451 = vld [vmem:[#allocation2 + $0x140] sm:$0xff]
        %v452 = vld [vmem:[#allocation2 + $0x150] sm:$0xff]
        %v453 = vld [vmem:[#allocation2 + $0x158] sm:$0xff]
        %v454 = vld [vmem:[#allocation2 + $0x168] sm:$0xff]
        %v455 = vld [vmem:[#allocation2 + $0x170] sm:$0xff]
        %v456 = vld [vmem:[#allocation2 + $0x1] sm:$0xff]
        %v457 = vld [vmem:[#allocation2 + $0x9] sm:$0xff]
        %v458 = vld [vmem:[#allocation2 + $0x19] sm:$0xff]
        %v459 = vld [vmem:[#allocation2 + $0x21] sm:$0xff]
        %v460 = vld [vmem:[#allocation2 + $0x31] sm:$0xff]
        %v461 = vld [vmem:[#allocation2 + $0x39] sm:$0xff]
        %v462 = vld [vmem:[#allocation2 + $0x49] sm:$0xff]
        %v463 = vld [vmem:[#allocation2 + $0x51] sm:$0xff]
        %v464 = vld [vmem:[#allocation2 + $0x61] sm:$0xff]
        %v465 = vld [vmem:[#allocation2 + $0x69] sm:$0xff]
        %v466 = vld [vmem:[#allocation2 + $0x79] sm:$0xff]
        %v467 = vld [vmem:[#allocation2 + $0x81] sm:$0xff]
        %v468 = vld [vmem:[#allocation2 + $0x91] sm:$0xff]
        %v469 = vld [vmem:[#allocation2 + $0x99] sm:$0xff]
        %v470 = vld [vmem:[#allocation2 + $0xa9] sm:$0xff]
        %v471 = vld [vmem:[#allocation2 + $0xb1] sm:$0xff]
        %v472 = vld [vmem:[#allocation2 + $0xc1] sm:$0xff]
        %v473 = vld [vmem:[#allocation2 + $0xc9] sm:$0xff]
        %v474 = vld [vmem:[#allocation2 + $0xd9] sm:$0xff]
        %v475 = vld [vmem:[#allocation2 + $0xe1] sm:$0xff]
        %v476 = vld [vmem:[#allocation2 + $0xf1] sm:$0xff]
        %v477 = vld [vmem:[#allocation2 + $0xf9] sm:$0xff]
        %v478 = vld [vmem:[#allocation2 + $0x109] sm:$0xff]
        %v479 = vld [vmem:[#allocation2 + $0x111] sm:$0xff]
        %v480 = vld [vmem:[#allocation2 + $0x121] sm:$0xff]
        %v481 = vld [vmem:[#allocation2 + $0x129] sm:$0xff]
        %v482 = vld [vmem:[#allocation2 + $0x139] sm:$0xff]
        %v483 = vld [vmem:[#allocation2 + $0x141] sm:$0xff]
        %v484 = vld [vmem:[#allocation2 + $0x151] sm:$0xff]
        %v485 = vld [vmem:[#allocation2 + $0x159] sm:$0xff]
        %v486 = vld [vmem:[#allocation2 + $0x169] sm:$0xff]
        %v487 = vld [vmem:[#allocation2 + $0x171] sm:$0xff]
        %v488 = vld [vmem:[#allocation2 + $0x2] sm:$0xff]
        %v489 = vld [vmem:[#allocation2 + $0xa] sm:$0xff]
        %v490 = vld [vmem:[#allocation2 + $0x1a] sm:$0xff]
        %v491 = vld [vmem:[#allocation2 + $0x22] sm:$0xff]
        %v492 = vld [vmem:[#allocation2 + $0x32] sm:$0xff]
        %v493 = vld [vmem:[#allocation2 + $0x3a] sm:$0xff]
        %v494 = vld [vmem:[#allocation2 + $0x4a] sm:$0xff]
        %v495 = vld [vmem:[#allocation2 + $0x52] sm:$0xff]
        %v496 = vld [vmem:[#allocation2 + $0x62] sm:$0xff]
        %v497 = vld [vmem:[#allocation2 + $0x6a] sm:$0xff]
        %v498 = vld [vmem:[#allocation2 + $0x7a] sm:$0xff]
        %v499 = vld [vmem:[#allocation2 + $0x82] sm:$0xff]
        %v500 = vld [vmem:[#allocation2 + $0x92] sm:$0xff]
        %v501 = vld [vmem:[#allocation2 + $0x9a] sm:$0xff]
        %v502 = vld [vmem:[#allocation2 + $0xaa] sm:$0xff]
        %v503 = vld [vmem:[#allocation2 + $0xb2] sm:$0xff]
        %v504 = vld [vmem:[#allocation2 + $0xc2] sm:$0xff]
        %v505 = vld [vmem:[#allocation2 + $0xca] sm:$0xff]
        %v506 = vld [vmem:[#allocation2 + $0xda] sm:$0xff]
        %v507 = vld [vmem:[#allocation2 + $0xe2] sm:$0xff]
        %v508 = vld [vmem:[#allocation2 + $0xf2] sm:$0xff]
        %v509 = vld [vmem:[#allocation2 + $0xfa] sm:$0xff]
        %v510 = vld [vmem:[#allocation2 + $0x10a] sm:$0xff]
        %v511 = vld [vmem:[#allocation2 + $0x112] sm:$0xff]
        %v512 = vld [vmem:[#allocation2 + $0x122] sm:$0xff]
        %v513 = vld [vmem:[#allocation2 + $0x12a] sm:$0xff]
        %v514 = vld [vmem:[#allocation2 + $0x13a] sm:$0xff]
        %v515 = vld [vmem:[#allocation2 + $0x142] sm:$0xff]
        %v516 = vld [vmem:[#allocation2 + $0x152] sm:$0xff]
        %v517 = vld [vmem:[#allocation2 + $0x15a] sm:$0xff]
        %v518 = vld [vmem:[#allocation2 + $0x16a] sm:$0xff]
        %v519 = vld [vmem:[#allocation2 + $0x172] sm:$0xff]
        %v520 = vld [vmem:[%s391] sm:$0xff]
        %v521 = vld [vmem:[%s391 + $0x8] sm:$0xff]
        %v522 = vld [vmem:[%s391 + $0x18] sm:$0xff]
        %v523 = vld [vmem:[%s391 + $0x20] sm:$0xff]
        %v524 = vld [vmem:[%s391 + $0x30] sm:$0xff]
        %v525 = vld [vmem:[%s391 + $0x38] sm:$0xff]
        %v526 = vld [vmem:[%s391 + $0x48] sm:$0xff]
        %v527 = vld [vmem:[%s391 + $0x50] sm:$0xff]
        %v528 = vld [vmem:[%s391 + $0x60] sm:$0xff]
        %v529 = vld [vmem:[%s391 + $0x68] sm:$0xff]
        %v530 = vld [vmem:[%s391 + $0x78] sm:$0xff]
        %v531 = vld [vmem:[%s391 + $0x80] sm:$0xff]
        %v532 = vld [vmem:[%s391 + $0x90] sm:$0xff]
        %v533 = vld [vmem:[%s391 + $0x98] sm:$0xff]
        %v534 = vld [vmem:[%s391 + $0xa8] sm:$0xff]
        %v535 = vld [vmem:[%s391 + $0xb0] sm:$0xff]
        %v536 = vld [vmem:[%s391 + $0xc0] sm:$0xff]
        %v537 = vld [vmem:[%s391 + $0xc8] sm:$0xff]
        %v538 = vld [vmem:[%s391 + $0xd8] sm:$0xff]
        %v539 = vld [vmem:[%s391 + $0xe0] sm:$0xff]
        %v540 = vld [vmem:[%s391 + $0xf0] sm:$0xff]
        %v541 = vld [vmem:[%s391 + $0xf8] sm:$0xff]
        %v542 = vld [vmem:[%s391 + $0x108] sm:$0xff]
        %v543 = vld [vmem:[%s391 + $0x110] sm:$0xff]
        %v544 = vld [vmem:[%s391 + $0x120] sm:$0xff]
        %v545 = vld [vmem:[%s391 + $0x128] sm:$0xff]
        %v546 = vld [vmem:[%s391 + $0x138] sm:$0xff]
        %v547 = vld [vmem:[%s391 + $0x140] sm:$0xff]
        %v548 = vld [vmem:[%s391 + $0x150] sm:$0xff]
        %v549 = vld [vmem:[%s391 + $0x158] sm:$0xff]
        %v550 = vld [vmem:[%s391 + $0x168] sm:$0xff]
        %v551 = vld [vmem:[%s391 + $0x170] sm:$0xff]
        %v552 = vld [vmem:[%s391 + $0x1] sm:$0xff]
        %v553 = vld [vmem:[%s391 + $0x9] sm:$0xff]
        %v554 = vld [vmem:[%s391 + $0x19] sm:$0xff]
        %v555 = vld [vmem:[%s391 + $0x21] sm:$0xff]
        %v556 = vld [vmem:[%s391 + $0x31] sm:$0xff]
        %v557 = vld [vmem:[%s391 + $0x39] sm:$0xff]
        %v558 = vld [vmem:[%s391 + $0x49] sm:$0xff]
        %v559 = vld [vmem:[%s391 + $0x51] sm:$0xff]
        %v560 = vld [vmem:[%s391 + $0x61] sm:$0xff]
        %v561 = vld [vmem:[%s391 + $0x69] sm:$0xff]
        %v562 = vld [vmem:[%s391 + $0x79] sm:$0xff]
        %v563 = vld [vmem:[%s391 + $0x81] sm:$0xff]
        %v564 = vld [vmem:[%s391 + $0x91] sm:$0xff]
        %v565 = vld [vmem:[%s391 + $0x99] sm:$0xff]
        %v566 = vld [vmem:[%s391 + $0xa9] sm:$0xff]
        %v567 = vld [vmem:[%s391 + $0xb1] sm:$0xff]
        %v568 = vld [vmem:[%s391 + $0xc1] sm:$0xff]
        %v569 = vld [vmem:[%s391 + $0xc9] sm:$0xff]
        %v570 = vld [vmem:[%s391 + $0xd9] sm:$0xff]
        %v571 = vld [vmem:[%s391 + $0xe1] sm:$0xff]
        %v572 = vld [vmem:[%s391 + $0xf1] sm:$0xff]
        %v573 = vld [vmem:[%s391 + $0xf9] sm:$0xff]
        %v574 = vld [vmem:[%s391 + $0x109] sm:$0xff]
        %v575 = vld [vmem:[%s391 + $0x111] sm:$0xff]
        %v576 = vld [vmem:[%s391 + $0x121] sm:$0xff]
        %v577 = vld [vmem:[%s391 + $0x129] sm:$0xff]
        %v578 = vld [vmem:[%s391 + $0x139] sm:$0xff]
        %v579 = vld [vmem:[%s391 + $0x141] sm:$0xff]
        %v580 = vld [vmem:[%s391 + $0x151] sm:$0xff]
        %v581 = vld [vmem:[%s391 + $0x159] sm:$0xff]
        %v582 = vld [vmem:[%s391 + $0x169] sm:$0xff]
        %v583 = vld [vmem:[%s391 + $0x171] sm:$0xff]
        %v584 = vld [vmem:[%s391 + $0x2] sm:$0xff]
        %v585 = vld [vmem:[%s391 + $0xa] sm:$0xff]
        %v586 = vld [vmem:[%s391 + $0x1a] sm:$0xff]
        %v587 = vld [vmem:[%s391 + $0x22] sm:$0xff]
        %v588 = vld [vmem:[%s391 + $0x32] sm:$0xff]
        %v589 = vld [vmem:[%s391 + $0x3a] sm:$0xff]
        %v590 = vld [vmem:[%s391 + $0x4a] sm:$0xff]
        %v591 = vld [vmem:[%s391 + $0x52] sm:$0xff]
        %v592 = vld [vmem:[%s391 + $0x62] sm:$0xff]
        %v593 = vld [vmem:[%s391 + $0x6a] sm:$0xff]
        %v594 = vld [vmem:[%s391 + $0x7a] sm:$0xff]
        %v595 = vld [vmem:[%s391 + $0x82] sm:$0xff]
        %v596 = vld [vmem:[%s391 + $0x92] sm:$0xff]
        %v597 = vld [vmem:[%s391 + $0x9a] sm:$0xff]
        %v598 = vld [vmem:[%s391 + $0xaa] sm:$0xff]
        %v599 = vld [vmem:[%s391 + $0xb2] sm:$0xff]
        %v600 = vld [vmem:[%s391 + $0xc2] sm:$0xff]
        %v601 = vld [vmem:[%s391 + $0xca] sm:$0xff]
        %v602 = vld [vmem:[%s391 + $0xda] sm:$0xff]
        %v603 = vld [vmem:[%s391 + $0xe2] sm:$0xff]
        %v604 = vld [vmem:[%s391 + $0xf2] sm:$0xff]
        %v605 = vld [vmem:[%s391 + $0xfa] sm:$0xff]
        %v606 = vld [vmem:[%s391 + $0x10a] sm:$0xff]
        %v607 = vld [vmem:[%s391 + $0x112] sm:$0xff]
        %v608 = vld [vmem:[%s391 + $0x122] sm:$0xff]
        %v609 = vld [vmem:[%s391 + $0x12a] sm:$0xff]
        %v610 = vld [vmem:[%s391 + $0x13a] sm:$0xff]
        %v611 = vld [vmem:[%s391 + $0x142] sm:$0xff]
        %v612 = vld [vmem:[%s391 + $0x152] sm:$0xff]
        %v613 = vld [vmem:[%s391 + $0x15a] sm:$0xff]
        %v614 = vld [vmem:[%s391 + $0x16a] sm:$0xff]
        %v615 = vld [vmem:[%s391 + $0x172] sm:$0xff]
        %s616 = scalar_lea.vmem [#allocation2], 48
        %v617 = vld [vmem:[%s616] sm:$0xff]
        %v618 = vld [vmem:[%s616 + $0x8] sm:$0xff]
        %v619 = vld [vmem:[%s616 + $0x18] sm:$0xff]
        %v620 = vld [vmem:[%s616 + $0x20] sm:$0xff]
        %v621 = vld [vmem:[%s616 + $0x30] sm:$0xff]
        %v622 = vld [vmem:[%s616 + $0x38] sm:$0xff]
        %v623 = vld [vmem:[%s616 + $0x48] sm:$0xff]
        %v624 = vld [vmem:[%s616 + $0x50] sm:$0xff]
        %v625 = vld [vmem:[%s616 + $0x60] sm:$0xff]
        %v626 = vld [vmem:[%s616 + $0x68] sm:$0xff]
        %v627 = vld [vmem:[%s616 + $0x78] sm:$0xff]
        %v628 = vld [vmem:[%s616 + $0x80] sm:$0xff]
        %v629 = vld [vmem:[%s616 + $0x90] sm:$0xff]
        %v630 = vld [vmem:[%s616 + $0x98] sm:$0xff]
        %v631 = vld [vmem:[%s616 + $0xa8] sm:$0xff]
        %v632 = vld [vmem:[%s616 + $0xb0] sm:$0xff]
        %v633 = vld [vmem:[%s616 + $0xc0] sm:$0xff]
        %v634 = vld [vmem:[%s616 + $0xc8] sm:$0xff]
        %v635 = vld [vmem:[%s616 + $0xd8] sm:$0xff]
        %v636 = vld [vmem:[%s616 + $0xe0] sm:$0xff]
        %v637 = vld [vmem:[%s616 + $0xf0] sm:$0xff]
        %v638 = vld [vmem:[%s616 + $0xf8] sm:$0xff]
        %v639 = vld [vmem:[%s616 + $0x108] sm:$0xff]
        %v640 = vld [vmem:[%s616 + $0x110] sm:$0xff]
        %v641 = vld [vmem:[%s616 + $0x120] sm:$0xff]
        %v642 = vld [vmem:[%s616 + $0x128] sm:$0xff]
        %v643 = vld [vmem:[%s616 + $0x138] sm:$0xff]
        %v644 = vld [vmem:[%s616 + $0x140] sm:$0xff]
        %v645 = vld [vmem:[%s616 + $0x150] sm:$0xff]
        %v646 = vld [vmem:[%s616 + $0x158] sm:$0xff]
        %v647 = vld [vmem:[%s616 + $0x168] sm:$0xff]
        %v648 = vld [vmem:[%s616 + $0x170] sm:$0xff]
        %v649 = vld [vmem:[%s616 + $0x1] sm:$0xff]
        %v650 = vld [vmem:[%s616 + $0x9] sm:$0xff]
        %v651 = vld [vmem:[%s616 + $0x19] sm:$0xff]
        %v652 = vld [vmem:[%s616 + $0x21] sm:$0xff]
        %v653 = vld [vmem:[%s616 + $0x31] sm:$0xff]
        %v654 = vld [vmem:[%s616 + $0x39] sm:$0xff]
        %v655 = vld [vmem:[%s616 + $0x49] sm:$0xff]
        %v656 = vld [vmem:[%s616 + $0x51] sm:$0xff]
        %v657 = vld [vmem:[%s616 + $0x61] sm:$0xff]
        %v658 = vld [vmem:[%s616 + $0x69] sm:$0xff]
        %v659 = vld [vmem:[%s616 + $0x79] sm:$0xff]
        %v660 = vld [vmem:[%s616 + $0x81] sm:$0xff]
        %v661 = vld [vmem:[%s616 + $0x91] sm:$0xff]
        %v662 = vld [vmem:[%s616 + $0x99] sm:$0xff]
        %v663 = vld [vmem:[%s616 + $0xa9] sm:$0xff]
        %v664 = vld [vmem:[%s616 + $0xb1] sm:$0xff]
        %v665 = vld [vmem:[%s616 + $0xc1] sm:$0xff]
        %v666 = vld [vmem:[%s616 + $0xc9] sm:$0xff]
        %v667 = vld [vmem:[%s616 + $0xd9] sm:$0xff]
        %v668 = vld [vmem:[%s616 + $0xe1] sm:$0xff]
        %v669 = vld [vmem:[%s616 + $0xf1] sm:$0xff]
        %v670 = vld [vmem:[%s616 + $0xf9] sm:$0xff]
        %v671 = vld [vmem:[%s616 + $0x109] sm:$0xff]
        %v672 = vld [vmem:[%s616 + $0x111] sm:$0xff]
        %v673 = vld [vmem:[%s616 + $0x121] sm:$0xff]
        %v674 = vld [vmem:[%s616 + $0x129] sm:$0xff]
        %v675 = vld [vmem:[%s616 + $0x139] sm:$0xff]
        %v676 = vld [vmem:[%s616 + $0x141] sm:$0xff]
        %v677 = vld [vmem:[%s616 + $0x151] sm:$0xff]
        %v678 = vld [vmem:[%s616 + $0x159] sm:$0xff]
        %v679 = vld [vmem:[%s616 + $0x169] sm:$0xff]
        %v680 = vld [vmem:[%s616 + $0x171] sm:$0xff]
        %v681 = vld [vmem:[%s616 + $0x2] sm:$0xff]
        %v682 = vld [vmem:[%s616 + $0xa] sm:$0xff]
        %v683 = vld [vmem:[%s616 + $0x1a] sm:$0xff]
        %v684 = vld [vmem:[%s616 + $0x22] sm:$0xff]
        %v685 = vld [vmem:[%s616 + $0x32] sm:$0xff]
        %v686 = vld [vmem:[%s616 + $0x3a] sm:$0xff]
        %v687 = vld [vmem:[%s616 + $0x4a] sm:$0xff]
        %v688 = vld [vmem:[%s616 + $0x52] sm:$0xff]
        %v689 = vld [vmem:[%s616 + $0x62] sm:$0xff]
        %v690 = vld [vmem:[%s616 + $0x6a] sm:$0xff]
        %v691 = vld [vmem:[%s616 + $0x7a] sm:$0xff]
        %v692 = vld [vmem:[%s616 + $0x82] sm:$0xff]
        %v693 = vld [vmem:[%s616 + $0x92] sm:$0xff]
        %v694 = vld [vmem:[%s616 + $0x9a] sm:$0xff]
        %v695 = vld [vmem:[%s616 + $0xaa] sm:$0xff]
        %v696 = vld [vmem:[%s616 + $0xb2] sm:$0xff]
        %v697 = vld [vmem:[%s616 + $0xc2] sm:$0xff]
        %v698 = vld [vmem:[%s616 + $0xca] sm:$0xff]
        %v699 = vld [vmem:[%s616 + $0xda] sm:$0xff]
        %v700 = vld [vmem:[%s616 + $0xe2] sm:$0xff]
        %v701 = vld [vmem:[%s616 + $0xf2] sm:$0xff]
        %v702 = vld [vmem:[%s616 + $0xfa] sm:$0xff]
        %v703 = vld [vmem:[%s616 + $0x10a] sm:$0xff]
        %v704 = vld [vmem:[%s616 + $0x112] sm:$0xff]
        %v705 = vld [vmem:[%s616 + $0x122] sm:$0xff]
        %v706 = vld [vmem:[%s616 + $0x12a] sm:$0xff]
        %v707 = vld [vmem:[%s616 + $0x13a] sm:$0xff]
        %v708 = vld [vmem:[%s616 + $0x142] sm:$0xff]
        %v709 = vld [vmem:[%s616 + $0x152] sm:$0xff]
        %v710 = vld [vmem:[%s616 + $0x15a] sm:$0xff]
        %v711 = vld [vmem:[%s616 + $0x16a] sm:$0xff]
        %v712 = vld [vmem:[%s616 + $0x172] sm:$0xff]
        %v713 = vpack.c.bf16 %v425, %v424
        %v714 = vpack.c.bf16 %v457, %v456
        %v715 = vpack.c.bf16 %v489, %v488
        %v716 = vpack.c.bf16 %v521, %v520
        %v717 = vpack.c.bf16 %v553, %v552
        %v718 = vpack.c.bf16 %v585, %v584
        %v719 = vpack.c.bf16 %v618, %v617
        %v720 = vpack.c.bf16 %v650, %v649
        %v721 = vpack.c.bf16 %v682, %v681
        %v722 = vpack.c.bf16 %v427, %v426
        %v723 = vpack.c.bf16 %v459, %v458
        %v724 = vpack.c.bf16 %v491, %v490
        %v725 = vpack.c.bf16 %v523, %v522
        %v726 = vpack.c.bf16 %v555, %v554
        %v727 = vpack.c.bf16 %v587, %v586
        %v728 = vpack.c.bf16 %v620, %v619
        %v729 = vpack.c.bf16 %v652, %v651
        %v730 = vpack.c.bf16 %v684, %v683
        %v731 = vpack.c.bf16 %v429, %v428
        %v732 = vpack.c.bf16 %v461, %v460
        %v733 = vpack.c.bf16 %v493, %v492
        %v734 = vpack.c.bf16 %v525, %v524
        %v735 = vpack.c.bf16 %v557, %v556
        %v736 = vpack.c.bf16 %v589, %v588
        %v737 = vpack.c.bf16 %v622, %v621
        %v738 = vpack.c.bf16 %v654, %v653
        %v739 = vpack.c.bf16 %v686, %v685
        %v740 = vpack.c.bf16 %v431, %v430
        %v741 = vpack.c.bf16 %v463, %v462
        %v742 = vpack.c.bf16 %v495, %v494
        %v743 = vpack.c.bf16 %v527, %v526
        %v744 = vpack.c.bf16 %v559, %v558
        %v745 = vpack.c.bf16 %v591, %v590
        %v746 = vpack.c.bf16 %v624, %v623
        %v747 = vpack.c.bf16 %v656, %v655
        %v748 = vpack.c.bf16 %v688, %v687
        %v749 = vpack.c.bf16 %v433, %v432
        %v750 = vpack.c.bf16 %v465, %v464
        %v751 = vpack.c.bf16 %v497, %v496
        %v752 = vpack.c.bf16 %v529, %v528
        %v753 = vpack.c.bf16 %v561, %v560
        %v754 = vpack.c.bf16 %v593, %v592
        %v755 = vpack.c.bf16 %v626, %v625
        %v756 = vpack.c.bf16 %v658, %v657
        %v757 = vpack.c.bf16 %v690, %v689
        %v758 = vpack.c.bf16 %v435, %v434
        %v759 = vpack.c.bf16 %v467, %v466
        %v760 = vpack.c.bf16 %v499, %v498
        %v761 = vpack.c.bf16 %v531, %v530
        %v762 = vpack.c.bf16 %v563, %v562
        %v763 = vpack.c.bf16 %v595, %v594
        %v764 = vpack.c.bf16 %v628, %v627
        %v765 = vpack.c.bf16 %v660, %v659
        %v766 = vpack.c.bf16 %v692, %v691
        %v767 = vpack.c.bf16 %v437, %v436
        %v768 = vpack.c.bf16 %v469, %v468
        %v769 = vpack.c.bf16 %v501, %v500
        %v770 = vpack.c.bf16 %v533, %v532
        %v771 = vpack.c.bf16 %v565, %v564
        %v772 = vpack.c.bf16 %v597, %v596
        %v773 = vpack.c.bf16 %v630, %v629
        %v774 = vpack.c.bf16 %v662, %v661
        %v775 = vpack.c.bf16 %v694, %v693
        %v776 = vpack.c.bf16 %v439, %v438
        %v777 = vpack.c.bf16 %v471, %v470
        %v778 = vpack.c.bf16 %v503, %v502
        %v779 = vpack.c.bf16 %v535, %v534
        %v780 = vpack.c.bf16 %v567, %v566
        %v781 = vpack.c.bf16 %v599, %v598
        %v782 = vpack.c.bf16 %v632, %v631
        %v783 = vpack.c.bf16 %v664, %v663
        %v784 = vpack.c.bf16 %v696, %v695
        %v785 = vpack.c.bf16 %v441, %v440
        %v786 = vpack.c.bf16 %v473, %v472
        %v787 = vpack.c.bf16 %v505, %v504
        %v788 = vpack.c.bf16 %v537, %v536
        %v789 = vpack.c.bf16 %v569, %v568
        %v790 = vpack.c.bf16 %v601, %v600
        %v791 = vpack.c.bf16 %v634, %v633
        %v792 = vpack.c.bf16 %v666, %v665
        %v793 = vpack.c.bf16 %v698, %v697
        %v794 = vpack.c.bf16 %v443, %v442
        %v795 = vpack.c.bf16 %v475, %v474
        %v796 = vpack.c.bf16 %v507, %v506
        %v797 = vpack.c.bf16 %v539, %v538
        %v798 = vpack.c.bf16 %v571, %v570
        %v799 = vpack.c.bf16 %v603, %v602
        %v800 = vpack.c.bf16 %v636, %v635
        %v801 = vpack.c.bf16 %v668, %v667
        %v802 = vpack.c.bf16 %v700, %v699
        %v803 = vpack.c.bf16 %v445, %v444
        %v804 = vpack.c.bf16 %v477, %v476
        %v805 = vpack.c.bf16 %v509, %v508
        %v806 = vpack.c.bf16 %v541, %v540
        %v807 = vpack.c.bf16 %v573, %v572
        %v808 = vpack.c.bf16 %v605, %v604
        %v809 = vpack.c.bf16 %v638, %v637
        %v810 = vpack.c.bf16 %v670, %v669
        %v811 = vpack.c.bf16 %v702, %v701
        %v812 = vpack.c.bf16 %v447, %v446
        %v813 = vpack.c.bf16 %v479, %v478
        %v814 = vpack.c.bf16 %v511, %v510
        %v815 = vpack.c.bf16 %v543, %v542
        %v816 = vpack.c.bf16 %v575, %v574
        %v817 = vpack.c.bf16 %v607, %v606
        %v818 = vpack.c.bf16 %v640, %v639
        %v819 = vpack.c.bf16 %v672, %v671
        %v820 = vpack.c.bf16 %v704, %v703
        %v821 = vpack.c.bf16 %v449, %v448
        %v822 = vpack.c.bf16 %v481, %v480
        %v823 = vpack.c.bf16 %v513, %v512
        %v824 = vpack.c.bf16 %v545, %v544
        %v825 = vpack.c.bf16 %v577, %v576
        %v826 = vpack.c.bf16 %v609, %v608
        %v827 = vpack.c.bf16 %v642, %v641
        %v828 = vpack.c.bf16 %v674, %v673
        %v829 = vpack.c.bf16 %v706, %v705
        %v830 = vpack.c.bf16 %v451, %v450
        %v831 = vpack.c.bf16 %v483, %v482
        %v832 = vpack.c.bf16 %v515, %v514
        %v833 = vpack.c.bf16 %v547, %v546
        %v834 = vpack.c.bf16 %v579, %v578
        %v835 = vpack.c.bf16 %v611, %v610
        %v836 = vpack.c.bf16 %v644, %v643
        %v837 = vpack.c.bf16 %v676, %v675
        %v838 = vpack.c.bf16 %v708, %v707
        %v839 = vpack.c.bf16 %v453, %v452
        %v840 = vpack.c.bf16 %v485, %v484
        %v841 = vpack.c.bf16 %v517, %v516
        %v842 = vpack.c.bf16 %v549, %v548
        %v843 = vpack.c.bf16 %v581, %v580
        %v844 = vpack.c.bf16 %v613, %v612
        %v845 = vpack.c.bf16 %v646, %v645
        %v846 = vpack.c.bf16 %v678, %v677
        %v847 = vpack.c.bf16 %v710, %v709
        %v848 = vpack.c.bf16 %v455, %v454
        %v849 = vpack.c.bf16 %v487, %v486
        %v850 = vpack.c.bf16 %v519, %v518
        %v851 = vpack.c.bf16 %v551, %v550
        %v852 = vpack.c.bf16 %v583, %v582
        %v853 = vpack.c.bf16 %v615, %v614
        %v854 = vpack.c.bf16 %v648, %v647
        %v855 = vpack.c.bf16 %v680, %v679
        %v856 = vpack.c.bf16 %v712, %v711
        %v857 = vld [vmem:[#allocation7] sm:$0xf]
        %v858 = vld [vmem:[#allocation7 + $0x4] sm:$0xf]
        %v859 = vld [vmem:[#allocation7 + $0x8] sm:$0xf]
        %v860 = vld [vmem:[#allocation7 + $0xc] sm:$0xf]
        %v861 = vld [vmem:[#allocation7 + $0x10] sm:$0xf]
        %v862 = vld [vmem:[#allocation7 + $0x14] sm:$0xf]
        %v863 = vld [vmem:[#allocation7 + $0x18] sm:$0xf]
        %v864 = vld [vmem:[#allocation7 + $0x1c] sm:$0xf]
        %v865 = vld [vmem:[#allocation7 + $0x20] sm:$0xf]
        %v866 = vld [vmem:[#allocation7 + $0x24] sm:$0xf]
        %v867 = vld [vmem:[#allocation7 + $0x28] sm:$0xf]
        %v868 = vld [vmem:[#allocation7 + $0x2c] sm:$0xf]
        %v869 = vld [vmem:[#allocation7 + $0x30] sm:$0xf]
        %v870 = vld [vmem:[#allocation7 + $0x34] sm:$0xf]
        %v871 = vld [vmem:[#allocation7 + $0x38] sm:$0xf]
        %v872 = vld [vmem:[#allocation7 + $0x3c] sm:$0xf]
        %v873 = vld [vmem:[#allocation7 + $0x40] sm:$0xf]
        %v874 = vld [vmem:[#allocation7 + $0x44] sm:$0xf]
        %v875 = vld [vmem:[#allocation7 + $0x48] sm:$0xf]
        %v876 = vld [vmem:[#allocation7 + $0x4c] sm:$0xf]
        %v877 = vld [vmem:[#allocation7 + $0x50] sm:$0xf]
        %v878 = vld [vmem:[#allocation7 + $0x54] sm:$0xf]
        %v879 = vld [vmem:[#allocation7 + $0x58] sm:$0xf]
        %v880 = vld [vmem:[#allocation7 + $0x5c] sm:$0xf]
        %v881 = vld [vmem:[#allocation7 + $0x60] sm:$0xf]
        %v882 = vld [vmem:[#allocation7 + $0x64] sm:$0xf]
        %v883 = vld [vmem:[#allocation7 + $0x68] sm:$0xf]
        %v884 = vld [vmem:[#allocation7 + $0x6c] sm:$0xf]
        %v885 = vld [vmem:[#allocation7 + $0x70] sm:$0xf]
        %v886 = vld [vmem:[#allocation7 + $0x74] sm:$0xf]
        %v887 = vld [vmem:[#allocation7 + $0x78] sm:$0xf]
        %v888 = vld [vmem:[#allocation7 + $0x7c] sm:$0xf]
        %v889 = vld [vmem:[#allocation7 + $0x80] sm:$0xf]
        %v890 = vld [vmem:[#allocation7 + $0x84] sm:$0xf]
        %v891 = vld [vmem:[#allocation7 + $0x88] sm:$0xf]
        %v892 = vld [vmem:[#allocation7 + $0x8c] sm:$0xf]
        %v893 = vld [vmem:[#allocation7 + $0x90] sm:$0xf]
        %v894 = vld [vmem:[#allocation7 + $0x94] sm:$0xf]
        %v895 = vld [vmem:[#allocation7 + $0x98] sm:$0xf]
        %v896 = vld [vmem:[#allocation7 + $0x9c] sm:$0xf]
        %v897 = vld [vmem:[#allocation7 + $0xa0] sm:$0xf]
        %v898 = vld [vmem:[#allocation7 + $0xa4] sm:$0xf]
        %v899 = vld [vmem:[#allocation7 + $0xa8] sm:$0xf]
        %v900 = vld [vmem:[#allocation7 + $0xac] sm:$0xf]
        %v901 = vld [vmem:[#allocation7 + $0xb0] sm:$0xf]
        %v902 = vld [vmem:[#allocation7 + $0xb4] sm:$0xf]
        %v903 = vld [vmem:[#allocation7 + $0xb8] sm:$0xf]
        %v904 = vld [vmem:[#allocation7 + $0xbc] sm:$0xf]
        %v905 = vld [vmem:[#allocation7 + $0xc0] sm:$0xf]
        %v906 = vld [vmem:[#allocation7 + $0xc4] sm:$0xf]
        %v907 = vld [vmem:[#allocation7 + $0xc8] sm:$0xf]
        %v908 = vld [vmem:[#allocation7 + $0xcc] sm:$0xf]
        %v909 = vld [vmem:[#allocation7 + $0xd0] sm:$0xf]
        %v910 = vld [vmem:[#allocation7 + $0xd4] sm:$0xf]
        %v911 = vld [vmem:[#allocation7 + $0xd8] sm:$0xf]
        %v912 = vld [vmem:[#allocation7 + $0xdc] sm:$0xf]
        %v913 = vld [vmem:[#allocation7 + $0xe0] sm:$0xf]
        %v914 = vld [vmem:[#allocation7 + $0xe4] sm:$0xf]
        %v915 = vld [vmem:[#allocation7 + $0xe8] sm:$0xf]
        %v916 = vld [vmem:[#allocation7 + $0xec] sm:$0xf]
        %v917 = vld [vmem:[#allocation7 + $0xf0] sm:$0xf]
        %v918 = vld [vmem:[#allocation7 + $0xf4] sm:$0xf]
        %v919 = vld [vmem:[#allocation7 + $0xf8] sm:$0xf]
        %v920 = vld [vmem:[#allocation7 + $0xfc] sm:$0xf]
        %v921 = vld [vmem:[#allocation7 + $0x100] sm:$0xf]
        %v922 = vld [vmem:[#allocation7 + $0x104] sm:$0xf]
        %v923 = vld [vmem:[#allocation7 + $0x108] sm:$0xf]
        %v924 = vld [vmem:[#allocation7 + $0x10c] sm:$0xf]
        %v925 = vld [vmem:[#allocation7 + $0x110] sm:$0xf]
        %v926 = vld [vmem:[#allocation7 + $0x114] sm:$0xf]
        %v927 = vld [vmem:[#allocation7 + $0x118] sm:$0xf]
        %v928 = vld [vmem:[#allocation7 + $0x11c] sm:$0xf]
        %v929 = vld [vmem:[#allocation7 + $0x120] sm:$0xf]
        %v930 = vld [vmem:[#allocation7 + $0x124] sm:$0xf]
        %v931 = vld [vmem:[#allocation7 + $0x128] sm:$0xf]
        %v932 = vld [vmem:[#allocation7 + $0x12c] sm:$0xf]
        %v933 = vld [vmem:[#allocation7 + $0x130] sm:$0xf]
        %v934 = vld [vmem:[#allocation7 + $0x134] sm:$0xf]
        %v935 = vld [vmem:[#allocation7 + $0x138] sm:$0xf]
        %v936 = vld [vmem:[#allocation7 + $0x13c] sm:$0xf]
        %v937 = vld [vmem:[#allocation7 + $0x140] sm:$0xf]
        %v938 = vld [vmem:[#allocation7 + $0x144] sm:$0xf]
        %v939 = vld [vmem:[#allocation7 + $0x148] sm:$0xf]
        %v940 = vld [vmem:[#allocation7 + $0x14c] sm:$0xf]
        %v941 = vld [vmem:[#allocation7 + $0x150] sm:$0xf]
        %v942 = vld [vmem:[#allocation7 + $0x154] sm:$0xf]
        %v943 = vld [vmem:[#allocation7 + $0x158] sm:$0xf]
        %v944 = vld [vmem:[#allocation7 + $0x15c] sm:$0xf]
        %v945 = vld [vmem:[#allocation7 + $0x160] sm:$0xf]
        %v946 = vld [vmem:[#allocation7 + $0x164] sm:$0xf]
        %v947 = vld [vmem:[#allocation7 + $0x168] sm:$0xf]
        %v948 = vld [vmem:[#allocation7 + $0x16c] sm:$0xf]
        %v949 = vld [vmem:[#allocation7 + $0x170] sm:$0xf]
        %v950 = vld [vmem:[#allocation7 + $0x174] sm:$0xf]
        %v951 = vld [vmem:[#allocation7 + $0x178] sm:$0xf]
        %v952 = vld [vmem:[#allocation7 + $0x17c] sm:$0xf]
        %v953 = vld [vmem:[#allocation7 + $0x180] sm:$0xf]
        %v954 = vld [vmem:[#allocation7 + $0x184] sm:$0xf]
        %v955 = vld [vmem:[#allocation7 + $0x188] sm:$0xf]
        %v956 = vld [vmem:[#allocation7 + $0x18c] sm:$0xf]
        %v957 = vld [vmem:[#allocation7 + $0x190] sm:$0xf]
        %v958 = vld [vmem:[#allocation7 + $0x194] sm:$0xf]
        %v959 = vld [vmem:[#allocation7 + $0x198] sm:$0xf]
        %v960 = vld [vmem:[#allocation7 + $0x19c] sm:$0xf]
        %v961 = vld [vmem:[#allocation7 + $0x1a0] sm:$0xf]
        %v962 = vld [vmem:[#allocation7 + $0x1a4] sm:$0xf]
        %v963 = vld [vmem:[#allocation7 + $0x1a8] sm:$0xf]
        %v964 = vld [vmem:[#allocation7 + $0x1ac] sm:$0xf]
        %v965 = vld [vmem:[#allocation7 + $0x1b0] sm:$0xf]
        %v966 = vld [vmem:[#allocation7 + $0x1b4] sm:$0xf]
        %v967 = vld [vmem:[#allocation7 + $0x1b8] sm:$0xf]
        %v968 = vld [vmem:[#allocation7 + $0x1bc] sm:$0xf]
        %v969 = vld [vmem:[#allocation7 + $0x1c0] sm:$0xf]
        %v970 = vld [vmem:[#allocation7 + $0x1c4] sm:$0xf]
        %v971 = vld [vmem:[#allocation7 + $0x1c8] sm:$0xf]
        %v972 = vld [vmem:[#allocation7 + $0x1cc] sm:$0xf]
        %v973 = vld [vmem:[#allocation7 + $0x1d0] sm:$0xf]
        %v974 = vld [vmem:[#allocation7 + $0x1d4] sm:$0xf]
        %v975 = vld [vmem:[#allocation7 + $0x1d8] sm:$0xf]
        %v976 = vld [vmem:[#allocation7 + $0x1dc] sm:$0xf]
        %v977 = vld [vmem:[#allocation7 + $0x1e0] sm:$0xf]
        %v978 = vld [vmem:[#allocation7 + $0x1e4] sm:$0xf]
        %v979 = vld [vmem:[#allocation7 + $0x1e8] sm:$0xf]
        %v980 = vld [vmem:[#allocation7 + $0x1ec] sm:$0xf]
        %v981 = vld [vmem:[#allocation7 + $0x1f0] sm:$0xf]
        %v982 = vld [vmem:[#allocation7 + $0x1f4] sm:$0xf]
        %v983 = vld [vmem:[#allocation7 + $0x1f8] sm:$0xf]
        %v984 = vld [vmem:[#allocation7 + $0x1fc] sm:$0xf]
        %v985 = vld [vmem:[#allocation7 + $0x200] sm:$0xf]
        %v986 = vld [vmem:[#allocation7 + $0x204] sm:$0xf]
        %v987 = vld [vmem:[#allocation7 + $0x208] sm:$0xf]
        %v988 = vld [vmem:[#allocation7 + $0x20c] sm:$0xf]
        %v989 = vld [vmem:[#allocation7 + $0x210] sm:$0xf]
        %v990 = vld [vmem:[#allocation7 + $0x214] sm:$0xf]
        %v991 = vld [vmem:[#allocation7 + $0x218] sm:$0xf]
        %v992 = vld [vmem:[#allocation7 + $0x21c] sm:$0xf]
        %v993 = vld [vmem:[#allocation7 + $0x220] sm:$0xf]
        %v994 = vld [vmem:[#allocation7 + $0x224] sm:$0xf]
        %v995 = vld [vmem:[#allocation7 + $0x228] sm:$0xf]
        %v996 = vld [vmem:[#allocation7 + $0x22c] sm:$0xf]
        %v997 = vld [vmem:[#allocation7 + $0x230] sm:$0xf]
        %v998 = vld [vmem:[#allocation7 + $0x234] sm:$0xf]
        %v999 = vld [vmem:[#allocation7 + $0x238] sm:$0xf]
        %v1000 = vld [vmem:[#allocation7 + $0x23c] sm:$0xf]
        %v1001 = vld [vmem:[%s3] sm:$0x1]
        %v1003 = vlaneseq
        %v1004 = vshrl.u32 %v1003, 7
        %v1005 = vsub.s32 0, %v1004
        %v1006 = vrot.slane %v1001, %v1005
        %v1152 = vunpack.c.l.b16 %v857
        %v1153 = vunpack.c.l.b16 %v858
        %v1154 = vunpack.c.l.b16 %v859
        %v1155 = vunpack.c.l.b16 %v860
        %v1156 = vunpack.c.l.b16 %v861
        %v1157 = vunpack.c.l.b16 %v862
        %v1158 = vunpack.c.l.b16 %v863
        %v1159 = vunpack.c.l.b16 %v864
        %v1160 = vunpack.c.l.b16 %v865
        %v1161 = vunpack.c.l.b16 %v866
        %v1162 = vunpack.c.l.b16 %v867
        %v1163 = vunpack.c.l.b16 %v868
        %v1164 = vunpack.c.l.b16 %v869
        %v1165 = vunpack.c.l.b16 %v870
        %v1166 = vunpack.c.l.b16 %v871
        %v1167 = vunpack.c.l.b16 %v872
        %v1168 = vunpack.c.l.b16 %v873
        %v1169 = vunpack.c.l.b16 %v874
        %v1170 = vunpack.c.l.b16 %v875
        %v1171 = vunpack.c.l.b16 %v876
        %v1172 = vunpack.c.l.b16 %v877
        %v1173 = vunpack.c.l.b16 %v878
        %v1174 = vunpack.c.l.b16 %v879
        %v1175 = vunpack.c.l.b16 %v880
        %v1176 = vunpack.c.l.b16 %v881
        %v1177 = vunpack.c.l.b16 %v882
        %v1178 = vunpack.c.l.b16 %v883
        %v1179 = vunpack.c.l.b16 %v884
        %v1180 = vunpack.c.l.b16 %v885
        %v1181 = vunpack.c.l.b16 %v886
        %v1182 = vunpack.c.l.b16 %v887
        %v1183 = vunpack.c.l.b16 %v888
        %v1184 = vunpack.c.l.b16 %v889
        %v1185 = vunpack.c.l.b16 %v890
        %v1186 = vunpack.c.l.b16 %v891
        %v1187 = vunpack.c.l.b16 %v892
        %v1188 = vunpack.c.l.b16 %v893
        %v1189 = vunpack.c.l.b16 %v894
        %v1190 = vunpack.c.l.b16 %v895
        %v1191 = vunpack.c.l.b16 %v896
        %v1192 = vunpack.c.l.b16 %v897
        %v1193 = vunpack.c.l.b16 %v898
        %v1194 = vunpack.c.l.b16 %v899
        %v1195 = vunpack.c.l.b16 %v900
        %v1196 = vunpack.c.l.b16 %v901
        %v1197 = vunpack.c.l.b16 %v902
        %v1198 = vunpack.c.l.b16 %v903
        %v1199 = vunpack.c.l.b16 %v904
        %v1200 = vunpack.c.l.b16 %v905
        %v1201 = vunpack.c.l.b16 %v906
        %v1202 = vunpack.c.l.b16 %v907
        %v1203 = vunpack.c.l.b16 %v908
        %v1204 = vunpack.c.l.b16 %v909
        %v1205 = vunpack.c.l.b16 %v910
        %v1206 = vunpack.c.l.b16 %v911
        %v1207 = vunpack.c.l.b16 %v912
        %v1208 = vunpack.c.l.b16 %v913
        %v1209 = vunpack.c.l.b16 %v914
        %v1210 = vunpack.c.l.b16 %v915
        %v1211 = vunpack.c.l.b16 %v916
        %v1212 = vunpack.c.l.b16 %v917
        %v1213 = vunpack.c.l.b16 %v918
        %v1214 = vunpack.c.l.b16 %v919
        %v1215 = vunpack.c.l.b16 %v920
        %v1216 = vunpack.c.l.b16 %v921
        %v1217 = vunpack.c.l.b16 %v922
        %v1218 = vunpack.c.l.b16 %v923
        %v1219 = vunpack.c.l.b16 %v924
        %v1220 = vunpack.c.l.b16 %v925
        %v1221 = vunpack.c.l.b16 %v926
        %v1222 = vunpack.c.l.b16 %v927
        %v1223 = vunpack.c.l.b16 %v928
        %v1224 = vunpack.c.l.b16 %v929
        %v1225 = vunpack.c.l.b16 %v930
        %v1226 = vunpack.c.l.b16 %v931
        %v1227 = vunpack.c.l.b16 %v932
        %v1228 = vunpack.c.l.b16 %v933
        %v1229 = vunpack.c.l.b16 %v934
        %v1230 = vunpack.c.l.b16 %v935
        %v1231 = vunpack.c.l.b16 %v936
        %v1232 = vunpack.c.l.b16 %v937
        %v1233 = vunpack.c.l.b16 %v938
        %v1234 = vunpack.c.l.b16 %v939
        %v1235 = vunpack.c.l.b16 %v940
        %v1236 = vunpack.c.l.b16 %v941
        %v1237 = vunpack.c.l.b16 %v942
        %v1238 = vunpack.c.l.b16 %v943
        %v1239 = vunpack.c.l.b16 %v944
        %v1240 = vunpack.c.l.b16 %v945
        %v1241 = vunpack.c.l.b16 %v946
        %v1242 = vunpack.c.l.b16 %v947
        %v1243 = vunpack.c.l.b16 %v948
        %v1244 = vunpack.c.l.b16 %v949
        %v1245 = vunpack.c.l.b16 %v950
        %v1246 = vunpack.c.l.b16 %v951
        %v1247 = vunpack.c.l.b16 %v952
        %v1248 = vunpack.c.l.b16 %v953
        %v1249 = vunpack.c.l.b16 %v954
        %v1250 = vunpack.c.l.b16 %v955
        %v1251 = vunpack.c.l.b16 %v956
        %v1252 = vunpack.c.l.b16 %v957
        %v1253 = vunpack.c.l.b16 %v958
        %v1254 = vunpack.c.l.b16 %v959
        %v1255 = vunpack.c.l.b16 %v960
        %v1256 = vunpack.c.l.b16 %v961
        %v1257 = vunpack.c.l.b16 %v962
        %v1258 = vunpack.c.l.b16 %v963
        %v1259 = vunpack.c.l.b16 %v964
        %v1260 = vunpack.c.l.b16 %v965
        %v1261 = vunpack.c.l.b16 %v966
        %v1262 = vunpack.c.l.b16 %v967
        %v1263 = vunpack.c.l.b16 %v968
        %v1264 = vunpack.c.l.b16 %v969
        %v1265 = vunpack.c.l.b16 %v970
        %v1266 = vunpack.c.l.b16 %v971
        %v1267 = vunpack.c.l.b16 %v972
        %v1268 = vunpack.c.l.b16 %v973
        %v1269 = vunpack.c.l.b16 %v974
        %v1270 = vunpack.c.l.b16 %v975
        %v1271 = vunpack.c.l.b16 %v976
        %v1272 = vunpack.c.l.b16 %v977
        %v1273 = vunpack.c.l.b16 %v978
        %v1274 = vunpack.c.l.b16 %v979
        %v1275 = vunpack.c.l.b16 %v980
        %v1276 = vunpack.c.l.b16 %v981
        %v1277 = vunpack.c.l.b16 %v982
        %v1278 = vunpack.c.l.b16 %v983
        %v1279 = vunpack.c.l.b16 %v984
        %v1280 = vunpack.c.l.b16 %v985
        %v1281 = vunpack.c.l.b16 %v986
        %v1282 = vunpack.c.l.b16 %v987
        %v1283 = vunpack.c.l.b16 %v988
        %v1284 = vunpack.c.l.b16 %v989
        %v1285 = vunpack.c.l.b16 %v990
        %v1286 = vunpack.c.l.b16 %v991
        %v1287 = vunpack.c.l.b16 %v992
        %v1288 = vunpack.c.l.b16 %v993
        %v1289 = vunpack.c.l.b16 %v994
        %v1290 = vunpack.c.l.b16 %v995
        %v1291 = vunpack.c.l.b16 %v996
        %v1292 = vunpack.c.l.b16 %v997
        %v1293 = vunpack.c.l.b16 %v998
        %v1294 = vunpack.c.l.b16 %v999
        %v1295 = vunpack.c.l.b16 %v1000
        %v1296 = vpack.c.b16 %v1153, %v1152
        %v1297 = vpack.c.b16 %v1155, %v1154
        %v1298 = vpack.c.b16 %v1157, %v1156
        %v1299 = vpack.c.b16 %v1159, %v1158
        %v1300 = vpack.c.b16 %v1161, %v1160
        %v1301 = vpack.c.b16 %v1163, %v1162
        %v1302 = vpack.c.b16 %v1165, %v1164
        %v1303 = vpack.c.b16 %v1167, %v1166
        %v1304 = vpack.c.b16 %v1169, %v1168
        %v1305 = vpack.c.b16 %v1171, %v1170
        %v1306 = vpack.c.b16 %v1173, %v1172
        %v1307 = vpack.c.b16 %v1175, %v1174
        %v1308 = vpack.c.b16 %v1177, %v1176
        %v1309 = vpack.c.b16 %v1179, %v1178
        %v1310 = vpack.c.b16 %v1181, %v1180
        %v1311 = vpack.c.b16 %v1183, %v1182
        %v1312 = vpack.c.b16 %v1185, %v1184
        %v1313 = vpack.c.b16 %v1187, %v1186
        %v1314 = vpack.c.b16 %v1189, %v1188
        %v1315 = vpack.c.b16 %v1191, %v1190
        %v1316 = vpack.c.b16 %v1193, %v1192
        %v1317 = vpack.c.b16 %v1195, %v1194
        %v1318 = vpack.c.b16 %v1197, %v1196
        %v1319 = vpack.c.b16 %v1199, %v1198
        %v1320 = vpack.c.b16 %v1201, %v1200
        %v1321 = vpack.c.b16 %v1203, %v1202
        %v1322 = vpack.c.b16 %v1205, %v1204
        %v1323 = vpack.c.b16 %v1207, %v1206
        %v1324 = vpack.c.b16 %v1209, %v1208
        %v1325 = vpack.c.b16 %v1211, %v1210
        %v1326 = vpack.c.b16 %v1213, %v1212
        %v1327 = vpack.c.b16 %v1215, %v1214
        %v1328 = vpack.c.b16 %v1217, %v1216
        %v1329 = vpack.c.b16 %v1219, %v1218
        %v1330 = vpack.c.b16 %v1221, %v1220
        %v1331 = vpack.c.b16 %v1223, %v1222
        %v1332 = vpack.c.b16 %v1225, %v1224
        %v1333 = vpack.c.b16 %v1227, %v1226
        %v1334 = vpack.c.b16 %v1229, %v1228
        %v1335 = vpack.c.b16 %v1231, %v1230
        %v1336 = vpack.c.b16 %v1233, %v1232
        %v1337 = vpack.c.b16 %v1235, %v1234
        %v1338 = vpack.c.b16 %v1237, %v1236
        %v1339 = vpack.c.b16 %v1239, %v1238
        %v1340 = vpack.c.b16 %v1241, %v1240
        %v1341 = vpack.c.b16 %v1243, %v1242
        %v1342 = vpack.c.b16 %v1245, %v1244
        %v1343 = vpack.c.b16 %v1247, %v1246
        %v1344 = vpack.c.b16 %v1249, %v1248
        %v1345 = vpack.c.b16 %v1251, %v1250
        %v1346 = vpack.c.b16 %v1253, %v1252
        %v1347 = vpack.c.b16 %v1255, %v1254
        %v1348 = vpack.c.b16 %v1257, %v1256
        %v1349 = vpack.c.b16 %v1259, %v1258
        %v1350 = vpack.c.b16 %v1261, %v1260
        %v1351 = vpack.c.b16 %v1263, %v1262
        %v1352 = vpack.c.b16 %v1265, %v1264
        %v1353 = vpack.c.b16 %v1267, %v1266
        %v1354 = vpack.c.b16 %v1269, %v1268
        %v1355 = vpack.c.b16 %v1271, %v1270
        %v1356 = vpack.c.b16 %v1273, %v1272
        %v1357 = vpack.c.b16 %v1275, %v1274
        %v1358 = vpack.c.b16 %v1277, %v1276
        %v1359 = vpack.c.b16 %v1279, %v1278
        %v1360 = vpack.c.b16 %v1281, %v1280
        %v1361 = vpack.c.b16 %v1283, %v1282
        %v1362 = vpack.c.b16 %v1285, %v1284
        %v1363 = vpack.c.b16 %v1287, %v1286
        %v1364 = vpack.c.b16 %v1289, %v1288
        %v1365 = vpack.c.b16 %v1291, %v1290
        %v1366 = vpack.c.b16 %v1293, %v1292
        %v1367 = vpack.c.b16 %v1295, %v1294
        %1440 = vmatprep.subr.bf16.mxu0 0
        %1441 = vmatpush1.bf16.msra.mxu0 %v1296
        %1442 = vmatprep.subr.bf16.mxu0 0
        %1443 = vmatpush1.bf16.msra.mxu0 %v1297
        %1444 = vmatprep.subr.bf16.mxu0 0
        %1445 = vmatpush1.bf16.msra.mxu0 %v1298
        %1446 = vmatprep.subr.bf16.mxu0 0
        %1447 = vmatpush1.bf16.msra.mxu0 %v1299
        %1448 = vmatprep.subr.bf16.mxu0 0
        %1449 = vmatpush1.bf16.msra.mxu0 %v1300
        %1450 = vmatprep.subr.bf16.mxu0 0
        %1451 = vmatpush1.bf16.msra.mxu0 %v1301
        %1452 = vmatprep.subr.bf16.mxu0 0
        %1453 = vmatpush1.bf16.msra.mxu0 %v1302
        %1454 = vmatprep.subr.bf16.mxu0 0
        %1455 = vmatpush1.bf16.msra.mxu0 %v1303
        %1456 = vmatprep.subr.bf16.mxu0 0
        %1457 = vmatpush1.bf16.msra.mxu0 %v1304
        %1458 = vmatprep.subr.bf16.mxu0 0
        %1459 = vmatpush1.bf16.msra.mxu0 %v1305
        %1460 = vmatprep.subr.bf16.mxu0 0
        %1461 = vmatpush1.bf16.msra.mxu0 %v1306
        %1462 = vmatprep.subr.bf16.mxu0 0
        %1463 = vmatpush1.bf16.msra.mxu0 %v1307
        %1464 = vmatprep.subr.bf16.mxu0 0
        %1465 = vmatpush1.bf16.msra.mxu0 %v1308
        %1466 = vmatprep.subr.bf16.mxu0 0
        %1467 = vmatpush1.bf16.msra.mxu0 %v1309
        %1468 = vmatprep.subr.bf16.mxu0 0
        %1469 = vmatpush1.bf16.msra.mxu0 %v1310
        %1470 = vmatprep.subr.bf16.mxu0 0
        %1471 = vmatpush1.bf16.msra.mxu0 %v1311
        %1472 = vmatprep.mubr.bf16.mxu0 %v714
        %1473 = vmatmul.mubr.bf16.gmra.mrb[0].mxu0 %v713
        %v1474 = vpop.f32.mrb[0].mxu0
        %v1475 = vadd.f32 %v1006, %v1474
        %v1476 = vpop.f32.mrb[0].mxu0
        %v1477 = vpop.f32.mrb[0].mxu0
        %v1478 = vadd.f32 %v1006, %v1477
        %v1479 = vpop.f32.mrb[0].mxu0
        %1480 = vmatprep.mubr.bf16.mxu0 %v723
        %1481 = vmatmul.mubr.bf16.gmra.mrb[0].mxu0 %v722
        %v1482 = vpop.f32.mrb[0].mxu0
        %v1483 = vadd.f32 %v1006, %v1482
        %v1484 = vpop.f32.mrb[0].mxu0
        %v1485 = vpop.f32.mrb[0].mxu0
        %v1486 = vadd.f32 %v1006, %v1485
        %v1487 = vpop.f32.mrb[0].mxu0
        %1488 = vmatprep.mubr.bf16.mxu0 %v732
        %1489 = vmatmul.mubr.bf16.gmra.mrb[0].mxu0 %v731
        %v1490 = vpop.f32.mrb[0].mxu0
        %v1491 = vadd.f32 %v1006, %v1490
        %v1492 = vpop.f32.mrb[0].mxu0
        %v1493 = vpop.f32.mrb[0].mxu0
        %v1494 = vadd.f32 %v1006, %v1493
        %v1495 = vpop.f32.mrb[0].mxu0
        %1496 = vmatprep.mubr.bf16.mxu0 %v741
        %1497 = vmatmul.mubr.bf16.gmra.mrb[0].mxu0 %v740
        %v1498 = vpop.f32.mrb[0].mxu0
        %v1499 = vadd.f32 %v1006, %v1498
        %v1500 = vpop.f32.mrb[0].mxu0
        %v1501 = vpop.f32.mrb[0].mxu0
        %v1502 = vadd.f32 %v1006, %v1501
        %v1503 = vpop.f32.mrb[0].mxu0
        %1504 = vmatprep.mubr.bf16.mxu0 %v750
        %1505 = vmatmul.mubr.bf16.gmra.mrb[0].mxu0 %v749
        %v1506 = vpop.f32.mrb[0].mxu0
        %v1507 = vadd.f32 %v1006, %v1506
        %v1508 = vpop.f32.mrb[0].mxu0
        %v1509 = vpop.f32.mrb[0].mxu0
        %v1510 = vadd.f32 %v1006, %v1509
        %v1511 = vpop.f32.mrb[0].mxu0
        %1512 = vmatprep.mubr.bf16.mxu0 %v759
        %1513 = vmatmul.mubr.bf16.gmra.mrb[0].mxu0 %v758
        %v1514 = vpop.f32.mrb[0].mxu0
        %v1515 = vadd.f32 %v1006, %v1514
        %v1516 = vpop.f32.mrb[0].mxu0
        %v1517 = vpop.f32.mrb[0].mxu0
        %v1518 = vadd.f32 %v1006, %v1517
        %v1519 = vpop.f32.mrb[0].mxu0
        %1520 = vmatprep.mubr.bf16.mxu0 %v768
        %1521 = vmatmul.mubr.bf16.gmra.mrb[0].mxu0 %v767
        %v1522 = vpop.f32.mrb[0].mxu0
        %v1523 = vadd.f32 %v1006, %v1522
        %v1524 = vpop.f32.mrb[0].mxu0
        %v1525 = vpop.f32.mrb[0].mxu0
        %v1526 = vadd.f32 %v1006, %v1525
        %v1527 = vpop.f32.mrb[0].mxu0
        %1528 = vmatprep.mubr.bf16.mxu0 %v777
        %1529 = vmatmul.mubr.bf16.gmra.mrb[0].mxu0 %v776
        %v1530 = vpop.f32.mrb[0].mxu0
        %v1531 = vadd.f32 %v1006, %v1530
        %v1532 = vpop.f32.mrb[0].mxu0
        %v1533 = vpop.f32.mrb[0].mxu0
        %v1534 = vadd.f32 %v1006, %v1533
        %v1535 = vpop.f32.mrb[0].mxu0
        %1536 = vmatprep.mubr.bf16.mxu0 %v786
        %1537 = vmatmul.mubr.bf16.gmra.mrb[0].mxu0 %v785
        %v1538 = vpop.f32.mrb[0].mxu0
        %v1539 = vadd.f32 %v1006, %v1538
        %v1540 = vpop.f32.mrb[0].mxu0
        %v1541 = vpop.f32.mrb[0].mxu0
        %v1542 = vadd.f32 %v1006, %v1541
        %v1543 = vpop.f32.mrb[0].mxu0
        %1544 = vmatprep.mubr.bf16.mxu0 %v795
        %1545 = vmatmul.mubr.bf16.gmra.mrb[0].mxu0 %v794
        %v1546 = vpop.f32.mrb[0].mxu0
        %v1547 = vadd.f32 %v1006, %v1546
        %v1548 = vpop.f32.mrb[0].mxu0
        %v1549 = vpop.f32.mrb[0].mxu0
        %v1550 = vadd.f32 %v1006, %v1549
        %v1551 = vpop.f32.mrb[0].mxu0
        %1552 = vmatprep.mubr.bf16.mxu0 %v804
        %1553 = vmatmul.mubr.bf16.gmra.mrb[0].mxu0 %v803
        %v1554 = vpop.f32.mrb[0].mxu0
        %v1555 = vadd.f32 %v1006, %v1554
        %v1556 = vpop.f32.mrb[0].mxu0
        %v1557 = vpop.f32.mrb[0].mxu0
        %v1558 = vadd.f32 %v1006, %v1557
        %v1559 = vpop.f32.mrb[0].mxu0
        %1560 = vmatprep.mubr.bf16.mxu0 %v813
        %1561 = vmatmul.mubr.bf16.gmra.mrb[0].mxu0 %v812
        %v1562 = vpop.f32.mrb[0].mxu0
        %v1563 = vadd.f32 %v1006, %v1562
        %v1564 = vpop.f32.mrb[0].mxu0
        %v1565 = vpop.f32.mrb[0].mxu0
        %v1566 = vadd.f32 %v1006, %v1565
        %v1567 = vpop.f32.mrb[0].mxu0
        %1568 = vmatprep.mubr.bf16.mxu0 %v822
        %1569 = vmatmul.mubr.bf16.gmra.mrb[0].mxu0 %v821
        %v1570 = vpop.f32.mrb[0].mxu0
        %v1571 = vadd.f32 %v1006, %v1570
        %v1572 = vpop.f32.mrb[0].mxu0
        %v1573 = vpop.f32.mrb[0].mxu0
        %v1574 = vadd.f32 %v1006, %v1573
        %v1575 = vpop.f32.mrb[0].mxu0
        %1576 = vmatprep.mubr.bf16.mxu0 %v831
        %1577 = vmatmul.mubr.bf16.gmra.mrb[0].mxu0 %v830
        %v1578 = vpop.f32.mrb[0].mxu0
        %v1579 = vadd.f32 %v1006, %v1578
        %v1580 = vpop.f32.mrb[0].mxu0
        %v1581 = vpop.f32.mrb[0].mxu0
        %v1582 = vadd.f32 %v1006, %v1581
        %v1583 = vpop.f32.mrb[0].mxu0
        %1584 = vmatprep.mubr.bf16.mxu0 %v840
        %1585 = vmatmul.mubr.bf16.gmra.mrb[0].mxu0 %v839
        %v1586 = vpop.f32.mrb[0].mxu0
        %v1587 = vadd.f32 %v1006, %v1586
        %v1588 = vpop.f32.mrb[0].mxu0
        %v1589 = vpop.f32.mrb[0].mxu0
        %v1590 = vadd.f32 %v1006, %v1589
        %v1591 = vpop.f32.mrb[0].mxu0
        %1592 = vmatprep.mubr.bf16.mxu0 %v849
        %1593 = vmatmul.mubr.bf16.gmra.mrb[0].mxu0 %v848
        %v1594 = vpop.f32.mrb[0].mxu0
        %v1595 = vadd.f32 %v1006, %v1594
        %v1596 = vpop.f32.mrb[0].mxu0
        %v1597 = vpop.f32.mrb[0].mxu0
        %v1598 = vadd.f32 %v1006, %v1597
        %v1599 = vpop.f32.mrb[0].mxu0
        %1600 = vdwg.mxu0
        %1601 = vmatprep.subr.bf16.mxu0 0
        %1602 = vmatpush1.bf16.msra.mxu0 %v1312
        %1603 = vmatprep.subr.bf16.mxu0 0
        %1604 = vmatpush1.bf16.msra.mxu0 %v1313
        %1605 = vmatprep.subr.bf16.mxu0 0
        %1606 = vmatpush1.bf16.msra.mxu0 %v1314
        %1607 = vmatprep.subr.bf16.mxu0 0
        %1608 = vmatpush1.bf16.msra.mxu0 %v1315
        %1609 = vmatprep.subr.bf16.mxu0 0
        %1610 = vmatpush1.bf16.msra.mxu0 %v1316
        %1611 = vmatprep.subr.bf16.mxu0 0
        %1612 = vmatpush1.bf16.msra.mxu0 %v1317
        %1613 = vmatprep.subr.bf16.mxu0 0
        %1614 = vmatpush1.bf16.msra.mxu0 %v1318
        %1615 = vmatprep.subr.bf16.mxu0 0
        %1616 = vmatpush1.bf16.msra.mxu0 %v1319
        %1617 = vmatprep.subr.bf16.mxu0 0
        %1618 = vmatpush1.bf16.msra.mxu0 %v1320
        %1619 = vmatprep.subr.bf16.mxu0 0
        %1620 = vmatpush1.bf16.msra.mxu0 %v1321
        %1621 = vmatprep.subr.bf16.mxu0 0
        %1622 = vmatpush1.bf16.msra.mxu0 %v1322
        %1623 = vmatprep.subr.bf16.mxu0 0
        %1624 = vmatpush1.bf16.msra.mxu0 %v1323
        %1625 = vmatprep.subr.bf16.mxu0 0
        %1626 = vmatpush1.bf16.msra.mxu0 %v1324
        %1627 = vmatprep.subr.bf16.mxu0 0
        %1628 = vmatpush1.bf16.msra.mxu0 %v1325
        %1629 = vmatprep.subr.bf16.mxu0 0
        %1630 = vmatpush1.bf16.msra.mxu0 %v1326
        %1631 = vmatprep.subr.bf16.mxu0 0
        %1632 = vmatpush1.bf16.msra.mxu0 %v1327
        %1633 = vmatprep.mubr.bf16.mxu0 %v716
        %1634 = vmatmul.mubr.bf16.gmra.mrb[0].mxu0 %v715
        %v1635 = vpop.f32.mrb[0].mxu0
        %v1636 = vadd.f32 %v1475, %v1635
        %v1637 = vpop.f32.mrb[0].mxu0
        %v1638 = vpop.f32.mrb[0].mxu0
        %v1639 = vadd.f32 %v1478, %v1638
        %v1640 = vpop.f32.mrb[0].mxu0
        %1641 = vmatprep.mubr.bf16.mxu0 %v725
        %1642 = vmatmul.mubr.bf16.gmra.mrb[0].mxu0 %v724
        %v1643 = vpop.f32.mrb[0].mxu0
        %v1644 = vadd.f32 %v1483, %v1643
        %v1645 = vpop.f32.mrb[0].mxu0
        %v1646 = vpop.f32.mrb[0].mxu0
        %v1647 = vadd.f32 %v1486, %v1646
        %v1648 = vpop.f32.mrb[0].mxu0
        %1649 = vmatprep.mubr.bf16.mxu0 %v734
        %1650 = vmatmul.mubr.bf16.gmra.mrb[0].mxu0 %v733
        %v1651 = vpop.f32.mrb[0].mxu0
        %v1652 = vadd.f32 %v1491, %v1651
        %v1653 = vpop.f32.mrb[0].mxu0
        %v1654 = vpop.f32.mrb[0].mxu0
        %v1655 = vadd.f32 %v1494, %v1654
        %v1656 = vpop.f32.mrb[0].mxu0
        %1657 = vmatprep.mubr.bf16.mxu0 %v743
        %1658 = vmatmul.mubr.bf16.gmra.mrb[0].mxu0 %v742
        %v1659 = vpop.f32.mrb[0].mxu0
        %v1660 = vadd.f32 %v1499, %v1659
        %v1661 = vpop.f32.mrb[0].mxu0
        %v1662 = vpop.f32.mrb[0].mxu0
        %v1663 = vadd.f32 %v1502, %v1662
        %v1664 = vpop.f32.mrb[0].mxu0
        %1665 = vmatprep.mubr.bf16.mxu0 %v752
        %1666 = vmatmul.mubr.bf16.gmra.mrb[0].mxu0 %v751
        %v1667 = vpop.f32.mrb[0].mxu0
        %v1668 = vadd.f32 %v1507, %v1667
        %v1669 = vpop.f32.mrb[0].mxu0
        %v1670 = vpop.f32.mrb[0].mxu0
        %v1671 = vadd.f32 %v1510, %v1670
        %v1672 = vpop.f32.mrb[0].mxu0
        %1673 = vmatprep.mubr.bf16.mxu0 %v761
        %1674 = vmatmul.mubr.bf16.gmra.mrb[0].mxu0 %v760
        %v1675 = vpop.f32.mrb[0].mxu0
        %v1676 = vadd.f32 %v1515, %v1675
        %v1677 = vpop.f32.mrb[0].mxu0
        %v1678 = vpop.f32.mrb[0].mxu0
        %v1679 = vadd.f32 %v1518, %v1678
        %v1680 = vpop.f32.mrb[0].mxu0
        %1681 = vmatprep.mubr.bf16.mxu0 %v770
        %1682 = vmatmul.mubr.bf16.gmra.mrb[0].mxu0 %v769
        %v1683 = vpop.f32.mrb[0].mxu0
        %v1684 = vadd.f32 %v1523, %v1683
        %v1685 = vpop.f32.mrb[0].mxu0
        %v1686 = vpop.f32.mrb[0].mxu0
        %v1687 = vadd.f32 %v1526, %v1686
        %v1688 = vpop.f32.mrb[0].mxu0
        %1689 = vmatprep.mubr.bf16.mxu0 %v779
        %1690 = vmatmul.mubr.bf16.gmra.mrb[0].mxu0 %v778
        %v1691 = vpop.f32.mrb[0].mxu0
        %v1692 = vadd.f32 %v1531, %v1691
        %v1693 = vpop.f32.mrb[0].mxu0
        %v1694 = vpop.f32.mrb[0].mxu0
        %v1695 = vadd.f32 %v1534, %v1694
        %v1696 = vpop.f32.mrb[0].mxu0
        %1697 = vmatprep.mubr.bf16.mxu0 %v788
        %1698 = vmatmul.mubr.bf16.gmra.mrb[0].mxu0 %v787
        %v1699 = vpop.f32.mrb[0].mxu0
        %v1700 = vadd.f32 %v1539, %v1699
        %v1701 = vpop.f32.mrb[0].mxu0
        %v1702 = vpop.f32.mrb[0].mxu0
        %v1703 = vadd.f32 %v1542, %v1702
        %v1704 = vpop.f32.mrb[0].mxu0
        %1705 = vmatprep.mubr.bf16.mxu0 %v797
        %1706 = vmatmul.mubr.bf16.gmra.mrb[0].mxu0 %v796
        %v1707 = vpop.f32.mrb[0].mxu0
        %v1708 = vadd.f32 %v1547, %v1707
        %v1709 = vpop.f32.mrb[0].mxu0
        %v1710 = vpop.f32.mrb[0].mxu0
        %v1711 = vadd.f32 %v1550, %v1710
        %v1712 = vpop.f32.mrb[0].mxu0
        %1713 = vmatprep.mubr.bf16.mxu0 %v806
        %1714 = vmatmul.mubr.bf16.gmra.mrb[0].mxu0 %v805
        %v1715 = vpop.f32.mrb[0].mxu0
        %v1716 = vadd.f32 %v1555, %v1715
        %v1717 = vpop.f32.mrb[0].mxu0
        %v1718 = vpop.f32.mrb[0].mxu0
        %v1719 = vadd.f32 %v1558, %v1718
        %v1720 = vpop.f32.mrb[0].mxu0
        %1721 = vmatprep.mubr.bf16.mxu0 %v815
        %1722 = vmatmul.mubr.bf16.gmra.mrb[0].mxu0 %v814
        %v1723 = vpop.f32.mrb[0].mxu0
        %v1724 = vadd.f32 %v1563, %v1723
        %v1725 = vpop.f32.mrb[0].mxu0
        %v1726 = vpop.f32.mrb[0].mxu0
        %v1727 = vadd.f32 %v1566, %v1726
        %v1728 = vpop.f32.mrb[0].mxu0
        %1729 = vmatprep.mubr.bf16.mxu0 %v824
        %1730 = vmatmul.mubr.bf16.gmra.mrb[0].mxu0 %v823
        %v1731 = vpop.f32.mrb[0].mxu0
        %v1732 = vadd.f32 %v1571, %v1731
        %v1733 = vpop.f32.mrb[0].mxu0
        %v1734 = vpop.f32.mrb[0].mxu0
        %v1735 = vadd.f32 %v1574, %v1734
        %v1736 = vpop.f32.mrb[0].mxu0
        %1737 = vmatprep.mubr.bf16.mxu0 %v833
        %1738 = vmatmul.mubr.bf16.gmra.mrb[0].mxu0 %v832
        %v1739 = vpop.f32.mrb[0].mxu0
        %v1740 = vadd.f32 %v1579, %v1739
        %v1741 = vpop.f32.mrb[0].mxu0
        %v1742 = vpop.f32.mrb[0].mxu0
        %v1743 = vadd.f32 %v1582, %v1742
        %v1744 = vpop.f32.mrb[0].mxu0
        %1745 = vmatprep.mubr.bf16.mxu0 %v842
        %1746 = vmatmul.mubr.bf16.gmra.mrb[0].mxu0 %v841
        %v1747 = vpop.f32.mrb[0].mxu0
        %v1748 = vadd.f32 %v1587, %v1747
        %v1749 = vpop.f32.mrb[0].mxu0
        %v1750 = vpop.f32.mrb[0].mxu0
        %v1751 = vadd.f32 %v1590, %v1750
        %v1752 = vpop.f32.mrb[0].mxu0
        %1753 = vmatprep.mubr.bf16.mxu0 %v851
        %1754 = vmatmul.mubr.bf16.gmra.mrb[0].mxu0 %v850
        %v1755 = vpop.f32.mrb[0].mxu0
        %v1756 = vadd.f32 %v1595, %v1755
        %v1757 = vpop.f32.mrb[0].mxu0
        %v1758 = vpop.f32.mrb[0].mxu0
        %v1759 = vadd.f32 %v1598, %v1758
        %v1760 = vpop.f32.mrb[0].mxu0
        %1761 = vdwg.mxu0
        %1762 = vmatprep.subr.bf16.mxu0 0
        %1763 = vmatpush1.bf16.msra.mxu0 %v1328
        %1764 = vmatprep.subr.bf16.mxu0 0
        %1765 = vmatpush1.bf16.msra.mxu0 %v1329
        %1766 = vmatprep.subr.bf16.mxu0 0
        %1767 = vmatpush1.bf16.msra.mxu0 %v1330
        %1768 = vmatprep.subr.bf16.mxu0 0
        %1769 = vmatpush1.bf16.msra.mxu0 %v1331
        %1770 = vmatprep.subr.bf16.mxu0 0
        %1771 = vmatpush1.bf16.msra.mxu0 %v1332
        %1772 = vmatprep.subr.bf16.mxu0 0
        %1773 = vmatpush1.bf16.msra.mxu0 %v1333
        %1774 = vmatprep.subr.bf16.mxu0 0
        %1775 = vmatpush1.bf16.msra.mxu0 %v1334
        %1776 = vmatprep.subr.bf16.mxu0 0
        %1777 = vmatpush1.bf16.msra.mxu0 %v1335
        %1778 = vmatprep.subr.bf16.mxu0 0
        %1779 = vmatpush1.bf16.msra.mxu0 %v1336
        %1780 = vmatprep.subr.bf16.mxu0 0
        %1781 = vmatpush1.bf16.msra.mxu0 %v1337
        %1782 = vmatprep.subr.bf16.mxu0 0
        %1783 = vmatpush1.bf16.msra.mxu0 %v1338
        %1784 = vmatprep.subr.bf16.mxu0 0
        %1785 = vmatpush1.bf16.msra.mxu0 %v1339
        %1786 = vmatprep.subr.bf16.mxu0 0
        %1787 = vmatpush1.bf16.msra.mxu0 %v1340
        %1788 = vmatprep.subr.bf16.mxu0 0
        %1789 = vmatpush1.bf16.msra.mxu0 %v1341
        %1790 = vmatprep.subr.bf16.mxu0 0
        %1791 = vmatpush1.bf16.msra.mxu0 %v1342
        %1792 = vmatprep.subr.bf16.mxu0 0
        %1793 = vmatpush1.bf16.msra.mxu0 %v1343
        %1794 = vmatprep.mubr.bf16.mxu0 %v718
        %1795 = vmatmul.mubr.bf16.gmra.mrb[0].mxu0 %v717
        %v1796 = vpop.f32.mrb[0].mxu0
        %v1797 = vadd.f32 %v1636, %v1796
        %v1798 = vpop.f32.mrb[0].mxu0
        %v1799 = vpop.f32.mrb[0].mxu0
        %v1800 = vadd.f32 %v1639, %v1799
        %v1801 = vpop.f32.mrb[0].mxu0
        %1802 = vmatprep.mubr.bf16.mxu0 %v727
        %1803 = vmatmul.mubr.bf16.gmra.mrb[0].mxu0 %v726
        %v1804 = vpop.f32.mrb[0].mxu0
        %v1805 = vadd.f32 %v1644, %v1804
        %v1806 = vpop.f32.mrb[0].mxu0
        %v1807 = vpop.f32.mrb[0].mxu0
        %v1808 = vadd.f32 %v1647, %v1807
        %v1809 = vpop.f32.mrb[0].mxu0
        %1810 = vmatprep.mubr.bf16.mxu0 %v736
        %1811 = vmatmul.mubr.bf16.gmra.mrb[0].mxu0 %v735
        %v1812 = vpop.f32.mrb[0].mxu0
        %v1813 = vadd.f32 %v1652, %v1812
        %v1814 = vpop.f32.mrb[0].mxu0
        %v1815 = vpop.f32.mrb[0].mxu0
        %v1816 = vadd.f32 %v1655, %v1815
        %v1817 = vpop.f32.mrb[0].mxu0
        %1818 = vmatprep.mubr.bf16.mxu0 %v745
        %1819 = vmatmul.mubr.bf16.gmra.mrb[0].mxu0 %v744
        %v1820 = vpop.f32.mrb[0].mxu0
        %v1821 = vadd.f32 %v1660, %v1820
        %v1822 = vpop.f32.mrb[0].mxu0
        %v1823 = vpop.f32.mrb[0].mxu0
        %v1824 = vadd.f32 %v1663, %v1823
        %v1825 = vpop.f32.mrb[0].mxu0
        %1826 = vmatprep.mubr.bf16.mxu0 %v754
        %1827 = vmatmul.mubr.bf16.gmra.mrb[0].mxu0 %v753
        %v1828 = vpop.f32.mrb[0].mxu0
        %v1829 = vadd.f32 %v1668, %v1828
        %v1830 = vpop.f32.mrb[0].mxu0
        %v1831 = vpop.f32.mrb[0].mxu0
        %v1832 = vadd.f32 %v1671, %v1831
        %v1833 = vpop.f32.mrb[0].mxu0
        %1834 = vmatprep.mubr.bf16.mxu0 %v763
        %1835 = vmatmul.mubr.bf16.gmra.mrb[0].mxu0 %v762
        %v1836 = vpop.f32.mrb[0].mxu0
        %v1837 = vadd.f32 %v1676, %v1836
        %v1838 = vpop.f32.mrb[0].mxu0
        %v1839 = vpop.f32.mrb[0].mxu0
        %v1840 = vadd.f32 %v1679, %v1839
        %v1841 = vpop.f32.mrb[0].mxu0
        %1842 = vmatprep.mubr.bf16.mxu0 %v772
        %1843 = vmatmul.mubr.bf16.gmra.mrb[0].mxu0 %v771
        %v1844 = vpop.f32.mrb[0].mxu0
        %v1845 = vadd.f32 %v1684, %v1844
        %v1846 = vpop.f32.mrb[0].mxu0
        %v1847 = vpop.f32.mrb[0].mxu0
        %v1848 = vadd.f32 %v1687, %v1847
        %v1849 = vpop.f32.mrb[0].mxu0
        %1850 = vmatprep.mubr.bf16.mxu0 %v781
        %1851 = vmatmul.mubr.bf16.gmra.mrb[0].mxu0 %v780
        %v1852 = vpop.f32.mrb[0].mxu0
        %v1853 = vadd.f32 %v1692, %v1852
        %v1854 = vpop.f32.mrb[0].mxu0
        %v1855 = vpop.f32.mrb[0].mxu0
        %v1856 = vadd.f32 %v1695, %v1855
        %v1857 = vpop.f32.mrb[0].mxu0
        %1858 = vmatprep.mubr.bf16.mxu0 %v790
        %1859 = vmatmul.mubr.bf16.gmra.mrb[0].mxu0 %v789
        %v1860 = vpop.f32.mrb[0].mxu0
        %v1861 = vadd.f32 %v1700, %v1860
        %v1862 = vpop.f32.mrb[0].mxu0
        %v1863 = vpop.f32.mrb[0].mxu0
        %v1864 = vadd.f32 %v1703, %v1863
        %v1865 = vpop.f32.mrb[0].mxu0
        %1866 = vmatprep.mubr.bf16.mxu0 %v799
        %1867 = vmatmul.mubr.bf16.gmra.mrb[0].mxu0 %v798
        %v1868 = vpop.f32.mrb[0].mxu0
        %v1869 = vadd.f32 %v1708, %v1868
        %v1870 = vpop.f32.mrb[0].mxu0
        %v1871 = vpop.f32.mrb[0].mxu0
        %v1872 = vadd.f32 %v1711, %v1871
        %v1873 = vpop.f32.mrb[0].mxu0
        %1874 = vmatprep.mubr.bf16.mxu0 %v808
        %1875 = vmatmul.mubr.bf16.gmra.mrb[0].mxu0 %v807
        %v1876 = vpop.f32.mrb[0].mxu0
        %v1877 = vadd.f32 %v1716, %v1876
        %v1878 = vpop.f32.mrb[0].mxu0
        %v1879 = vpop.f32.mrb[0].mxu0
        %v1880 = vadd.f32 %v1719, %v1879
        %v1881 = vpop.f32.mrb[0].mxu0
        %1882 = vmatprep.mubr.bf16.mxu0 %v817
        %1883 = vmatmul.mubr.bf16.gmra.mrb[0].mxu0 %v816
        %v1884 = vpop.f32.mrb[0].mxu0
        %v1885 = vadd.f32 %v1724, %v1884
        %v1886 = vpop.f32.mrb[0].mxu0
        %v1887 = vpop.f32.mrb[0].mxu0
        %v1888 = vadd.f32 %v1727, %v1887
        %v1889 = vpop.f32.mrb[0].mxu0
        %1890 = vmatprep.mubr.bf16.mxu0 %v826
        %1891 = vmatmul.mubr.bf16.gmra.mrb[0].mxu0 %v825
        %v1892 = vpop.f32.mrb[0].mxu0
        %v1893 = vadd.f32 %v1732, %v1892
        %v1894 = vpop.f32.mrb[0].mxu0
        %v1895 = vpop.f32.mrb[0].mxu0
        %v1896 = vadd.f32 %v1735, %v1895
        %v1897 = vpop.f32.mrb[0].mxu0
        %1898 = vmatprep.mubr.bf16.mxu0 %v835
        %1899 = vmatmul.mubr.bf16.gmra.mrb[0].mxu0 %v834
        %v1900 = vpop.f32.mrb[0].mxu0
        %v1901 = vadd.f32 %v1740, %v1900
        %v1902 = vpop.f32.mrb[0].mxu0
        %v1903 = vpop.f32.mrb[0].mxu0
        %v1904 = vadd.f32 %v1743, %v1903
        %v1905 = vpop.f32.mrb[0].mxu0
        %1906 = vmatprep.mubr.bf16.mxu0 %v844
        %1907 = vmatmul.mubr.bf16.gmra.mrb[0].mxu0 %v843
        %v1908 = vpop.f32.mrb[0].mxu0
        %v1909 = vadd.f32 %v1748, %v1908
        %v1910 = vpop.f32.mrb[0].mxu0
        %v1911 = vpop.f32.mrb[0].mxu0
        %v1912 = vadd.f32 %v1751, %v1911
        %v1913 = vpop.f32.mrb[0].mxu0
        %1914 = vmatprep.mubr.bf16.mxu0 %v853
        %1915 = vmatmul.mubr.bf16.gmra.mrb[0].mxu0 %v852
        %v1916 = vpop.f32.mrb[0].mxu0
        %v1917 = vadd.f32 %v1756, %v1916
        %v1918 = vpop.f32.mrb[0].mxu0
        %v1919 = vpop.f32.mrb[0].mxu0
        %v1920 = vadd.f32 %v1759, %v1919
        %v1921 = vpop.f32.mrb[0].mxu0
        %1922 = vdwg.mxu0
        %1923 = vmatprep.subr.bf16.mxu0 0
        %1924 = vmatpush1.bf16.msra.mxu0 %v1344
        %1925 = vmatprep.subr.bf16.mxu0 0
        %1926 = vmatpush1.bf16.msra.mxu0 %v1345
        %1927 = vmatprep.subr.bf16.mxu0 0
        %1928 = vmatpush1.bf16.msra.mxu0 %v1346
        %1929 = vmatprep.subr.bf16.mxu0 0
        %1930 = vmatpush1.bf16.msra.mxu0 %v1347
        %1931 = vmatprep.subr.bf16.mxu0 0
        %1932 = vmatpush1.bf16.msra.mxu0 %v1348
        %1933 = vmatprep.subr.bf16.mxu0 0
        %1934 = vmatpush1.bf16.msra.mxu0 %v1349
        %1935 = vmatprep.subr.bf16.mxu0 0
        %1936 = vmatpush1.bf16.msra.mxu0 %v1350
        %1937 = vmatprep.subr.bf16.mxu0 0
        %1938 = vmatpush1.bf16.msra.mxu0 %v1351
        %1939 = vmatprep.subr.bf16.mxu0 0
        %1940 = vmatpush1.bf16.msra.mxu0 %v1352
        %1941 = vmatprep.subr.bf16.mxu0 0
        %1942 = vmatpush1.bf16.msra.mxu0 %v1353
        %1943 = vmatprep.subr.bf16.mxu0 0
        %1944 = vmatpush1.bf16.msra.mxu0 %v1354
        %1945 = vmatprep.subr.bf16.mxu0 0
        %1946 = vmatpush1.bf16.msra.mxu0 %v1355
        %1947 = vmatprep.subr.bf16.mxu0 0
        %1948 = vmatpush1.bf16.msra.mxu0 %v1356
        %1949 = vmatprep.subr.bf16.mxu0 0
        %1950 = vmatpush1.bf16.msra.mxu0 %v1357
        %1951 = vmatprep.subr.bf16.mxu0 0
        %1952 = vmatpush1.bf16.msra.mxu0 %v1358
        %1953 = vmatprep.subr.bf16.mxu0 0
        %1954 = vmatpush1.bf16.msra.mxu0 %v1359
        %1955 = vmatprep.mubr.bf16.mxu0 %v720
        %1956 = vmatmul.mubr.bf16.gmra.mrb[0].mxu0 %v719
        %v1957 = vpop.f32.mrb[0].mxu0
        %v1958 = vadd.f32 %v1797, %v1957
        %v1959 = vpop.f32.mrb[0].mxu0
        %v1960 = vpop.f32.mrb[0].mxu0
        %v1961 = vadd.f32 %v1800, %v1960
        %v1962 = vpop.f32.mrb[0].mxu0
        %1963 = vmatprep.mubr.bf16.mxu0 %v729
        %1964 = vmatmul.mubr.bf16.gmra.mrb[0].mxu0 %v728
        %v1965 = vpop.f32.mrb[0].mxu0
        %v1966 = vadd.f32 %v1805, %v1965
        %v1967 = vpop.f32.mrb[0].mxu0
        %v1968 = vpop.f32.mrb[0].mxu0
        %v1969 = vadd.f32 %v1808, %v1968
        %v1970 = vpop.f32.mrb[0].mxu0
        %1971 = vmatprep.mubr.bf16.mxu0 %v738
        %1972 = vmatmul.mubr.bf16.gmra.mrb[0].mxu0 %v737
        %v1973 = vpop.f32.mrb[0].mxu0
        %v1974 = vadd.f32 %v1813, %v1973
        %v1975 = vpop.f32.mrb[0].mxu0
        %v1976 = vpop.f32.mrb[0].mxu0
        %v1977 = vadd.f32 %v1816, %v1976
        %v1978 = vpop.f32.mrb[0].mxu0
        %1979 = vmatprep.mubr.bf16.mxu0 %v747
        %1980 = vmatmul.mubr.bf16.gmra.mrb[0].mxu0 %v746
        %v1981 = vpop.f32.mrb[0].mxu0
        %v1982 = vadd.f32 %v1821, %v1981
        %v1983 = vpop.f32.mrb[0].mxu0
        %v1984 = vpop.f32.mrb[0].mxu0
        %v1985 = vadd.f32 %v1824, %v1984
        %v1986 = vpop.f32.mrb[0].mxu0
        %1987 = vmatprep.mubr.bf16.mxu0 %v756
        %1988 = vmatmul.mubr.bf16.gmra.mrb[0].mxu0 %v755
        %v1989 = vpop.f32.mrb[0].mxu0
        %v1990 = vadd.f32 %v1829, %v1989
        %v1991 = vpop.f32.mrb[0].mxu0
        %v1992 = vpop.f32.mrb[0].mxu0
        %v1993 = vadd.f32 %v1832, %v1992
        %v1994 = vpop.f32.mrb[0].mxu0
        %1995 = vmatprep.mubr.bf16.mxu0 %v765
        %1996 = vmatmul.mubr.bf16.gmra.mrb[0].mxu0 %v764
        %v1997 = vpop.f32.mrb[0].mxu0
        %v1998 = vadd.f32 %v1837, %v1997
        %v1999 = vpop.f32.mrb[0].mxu0
        %v2000 = vpop.f32.mrb[0].mxu0
        %v2001 = vadd.f32 %v1840, %v2000
        %v2002 = vpop.f32.mrb[0].mxu0
        %2003 = vmatprep.mubr.bf16.mxu0 %v774
        %2004 = vmatmul.mubr.bf16.gmra.mrb[0].mxu0 %v773
        %v2005 = vpop.f32.mrb[0].mxu0
        %v2006 = vadd.f32 %v1845, %v2005
        %v2007 = vpop.f32.mrb[0].mxu0
        %v2008 = vpop.f32.mrb[0].mxu0
        %v2009 = vadd.f32 %v1848, %v2008
        %v2010 = vpop.f32.mrb[0].mxu0
        %2011 = vmatprep.mubr.bf16.mxu0 %v783
        %2012 = vmatmul.mubr.bf16.gmra.mrb[0].mxu0 %v782
        %v2013 = vpop.f32.mrb[0].mxu0
        %v2014 = vadd.f32 %v1853, %v2013
        %v2015 = vpop.f32.mrb[0].mxu0
        %v2016 = vpop.f32.mrb[0].mxu0
        %v2017 = vadd.f32 %v1856, %v2016
        %v2018 = vpop.f32.mrb[0].mxu0
        %2019 = vmatprep.mubr.bf16.mxu0 %v792
        %2020 = vmatmul.mubr.bf16.gmra.mrb[0].mxu0 %v791
        %v2021 = vpop.f32.mrb[0].mxu0
        %v2022 = vadd.f32 %v1861, %v2021
        %v2023 = vpop.f32.mrb[0].mxu0
        %v2024 = vpop.f32.mrb[0].mxu0
        %v2025 = vadd.f32 %v1864, %v2024
        %v2026 = vpop.f32.mrb[0].mxu0
        %2027 = vmatprep.mubr.bf16.mxu0 %v801
        %2028 = vmatmul.mubr.bf16.gmra.mrb[0].mxu0 %v800
        %v2029 = vpop.f32.mrb[0].mxu0
        %v2030 = vadd.f32 %v1869, %v2029
        %v2031 = vpop.f32.mrb[0].mxu0
        %v2032 = vpop.f32.mrb[0].mxu0
        %v2033 = vadd.f32 %v1872, %v2032
        %v2034 = vpop.f32.mrb[0].mxu0
        %2035 = vmatprep.mubr.bf16.mxu0 %v810
        %2036 = vmatmul.mubr.bf16.gmra.mrb[0].mxu0 %v809
        %v2037 = vpop.f32.mrb[0].mxu0
        %v2038 = vadd.f32 %v1877, %v2037
        %v2039 = vpop.f32.mrb[0].mxu0
        %v2040 = vpop.f32.mrb[0].mxu0
        %v2041 = vadd.f32 %v1880, %v2040
        %v2042 = vpop.f32.mrb[0].mxu0
        %2043 = vmatprep.mubr.bf16.mxu0 %v819
        %2044 = vmatmul.mubr.bf16.gmra.mrb[0].mxu0 %v818
        %v2045 = vpop.f32.mrb[0].mxu0
        %v2046 = vadd.f32 %v1885, %v2045
        %v2047 = vpop.f32.mrb[0].mxu0
        %v2048 = vpop.f32.mrb[0].mxu0
        %v2049 = vadd.f32 %v1888, %v2048
        %v2050 = vpop.f32.mrb[0].mxu0
        %2051 = vmatprep.mubr.bf16.mxu0 %v828
        %2052 = vmatmul.mubr.bf16.gmra.mrb[0].mxu0 %v827
        %v2053 = vpop.f32.mrb[0].mxu0
        %v2054 = vadd.f32 %v1893, %v2053
        %v2055 = vpop.f32.mrb[0].mxu0
        %v2056 = vpop.f32.mrb[0].mxu0
        %v2057 = vadd.f32 %v1896, %v2056
        %v2058 = vpop.f32.mrb[0].mxu0
        %2059 = vmatprep.mubr.bf16.mxu0 %v837
        %2060 = vmatmul.mubr.bf16.gmra.mrb[0].mxu0 %v836
        %v2061 = vpop.f32.mrb[0].mxu0
        %v2062 = vadd.f32 %v1901, %v2061
        %v2063 = vpop.f32.mrb[0].mxu0
        %v2064 = vpop.f32.mrb[0].mxu0
        %v2065 = vadd.f32 %v1904, %v2064
        %v2066 = vpop.f32.mrb[0].mxu0
        %2067 = vmatprep.mubr.bf16.mxu0 %v846
        %2068 = vmatmul.mubr.bf16.gmra.mrb[0].mxu0 %v845
        %v2069 = vpop.f32.mrb[0].mxu0
        %v2070 = vadd.f32 %v1909, %v2069
        %v2071 = vpop.f32.mrb[0].mxu0
        %v2072 = vpop.f32.mrb[0].mxu0
        %v2073 = vadd.f32 %v1912, %v2072
        %v2074 = vpop.f32.mrb[0].mxu0
        %2075 = vmatprep.mubr.bf16.mxu0 %v855
        %2076 = vmatmul.mubr.bf16.gmra.mrb[0].mxu0 %v854
        %v2077 = vpop.f32.mrb[0].mxu0
        %v2078 = vadd.f32 %v1917, %v2077
        %v2079 = vpop.f32.mrb[0].mxu0
        %v2080 = vpop.f32.mrb[0].mxu0
        %v2081 = vadd.f32 %v1920, %v2080
        %v2082 = vpop.f32.mrb[0].mxu0
        %2083 = vdwg.mxu0
        %2084 = vmatprep.subr.bf16.mxu0 0
        %2085 = vmatpush1.bf16.msra.mxu0 %v1360
        %2086 = vmatprep.subr.bf16.mxu0 0
        %2087 = vmatpush1.bf16.msra.mxu0 %v1361
        %2088 = vmatprep.subr.bf16.mxu0 0
        %2089 = vmatpush1.bf16.msra.mxu0 %v1362
        %2090 = vmatprep.subr.bf16.mxu0 0
        %2091 = vmatpush1.bf16.msra.mxu0 %v1363
        %2092 = vmatprep.subr.bf16.mxu0 0
        %2093 = vmatpush1.bf16.msra.mxu0 %v1364
        %2094 = vmatprep.subr.bf16.mxu0 0
        %2095 = vmatpush1.bf16.msra.mxu0 %v1365
        %2096 = vmatprep.subr.bf16.mxu0 0
        %2097 = vmatpush1.bf16.msra.mxu0 %v1366
        %2098 = vmatprep.subr.bf16.mxu0 0
        %2099 = vmatpush1.bf16.msra.mxu0 %v1367
        %2100 = vmatprep.subr.bf16.mxu0 0
        %2101 = vmatpush1.bf16.msra.mxu0 0
        %2102 = vmatprep.subr.bf16.mxu0 0
        %2103 = vmatpush1.bf16.msra.mxu0 0
        %2104 = vmatprep.subr.bf16.mxu0 0
        %2105 = vmatpush1.bf16.msra.mxu0 0
        %2106 = vmatprep.subr.bf16.mxu0 0
        %2107 = vmatpush1.bf16.msra.mxu0 0
        %2108 = vmatprep.subr.bf16.mxu0 0
        %2109 = vmatpush1.bf16.msra.mxu0 0
        %2110 = vmatprep.subr.bf16.mxu0 0
        %2111 = vmatpush1.bf16.msra.mxu0 0
        %2112 = vmatprep.subr.bf16.mxu0 0
        %2113 = vmatpush1.bf16.msra.mxu0 0
        %2114 = vmatprep.subr.bf16.mxu0 0
        %2115 = vmatpush1.bf16.msra.mxu0 0
        %2116 = vmatprep.mubr.bf16.mxu0 0
        %2117 = vmatmul.mubr.bf16.gmra.mrb[0].mxu0 %v721
        %v2118 = vpop.f32.mrb[0].mxu0
        %v2119 = vadd.f32 %v1958, %v2118
        %v2120 = vpop.f32.mrb[0].mxu0
        %v2121 = vpop.f32.mrb[0].mxu0
        %v2122 = vadd.f32 %v1961, %v2121
        %v2123 = vpop.f32.mrb[0].mxu0
        %2124 = vmatprep.mubr.bf16.mxu0 0
        %2125 = vmatmul.mubr.bf16.gmra.mrb[0].mxu0 %v730
        %v2126 = vpop.f32.mrb[0].mxu0
        %v2127 = vadd.f32 %v1966, %v2126
        %v2128 = vpop.f32.mrb[0].mxu0
        %v2129 = vpop.f32.mrb[0].mxu0
        %v2130 = vadd.f32 %v1969, %v2129
        %v2131 = vpop.f32.mrb[0].mxu0
        %2132 = vmatprep.mubr.bf16.mxu0 0
        %2133 = vmatmul.mubr.bf16.gmra.mrb[0].mxu0 %v739
        %v2134 = vpop.f32.mrb[0].mxu0
        %v2135 = vadd.f32 %v1974, %v2134
        %v2136 = vpop.f32.mrb[0].mxu0
        %v2137 = vpop.f32.mrb[0].mxu0
        %v2138 = vadd.f32 %v1977, %v2137
        %v2139 = vpop.f32.mrb[0].mxu0
        %2140 = vmatprep.mubr.bf16.mxu0 0
        %2141 = vmatmul.mubr.bf16.gmra.mrb[0].mxu0 %v748
        %v2142 = vpop.f32.mrb[0].mxu0
        %v2143 = vadd.f32 %v1982, %v2142
        %v2144 = vpop.f32.mrb[0].mxu0
        %v2145 = vpop.f32.mrb[0].mxu0
        %v2146 = vadd.f32 %v1985, %v2145
        %v2147 = vpop.f32.mrb[0].mxu0
        %2148 = vmatprep.mubr.bf16.mxu0 0
        %2149 = vmatmul.mubr.bf16.gmra.mrb[0].mxu0 %v757
        %v2150 = vpop.f32.mrb[0].mxu0
        %v2151 = vadd.f32 %v1990, %v2150
        %v2152 = vpop.f32.mrb[0].mxu0
        %v2153 = vpop.f32.mrb[0].mxu0
        %v2154 = vadd.f32 %v1993, %v2153
        %v2155 = vpop.f32.mrb[0].mxu0
        %2156 = vmatprep.mubr.bf16.mxu0 0
        %2157 = vmatmul.mubr.bf16.gmra.mrb[0].mxu0 %v766
        %v2158 = vpop.f32.mrb[0].mxu0
        %v2159 = vadd.f32 %v1998, %v2158
        %v2160 = vpop.f32.mrb[0].mxu0
        %v2161 = vpop.f32.mrb[0].mxu0
        %v2162 = vadd.f32 %v2001, %v2161
        %v2163 = vpop.f32.mrb[0].mxu0
        %2164 = vmatprep.mubr.bf16.mxu0 0
        %2165 = vmatmul.mubr.bf16.gmra.mrb[0].mxu0 %v775
        %v2166 = vpop.f32.mrb[0].mxu0
        %v2167 = vadd.f32 %v2006, %v2166
        %v2168 = vpop.f32.mrb[0].mxu0
        %v2169 = vpop.f32.mrb[0].mxu0
        %v2170 = vadd.f32 %v2009, %v2169
        %v2171 = vpop.f32.mrb[0].mxu0
        %2172 = vmatprep.mubr.bf16.mxu0 0
        %2173 = vmatmul.mubr.bf16.gmra.mrb[0].mxu0 %v784
        %v2174 = vpop.f32.mrb[0].mxu0
        %v2175 = vadd.f32 %v2014, %v2174
        %v2176 = vpop.f32.mrb[0].mxu0
        %v2177 = vpop.f32.mrb[0].mxu0
        %v2178 = vadd.f32 %v2017, %v2177
        %v2179 = vpop.f32.mrb[0].mxu0
        %2180 = vmatprep.mubr.bf16.mxu0 0
        %2181 = vmatmul.mubr.bf16.gmra.mrb[0].mxu0 %v793
        %v2182 = vpop.f32.mrb[0].mxu0
        %v2183 = vadd.f32 %v2022, %v2182
        %v2184 = vpop.f32.mrb[0].mxu0
        %v2185 = vpop.f32.mrb[0].mxu0
        %v2186 = vadd.f32 %v2025, %v2185
        %v2187 = vpop.f32.mrb[0].mxu0
        %2188 = vmatprep.mubr.bf16.mxu0 0
        %2189 = vmatmul.mubr.bf16.gmra.mrb[0].mxu0 %v802
        %v2190 = vpop.f32.mrb[0].mxu0
        %v2191 = vadd.f32 %v2030, %v2190
        %v2192 = vpop.f32.mrb[0].mxu0
        %v2193 = vpop.f32.mrb[0].mxu0
        %v2194 = vadd.f32 %v2033, %v2193
        %v2195 = vpop.f32.mrb[0].mxu0
        %2196 = vmatprep.mubr.bf16.mxu0 0
        %2197 = vmatmul.mubr.bf16.gmra.mrb[0].mxu0 %v811
        %v2198 = vpop.f32.mrb[0].mxu0
        %v2199 = vadd.f32 %v2038, %v2198
        %v2200 = vpop.f32.mrb[0].mxu0
        %v2201 = vpop.f32.mrb[0].mxu0
        %v2202 = vadd.f32 %v2041, %v2201
        %v2203 = vpop.f32.mrb[0].mxu0
        %2204 = vmatprep.mubr.bf16.mxu0 0
        %2205 = vmatmul.mubr.bf16.gmra.mrb[0].mxu0 %v820
        %v2206 = vpop.f32.mrb[0].mxu0
        %v2207 = vadd.f32 %v2046, %v2206
        %v2208 = vpop.f32.mrb[0].mxu0
        %v2209 = vpop.f32.mrb[0].mxu0
        %v2210 = vadd.f32 %v2049, %v2209
        %v2211 = vpop.f32.mrb[0].mxu0
        %2212 = vmatprep.mubr.bf16.mxu0 0
        %2213 = vmatmul.mubr.bf16.gmra.mrb[0].mxu0 %v829
        %v2214 = vpop.f32.mrb[0].mxu0
        %v2215 = vadd.f32 %v2054, %v2214
        %v2216 = vpop.f32.mrb[0].mxu0
        %v2217 = vpop.f32.mrb[0].mxu0
        %v2218 = vadd.f32 %v2057, %v2217
        %v2219 = vpop.f32.mrb[0].mxu0
        %2220 = vmatprep.mubr.bf16.mxu0 0
        %2221 = vmatmul.mubr.bf16.gmra.mrb[0].mxu0 %v838
        %v2222 = vpop.f32.mrb[0].mxu0
        %v2223 = vadd.f32 %v2062, %v2222
        %v2224 = vpop.f32.mrb[0].mxu0
        %v2225 = vpop.f32.mrb[0].mxu0
        %v2226 = vadd.f32 %v2065, %v2225
        %v2227 = vpop.f32.mrb[0].mxu0
        %2228 = vmatprep.mubr.bf16.mxu0 0
        %2229 = vmatmul.mubr.bf16.gmra.mrb[0].mxu0 %v847
        %v2230 = vpop.f32.mrb[0].mxu0
        %v2231 = vadd.f32 %v2070, %v2230
        %v2232 = vpop.f32.mrb[0].mxu0
        %v2233 = vpop.f32.mrb[0].mxu0
        %v2234 = vadd.f32 %v2073, %v2233
        %v2235 = vpop.f32.mrb[0].mxu0
        %2236 = vmatprep.mubr.bf16.mxu0 0
        %2237 = vmatmul.mubr.bf16.gmra.mrb[0].mxu0 %v856
        %v2238 = vpop.f32.mrb[0].mxu0
        %v2239 = vadd.f32 %v2078, %v2238
        %v2240 = vpop.f32.mrb[0].mxu0
        %v2241 = vpop.f32.mrb[0].mxu0
        %v2242 = vadd.f32 %v2081, %v2241
        %v2243 = vpop.f32.mrb[0].mxu0
        %2244 = vdwg.mxu0
        %v2245 = vmax.f32 %v2119, 0.0
        %v2246 = vmax.f32 %v2122, 0.0
        %v2247 = vmax.f32 %v2127, 0.0
        %v2248 = vmax.f32 %v2130, 0.0
        %v2249 = vmax.f32 %v2135, 0.0
        %v2250 = vmax.f32 %v2138, 0.0
        %v2251 = vmax.f32 %v2143, 0.0
        %v2252 = vmax.f32 %v2146, 0.0
        %v2253 = vmax.f32 %v2151, 0.0
        %v2254 = vmax.f32 %v2154, 0.0
        %v2255 = vmax.f32 %v2159, 0.0
        %v2256 = vmax.f32 %v2162, 0.0
        %v2257 = vmax.f32 %v2167, 0.0
        %v2258 = vmax.f32 %v2170, 0.0
        %v2259 = vmax.f32 %v2175, 0.0
        %v2260 = vmax.f32 %v2178, 0.0
        %v2261 = vmax.f32 %v2183, 0.0
        %v2262 = vmax.f32 %v2186, 0.0
        %v2263 = vmax.f32 %v2191, 0.0
        %v2264 = vmax.f32 %v2194, 0.0
        %v2265 = vmax.f32 %v2199, 0.0
        %v2266 = vmax.f32 %v2202, 0.0
        %v2267 = vmax.f32 %v2207, 0.0
        %v2268 = vmax.f32 %v2210, 0.0
        %v2269 = vmax.f32 %v2215, 0.0
        %v2270 = vmax.f32 %v2218, 0.0
        %v2271 = vmax.f32 %v2223, 0.0
        %v2272 = vmax.f32 %v2226, 0.0
        %v2273 = vmax.f32 %v2231, 0.0
        %v2274 = vmax.f32 %v2234, 0.0
        %v2275 = vmax.f32 %v2239, 0.0
        %v2276 = vmax.f32 %v2242, 0.0
        %2277 = vst [vmem:[#allocation3] sm:$0xff] 0.0
        %2278 = vst [vmem:[#allocation3 + $0x8] sm:$0xff] 0.0
        %2279 = vst [vmem:[#allocation3 + $0x10] sm:$0x3] 0.0
        %2280 = vst [vmem:[#allocation3 + $0x18] sm:$0xff] 0.0
        %2281 = vst [vmem:[#allocation3 + $0x20] sm:$0xff] 0.0
        %2282 = vst [vmem:[#allocation3 + $0x28] sm:$0x3] 0.0
        %2283 = vst [vmem:[#allocation3 + $0x30] sm:$0xff] 0.0
        %2284 = vst [vmem:[#allocation3 + $0x38] sm:$0xff] 0.0
        %2285 = vst [vmem:[#allocation3 + $0x40] sm:$0x3] 0.0
        %2286 = vst [vmem:[#allocation3 + $0x48] sm:$0xff] 0.0
        %2287 = vst [vmem:[#allocation3 + $0x50] sm:$0xff] 0.0
        %2288 = vst [vmem:[#allocation3 + $0x58] sm:$0x3] 0.0
        %2289 = vst [vmem:[#allocation3 + $0x60] sm:$0xff] 0.0
        %2290 = vst [vmem:[#allocation3 + $0x68] sm:$0xff] 0.0
        %2291 = vst [vmem:[#allocation3 + $0x70] sm:$0x3] 0.0
        %2292 = vst [vmem:[#allocation3 + $0x78] sm:$0xff] 0.0
        %2293 = vst [vmem:[#allocation3 + $0x80] sm:$0xff] 0.0
        %2294 = vst [vmem:[#allocation3 + $0x88] sm:$0x3] 0.0
        %2295 = vst [vmem:[#allocation3 + $0x90] sm:$0xff] 0.0
        %2296 = vst [vmem:[#allocation3 + $0x98] sm:$0xff] 0.0
        %2297 = vst [vmem:[#allocation3 + $0xa0] sm:$0x3] 0.0
        %2298 = vst [vmem:[#allocation3 + $0xa8] sm:$0xff] 0.0
        %2299 = vst [vmem:[#allocation3 + $0xb0] sm:$0xff] 0.0
        %2300 = vst [vmem:[#allocation3 + $0xb8] sm:$0x3] 0.0
        %2301 = vst [vmem:[#allocation3 + $0xc0] sm:$0xff] 0.0
        %2302 = vst [vmem:[#allocation3 + $0xc8] sm:$0xff] 0.0
        %2303 = vst [vmem:[#allocation3 + $0xd0] sm:$0x3] 0.0
        %2304 = vst [vmem:[#allocation3 + $0xd8] sm:$0xff] 0.0
        %2305 = vst [vmem:[#allocation3 + $0xe0] sm:$0xff] 0.0
        %2306 = vst [vmem:[#allocation3 + $0xe8] sm:$0x3] 0.0
        %2307 = vst [vmem:[#allocation3 + $0xf0] sm:$0xff] 0.0
        %2308 = vst [vmem:[#allocation3 + $0xf8] sm:$0xff] 0.0
        %2309 = vst [vmem:[#allocation3 + $0x100] sm:$0x3] 0.0
        %2310 = vst [vmem:[#allocation3 + $0x108] sm:$0xff] 0.0
        %2311 = vst [vmem:[#allocation3 + $0x110] sm:$0xff] 0.0
        %2312 = vst [vmem:[#allocation3 + $0x118] sm:$0x3] 0.0
        %2313 = vst [vmem:[#allocation3 + $0x120] sm:$0xff] 0.0
        %2314 = vst [vmem:[#allocation3 + $0x128] sm:$0xff] 0.0
        %2315 = vst [vmem:[#allocation3 + $0x130] sm:$0x3] 0.0
        %2316 = vst [vmem:[#allocation3 + $0x138] sm:$0xff] 0.0
        %2317 = vst [vmem:[#allocation3 + $0x140] sm:$0xff] 0.0
        %2318 = vst [vmem:[#allocation3 + $0x148] sm:$0x3] 0.0
        %2319 = vst [vmem:[#allocation3 + $0x150] sm:$0xff] 0.0
        %2320 = vst [vmem:[#allocation3 + $0x158] sm:$0xff] 0.0
        %2321 = vst [vmem:[#allocation3 + $0x160] sm:$0x3] 0.0
        %2322 = vst [vmem:[#allocation3 + $0x168] sm:$0xff] 0.0
        %2323 = vst [vmem:[#allocation3 + $0x170] sm:$0xff] 0.0
        %2324 = vst [vmem:[#allocation3 + $0x178] sm:$0x3] 0.0
        %2325 = vst [vmem:[#allocation3 + $0x180] sm:$0xff] 0.0
        %2326 = vst [vmem:[#allocation3 + $0x188] sm:$0xff] 0.0
        %2327 = vst [vmem:[#allocation3 + $0x190] sm:$0x3] 0.0
        %2328 = vst [vmem:[#allocation3 + $0x198] sm:$0xff] 0.0
        %2329 = vst [vmem:[#allocation3 + $0x1a0] sm:$0xff] 0.0
        %2330 = vst [vmem:[#allocation3 + $0x1a8] sm:$0x3] 0.0
        %s2331 = scalar_lea.vmem [#allocation3], 24
        %2332 = vst [vmem:[%s2331 + $0x1] sm:$0xff] %v2245
        %2333 = vst [vmem:[%s2331 + $0x9] sm:$0xff] %v2246
        %2334 = vst [vmem:[%s2331 + $0x19] sm:$0xff] %v2247
        %2335 = vst [vmem:[%s2331 + $0x21] sm:$0xff] %v2248
        %2336 = vst [vmem:[%s2331 + $0x31] sm:$0xff] %v2249
        %2337 = vst [vmem:[%s2331 + $0x39] sm:$0xff] %v2250
        %2338 = vst [vmem:[%s2331 + $0x49] sm:$0xff] %v2251
        %2339 = vst [vmem:[%s2331 + $0x51] sm:$0xff] %v2252
        %2340 = vst [vmem:[%s2331 + $0x61] sm:$0xff] %v2253
        %2341 = vst [vmem:[%s2331 + $0x69] sm:$0xff] %v2254
        %2342 = vst [vmem:[%s2331 + $0x79] sm:$0xff] %v2255
        %2343 = vst [vmem:[%s2331 + $0x81] sm:$0xff] %v2256
        %2344 = vst [vmem:[%s2331 + $0x91] sm:$0xff] %v2257
        %2345 = vst [vmem:[%s2331 + $0x99] sm:$0xff] %v2258
        %2346 = vst [vmem:[%s2331 + $0xa9] sm:$0xff] %v2259
        %2347 = vst [vmem:[%s2331 + $0xb1] sm:$0xff] %v2260
        %2348 = vst [vmem:[%s2331 + $0xc1] sm:$0xff] %v2261
        %2349 = vst [vmem:[%s2331 + $0xc9] sm:$0xff] %v2262
        %2350 = vst [vmem:[%s2331 + $0xd9] sm:$0xff] %v2263
        %2351 = vst [vmem:[%s2331 + $0xe1] sm:$0xff] %v2264
        %2352 = vst [vmem:[%s2331 + $0xf1] sm:$0xff] %v2265
        %2353 = vst [vmem:[%s2331 + $0xf9] sm:$0xff] %v2266
        %2354 = vst [vmem:[%s2331 + $0x109] sm:$0xff] %v2267
        %2355 = vst [vmem:[%s2331 + $0x111] sm:$0xff] %v2268
        %2356 = vst [vmem:[%s2331 + $0x121] sm:$0xff] %v2269
        %2357 = vst [vmem:[%s2331 + $0x129] sm:$0xff] %v2270
        %2358 = vst [vmem:[%s2331 + $0x139] sm:$0xff] %v2271
        %2359 = vst [vmem:[%s2331 + $0x141] sm:$0xff] %v2272
        %2360 = vst [vmem:[%s2331 + $0x151] sm:$0xff] %v2273
        %2361 = vst [vmem:[%s2331 + $0x159] sm:$0xff] %v2274
        %2362 = vst [vmem:[%s2331 + $0x169] sm:$0xff] %v2275
        %2363 = vst [vmem:[%s2331 + $0x171] sm:$0xff] %v2276
        %v2364 = vld [vmem:[#allocation3] sm:$0xff]
        %v2365 = vld [vmem:[#allocation3 + $0x8] sm:$0xff]
        %v2366 = vld [vmem:[#allocation3 + $0x18] sm:$0xff]
        %v2367 = vld [vmem:[#allocation3 + $0x20] sm:$0xff]
        %v2368 = vld [vmem:[#allocation3 + $0x30] sm:$0xff]
        %v2369 = vld [vmem:[#allocation3 + $0x38] sm:$0xff]
        %v2370 = vld [vmem:[#allocation3 + $0x48] sm:$0xff]
        %v2371 = vld [vmem:[#allocation3 + $0x50] sm:$0xff]
        %v2372 = vld [vmem:[#allocation3 + $0x60] sm:$0xff]
        %v2373 = vld [vmem:[#allocation3 + $0x68] sm:$0xff]
        %v2374 = vld [vmem:[#allocation3 + $0x78] sm:$0xff]
        %v2375 = vld [vmem:[#allocation3 + $0x80] sm:$0xff]
        %v2376 = vld [vmem:[#allocation3 + $0x90] sm:$0xff]
        %v2377 = vld [vmem:[#allocation3 + $0x98] sm:$0xff]
        %v2378 = vld [vmem:[#allocation3 + $0xa8] sm:$0xff]
        %v2379 = vld [vmem:[#allocation3 + $0xb0] sm:$0xff]
        %v2380 = vld [vmem:[#allocation3 + $0xc0] sm:$0xff]
        %v2381 = vld [vmem:[#allocation3 + $0xc8] sm:$0xff]
        %v2382 = vld [vmem:[#allocation3 + $0xd8] sm:$0xff]
        %v2383 = vld [vmem:[#allocation3 + $0xe0] sm:$0xff]
        %v2384 = vld [vmem:[#allocation3 + $0xf0] sm:$0xff]
        %v2385 = vld [vmem:[#allocation3 + $0xf8] sm:$0xff]
        %v2386 = vld [vmem:[#allocation3 + $0x108] sm:$0xff]
        %v2387 = vld [vmem:[#allocation3 + $0x110] sm:$0xff]
        %v2388 = vld [vmem:[#allocation3 + $0x120] sm:$0xff]
        %v2389 = vld [vmem:[#allocation3 + $0x128] sm:$0xff]
        %v2390 = vld [vmem:[#allocation3 + $0x138] sm:$0xff]
        %v2391 = vld [vmem:[#allocation3 + $0x140] sm:$0xff]
        %v2392 = vld [vmem:[#allocation3 + $0x150] sm:$0xff]
        %v2393 = vld [vmem:[#allocation3 + $0x158] sm:$0xff]
        %v2394 = vld [vmem:[#allocation3 + $0x168] sm:$0xff]
        %v2395 = vld [vmem:[#allocation3 + $0x170] sm:$0xff]
        %v2396 = vld [vmem:[#allocation3 + $0x1] sm:$0xff]
        %v2397 = vld [vmem:[#allocation3 + $0x9] sm:$0xff]
        %v2398 = vld [vmem:[#allocation3 + $0x19] sm:$0xff]
        %v2399 = vld [vmem:[#allocation3 + $0x21] sm:$0xff]
        %v2400 = vld [vmem:[#allocation3 + $0x31] sm:$0xff]
        %v2401 = vld [vmem:[#allocation3 + $0x39] sm:$0xff]
        %v2402 = vld [vmem:[#allocation3 + $0x49] sm:$0xff]
        %v2403 = vld [vmem:[#allocation3 + $0x51] sm:$0xff]
        %v2404 = vld [vmem:[#allocation3 + $0x61] sm:$0xff]
        %v2405 = vld [vmem:[#allocation3 + $0x69] sm:$0xff]
        %v2406 = vld [vmem:[#allocation3 + $0x79] sm:$0xff]
        %v2407 = vld [vmem:[#allocation3 + $0x81] sm:$0xff]
        %v2408 = vld [vmem:[#allocation3 + $0x91] sm:$0xff]
        %v2409 = vld [vmem:[#allocation3 + $0x99] sm:$0xff]
        %v2410 = vld [vmem:[#allocation3 + $0xa9] sm:$0xff]
        %v2411 = vld [vmem:[#allocation3 + $0xb1] sm:$0xff]
        %v2412 = vld [vmem:[#allocation3 + $0xc1] sm:$0xff]
        %v2413 = vld [vmem:[#allocation3 + $0xc9] sm:$0xff]
        %v2414 = vld [vmem:[#allocation3 + $0xd9] sm:$0xff]
        %v2415 = vld [vmem:[#allocation3 + $0xe1] sm:$0xff]
        %v2416 = vld [vmem:[#allocation3 + $0xf1] sm:$0xff]
        %v2417 = vld [vmem:[#allocation3 + $0xf9] sm:$0xff]
        %v2418 = vld [vmem:[#allocation3 + $0x109] sm:$0xff]
        %v2419 = vld [vmem:[#allocation3 + $0x111] sm:$0xff]
        %v2420 = vld [vmem:[#allocation3 + $0x121] sm:$0xff]
        %v2421 = vld [vmem:[#allocation3 + $0x129] sm:$0xff]
        %v2422 = vld [vmem:[#allocation3 + $0x139] sm:$0xff]
        %v2423 = vld [vmem:[#allocation3 + $0x141] sm:$0xff]
        %v2424 = vld [vmem:[#allocation3 + $0x151] sm:$0xff]
        %v2425 = vld [vmem:[#allocation3 + $0x159] sm:$0xff]
        %v2426 = vld [vmem:[#allocation3 + $0x169] sm:$0xff]
        %v2427 = vld [vmem:[#allocation3 + $0x171] sm:$0xff]
        %v2428 = vld [vmem:[#allocation3 + $0x2] sm:$0xff]
        %v2429 = vld [vmem:[#allocation3 + $0xa] sm:$0xff]
        %v2430 = vld [vmem:[#allocation3 + $0x1a] sm:$0xff]
        %v2431 = vld [vmem:[#allocation3 + $0x22] sm:$0xff]
        %v2432 = vld [vmem:[#allocation3 + $0x32] sm:$0xff]
        %v2433 = vld [vmem:[#allocation3 + $0x3a] sm:$0xff]
        %v2434 = vld [vmem:[#allocation3 + $0x4a] sm:$0xff]
        %v2435 = vld [vmem:[#allocation3 + $0x52] sm:$0xff]
        %v2436 = vld [vmem:[#allocation3 + $0x62] sm:$0xff]
        %v2437 = vld [vmem:[#allocation3 + $0x6a] sm:$0xff]
        %v2438 = vld [vmem:[#allocation3 + $0x7a] sm:$0xff]
        %v2439 = vld [vmem:[#allocation3 + $0x82] sm:$0xff]
        %v2440 = vld [vmem:[#allocation3 + $0x92] sm:$0xff]
        %v2441 = vld [vmem:[#allocation3 + $0x9a] sm:$0xff]
        %v2442 = vld [vmem:[#allocation3 + $0xaa] sm:$0xff]
        %v2443 = vld [vmem:[#allocation3 + $0xb2] sm:$0xff]
        %v2444 = vld [vmem:[#allocation3 + $0xc2] sm:$0xff]
        %v2445 = vld [vmem:[#allocation3 + $0xca] sm:$0xff]
        %v2446 = vld [vmem:[#allocation3 + $0xda] sm:$0xff]
        %v2447 = vld [vmem:[#allocation3 + $0xe2] sm:$0xff]
        %v2448 = vld [vmem:[#allocation3 + $0xf2] sm:$0xff]
        %v2449 = vld [vmem:[#allocation3 + $0xfa] sm:$0xff]
        %v2450 = vld [vmem:[#allocation3 + $0x10a] sm:$0xff]
        %v2451 = vld [vmem:[#allocation3 + $0x112] sm:$0xff]
        %v2452 = vld [vmem:[#allocation3 + $0x122] sm:$0xff]
        %v2453 = vld [vmem:[#allocation3 + $0x12a] sm:$0xff]
        %v2454 = vld [vmem:[#allocation3 + $0x13a] sm:$0xff]
        %v2455 = vld [vmem:[#allocation3 + $0x142] sm:$0xff]
        %v2456 = vld [vmem:[#allocation3 + $0x152] sm:$0xff]
        %v2457 = vld [vmem:[#allocation3 + $0x15a] sm:$0xff]
        %v2458 = vld [vmem:[#allocation3 + $0x16a] sm:$0xff]
        %v2459 = vld [vmem:[#allocation3 + $0x172] sm:$0xff]
        %v2460 = vld [vmem:[%s2331] sm:$0xff]
        %v2461 = vld [vmem:[%s2331 + $0x8] sm:$0xff]
        %v2462 = vld [vmem:[%s2331 + $0x18] sm:$0xff]
        %v2463 = vld [vmem:[%s2331 + $0x20] sm:$0xff]
        %v2464 = vld [vmem:[%s2331 + $0x30] sm:$0xff]
        %v2465 = vld [vmem:[%s2331 + $0x38] sm:$0xff]
        %v2466 = vld [vmem:[%s2331 + $0x48] sm:$0xff]
        %v2467 = vld [vmem:[%s2331 + $0x50] sm:$0xff]
        %v2468 = vld [vmem:[%s2331 + $0x60] sm:$0xff]
        %v2469 = vld [vmem:[%s2331 + $0x68] sm:$0xff]
        %v2470 = vld [vmem:[%s2331 + $0x78] sm:$0xff]
        %v2471 = vld [vmem:[%s2331 + $0x80] sm:$0xff]
        %v2472 = vld [vmem:[%s2331 + $0x90] sm:$0xff]
        %v2473 = vld [vmem:[%s2331 + $0x98] sm:$0xff]
        %v2474 = vld [vmem:[%s2331 + $0xa8] sm:$0xff]
        %v2475 = vld [vmem:[%s2331 + $0xb0] sm:$0xff]
        %v2476 = vld [vmem:[%s2331 + $0xc0] sm:$0xff]
        %v2477 = vld [vmem:[%s2331 + $0xc8] sm:$0xff]
        %v2478 = vld [vmem:[%s2331 + $0xd8] sm:$0xff]
        %v2479 = vld [vmem:[%s2331 + $0xe0] sm:$0xff]
        %v2480 = vld [vmem:[%s2331 + $0xf0] sm:$0xff]
        %v2481 = vld [vmem:[%s2331 + $0xf8] sm:$0xff]
        %v2482 = vld [vmem:[%s2331 + $0x108] sm:$0xff]
        %v2483 = vld [vmem:[%s2331 + $0x110] sm:$0xff]
        %v2484 = vld [vmem:[%s2331 + $0x120] sm:$0xff]
        %v2485 = vld [vmem:[%s2331 + $0x128] sm:$0xff]
        %v2486 = vld [vmem:[%s2331 + $0x138] sm:$0xff]
        %v2487 = vld [vmem:[%s2331 + $0x140] sm:$0xff]
        %v2488 = vld [vmem:[%s2331 + $0x150] sm:$0xff]
        %v2489 = vld [vmem:[%s2331 + $0x158] sm:$0xff]
        %v2490 = vld [vmem:[%s2331 + $0x168] sm:$0xff]
        %v2491 = vld [vmem:[%s2331 + $0x170] sm:$0xff]
        %v2492 = vld [vmem:[%s2331 + $0x1] sm:$0xff]
        %v2493 = vld [vmem:[%s2331 + $0x9] sm:$0xff]
        %v2494 = vld [vmem:[%s2331 + $0x19] sm:$0xff]
        %v2495 = vld [vmem:[%s2331 + $0x21] sm:$0xff]
        %v2496 = vld [vmem:[%s2331 + $0x31] sm:$0xff]
        %v2497 = vld [vmem:[%s2331 + $0x39] sm:$0xff]
        %v2498 = vld [vmem:[%s2331 + $0x49] sm:$0xff]
        %v2499 = vld [vmem:[%s2331 + $0x51] sm:$0xff]
        %v2500 = vld [vmem:[%s2331 + $0x61] sm:$0xff]
        %v2501 = vld [vmem:[%s2331 + $0x69] sm:$0xff]
        %v2502 = vld [vmem:[%s2331 + $0x79] sm:$0xff]
        %v2503 = vld [vmem:[%s2331 + $0x81] sm:$0xff]
        %v2504 = vld [vmem:[%s2331 + $0x91] sm:$0xff]
        %v2505 = vld [vmem:[%s2331 + $0x99] sm:$0xff]
        %v2506 = vld [vmem:[%s2331 + $0xa9] sm:$0xff]
        %v2507 = vld [vmem:[%s2331 + $0xb1] sm:$0xff]
        %v2508 = vld [vmem:[%s2331 + $0xc1] sm:$0xff]
        %v2509 = vld [vmem:[%s2331 + $0xc9] sm:$0xff]
        %v2510 = vld [vmem:[%s2331 + $0xd9] sm:$0xff]
        %v2511 = vld [vmem:[%s2331 + $0xe1] sm:$0xff]
        %v2512 = vld [vmem:[%s2331 + $0xf1] sm:$0xff]
        %v2513 = vld [vmem:[%s2331 + $0xf9] sm:$0xff]
        %v2514 = vld [vmem:[%s2331 + $0x109] sm:$0xff]
        %v2515 = vld [vmem:[%s2331 + $0x111] sm:$0xff]
        %v2516 = vld [vmem:[%s2331 + $0x121] sm:$0xff]
        %v2517 = vld [vmem:[%s2331 + $0x129] sm:$0xff]
        %v2518 = vld [vmem:[%s2331 + $0x139] sm:$0xff]
        %v2519 = vld [vmem:[%s2331 + $0x141] sm:$0xff]
        %v2520 = vld [vmem:[%s2331 + $0x151] sm:$0xff]
        %v2521 = vld [vmem:[%s2331 + $0x159] sm:$0xff]
        %v2522 = vld [vmem:[%s2331 + $0x169] sm:$0xff]
        %v2523 = vld [vmem:[%s2331 + $0x171] sm:$0xff]
        %v2524 = vld [vmem:[%s2331 + $0x2] sm:$0xff]
        %v2525 = vld [vmem:[%s2331 + $0xa] sm:$0xff]
        %v2526 = vld [vmem:[%s2331 + $0x1a] sm:$0xff]
        %v2527 = vld [vmem:[%s2331 + $0x22] sm:$0xff]
        %v2528 = vld [vmem:[%s2331 + $0x32] sm:$0xff]
        %v2529 = vld [vmem:[%s2331 + $0x3a] sm:$0xff]
        %v2530 = vld [vmem:[%s2331 + $0x4a] sm:$0xff]
        %v2531 = vld [vmem:[%s2331 + $0x52] sm:$0xff]
        %v2532 = vld [vmem:[%s2331 + $0x62] sm:$0xff]
        %v2533 = vld [vmem:[%s2331 + $0x6a] sm:$0xff]
        %v2534 = vld [vmem:[%s2331 + $0x7a] sm:$0xff]
        %v2535 = vld [vmem:[%s2331 + $0x82] sm:$0xff]
        %v2536 = vld [vmem:[%s2331 + $0x92] sm:$0xff]
        %v2537 = vld [vmem:[%s2331 + $0x9a] sm:$0xff]
        %v2538 = vld [vmem:[%s2331 + $0xaa] sm:$0xff]
        %v2539 = vld [vmem:[%s2331 + $0xb2] sm:$0xff]
        %v2540 = vld [vmem:[%s2331 + $0xc2] sm:$0xff]
        %v2541 = vld [vmem:[%s2331 + $0xca] sm:$0xff]
        %v2542 = vld [vmem:[%s2331 + $0xda] sm:$0xff]
        %v2543 = vld [vmem:[%s2331 + $0xe2] sm:$0xff]
        %v2544 = vld [vmem:[%s2331 + $0xf2] sm:$0xff]
        %v2545 = vld [vmem:[%s2331 + $0xfa] sm:$0xff]
        %v2546 = vld [vmem:[%s2331 + $0x10a] sm:$0xff]
        %v2547 = vld [vmem:[%s2331 + $0x112] sm:$0xff]
        %v2548 = vld [vmem:[%s2331 + $0x122] sm:$0xff]
        %v2549 = vld [vmem:[%s2331 + $0x12a] sm:$0xff]
        %v2550 = vld [vmem:[%s2331 + $0x13a] sm:$0xff]
        %v2551 = vld [vmem:[%s2331 + $0x142] sm:$0xff]
        %v2552 = vld [vmem:[%s2331 + $0x152] sm:$0xff]
        %v2553 = vld [vmem:[%s2331 + $0x15a] sm:$0xff]
        %v2554 = vld [vmem:[%s2331 + $0x16a] sm:$0xff]
        %v2555 = vld [vmem:[%s2331 + $0x172] sm:$0xff]
        %s2556 = scalar_lea.vmem [#allocation3], 48
        %v2557 = vld [vmem:[%s2556] sm:$0xff]
        %v2558 = vld [vmem:[%s2556 + $0x8] sm:$0xff]
        %v2559 = vld [vmem:[%s2556 + $0x18] sm:$0xff]
        %v2560 = vld [vmem:[%s2556 + $0x20] sm:$0xff]
        %v2561 = vld [vmem:[%s2556 + $0x30] sm:$0xff]
        %v2562 = vld [vmem:[%s2556 + $0x38] sm:$0xff]
        %v2563 = vld [vmem:[%s2556 + $0x48] sm:$0xff]
        %v2564 = vld [vmem:[%s2556 + $0x50] sm:$0xff]
        %v2565 = vld [vmem:[%s2556 + $0x60] sm:$0xff]
        %v2566 = vld [vmem:[%s2556 + $0x68] sm:$0xff]
        %v2567 = vld [vmem:[%s2556 + $0x78] sm:$0xff]
        %v2568 = vld [vmem:[%s2556 + $0x80] sm:$0xff]
        %v2569 = vld [vmem:[%s2556 + $0x90] sm:$0xff]
        %v2570 = vld [vmem:[%s2556 + $0x98] sm:$0xff]
        %v2571 = vld [vmem:[%s2556 + $0xa8] sm:$0xff]
        %v2572 = vld [vmem:[%s2556 + $0xb0] sm:$0xff]
        %v2573 = vld [vmem:[%s2556 + $0xc0] sm:$0xff]
        %v2574 = vld [vmem:[%s2556 + $0xc8] sm:$0xff]
        %v2575 = vld [vmem:[%s2556 + $0xd8] sm:$0xff]
        %v2576 = vld [vmem:[%s2556 + $0xe0] sm:$0xff]
        %v2577 = vld [vmem:[%s2556 + $0xf0] sm:$0xff]
        %v2578 = vld [vmem:[%s2556 + $0xf8] sm:$0xff]
        %v2579 = vld [vmem:[%s2556 + $0x108] sm:$0xff]
        %v2580 = vld [vmem:[%s2556 + $0x110] sm:$0xff]
        %v2581 = vld [vmem:[%s2556 + $0x120] sm:$0xff]
        %v2582 = vld [vmem:[%s2556 + $0x128] sm:$0xff]
        %v2583 = vld [vmem:[%s2556 + $0x138] sm:$0xff]
        %v2584 = vld [vmem:[%s2556 + $0x140] sm:$0xff]
        %v2585 = vld [vmem:[%s2556 + $0x150] sm:$0xff]
        %v2586 = vld [vmem:[%s2556 + $0x158] sm:$0xff]
        %v2587 = vld [vmem:[%s2556 + $0x168] sm:$0xff]
        %v2588 = vld [vmem:[%s2556 + $0x170] sm:$0xff]
        %v2589 = vld [vmem:[%s2556 + $0x1] sm:$0xff]
        %v2590 = vld [vmem:[%s2556 + $0x9] sm:$0xff]
        %v2591 = vld [vmem:[%s2556 + $0x19] sm:$0xff]
        %v2592 = vld [vmem:[%s2556 + $0x21] sm:$0xff]
        %v2593 = vld [vmem:[%s2556 + $0x31] sm:$0xff]
        %v2594 = vld [vmem:[%s2556 + $0x39] sm:$0xff]
        %v2595 = vld [vmem:[%s2556 + $0x49] sm:$0xff]
        %v2596 = vld [vmem:[%s2556 + $0x51] sm:$0xff]
        %v2597 = vld [vmem:[%s2556 + $0x61] sm:$0xff]
        %v2598 = vld [vmem:[%s2556 + $0x69] sm:$0xff]
        %v2599 = vld [vmem:[%s2556 + $0x79] sm:$0xff]
        %v2600 = vld [vmem:[%s2556 + $0x81] sm:$0xff]
        %v2601 = vld [vmem:[%s2556 + $0x91] sm:$0xff]
        %v2602 = vld [vmem:[%s2556 + $0x99] sm:$0xff]
        %v2603 = vld [vmem:[%s2556 + $0xa9] sm:$0xff]
        %v2604 = vld [vmem:[%s2556 + $0xb1] sm:$0xff]
        %v2605 = vld [vmem:[%s2556 + $0xc1] sm:$0xff]
        %v2606 = vld [vmem:[%s2556 + $0xc9] sm:$0xff]
        %v2607 = vld [vmem:[%s2556 + $0xd9] sm:$0xff]
        %v2608 = vld [vmem:[%s2556 + $0xe1] sm:$0xff]
        %v2609 = vld [vmem:[%s2556 + $0xf1] sm:$0xff]
        %v2610 = vld [vmem:[%s2556 + $0xf9] sm:$0xff]
        %v2611 = vld [vmem:[%s2556 + $0x109] sm:$0xff]
        %v2612 = vld [vmem:[%s2556 + $0x111] sm:$0xff]
        %v2613 = vld [vmem:[%s2556 + $0x121] sm:$0xff]
        %v2614 = vld [vmem:[%s2556 + $0x129] sm:$0xff]
        %v2615 = vld [vmem:[%s2556 + $0x139] sm:$0xff]
        %v2616 = vld [vmem:[%s2556 + $0x141] sm:$0xff]
        %v2617 = vld [vmem:[%s2556 + $0x151] sm:$0xff]
        %v2618 = vld [vmem:[%s2556 + $0x159] sm:$0xff]
        %v2619 = vld [vmem:[%s2556 + $0x169] sm:$0xff]
        %v2620 = vld [vmem:[%s2556 + $0x171] sm:$0xff]
        %v2621 = vld [vmem:[%s2556 + $0x2] sm:$0xff]
        %v2622 = vld [vmem:[%s2556 + $0xa] sm:$0xff]
        %v2623 = vld [vmem:[%s2556 + $0x1a] sm:$0xff]
        %v2624 = vld [vmem:[%s2556 + $0x22] sm:$0xff]
        %v2625 = vld [vmem:[%s2556 + $0x32] sm:$0xff]
        %v2626 = vld [vmem:[%s2556 + $0x3a] sm:$0xff]
        %v2627 = vld [vmem:[%s2556 + $0x4a] sm:$0xff]
        %v2628 = vld [vmem:[%s2556 + $0x52] sm:$0xff]
        %v2629 = vld [vmem:[%s2556 + $0x62] sm:$0xff]
        %v2630 = vld [vmem:[%s2556 + $0x6a] sm:$0xff]
        %v2631 = vld [vmem:[%s2556 + $0x7a] sm:$0xff]
        %v2632 = vld [vmem:[%s2556 + $0x82] sm:$0xff]
        %v2633 = vld [vmem:[%s2556 + $0x92] sm:$0xff]
        %v2634 = vld [vmem:[%s2556 + $0x9a] sm:$0xff]
        %v2635 = vld [vmem:[%s2556 + $0xaa] sm:$0xff]
        %v2636 = vld [vmem:[%s2556 + $0xb2] sm:$0xff]
        %v2637 = vld [vmem:[%s2556 + $0xc2] sm:$0xff]
        %v2638 = vld [vmem:[%s2556 + $0xca] sm:$0xff]
        %v2639 = vld [vmem:[%s2556 + $0xda] sm:$0xff]
        %v2640 = vld [vmem:[%s2556 + $0xe2] sm:$0xff]
        %v2641 = vld [vmem:[%s2556 + $0xf2] sm:$0xff]
        %v2642 = vld [vmem:[%s2556 + $0xfa] sm:$0xff]
        %v2643 = vld [vmem:[%s2556 + $0x10a] sm:$0xff]
        %v2644 = vld [vmem:[%s2556 + $0x112] sm:$0xff]
        %v2645 = vld [vmem:[%s2556 + $0x122] sm:$0xff]
        %v2646 = vld [vmem:[%s2556 + $0x12a] sm:$0xff]
        %v2647 = vld [vmem:[%s2556 + $0x13a] sm:$0xff]
        %v2648 = vld [vmem:[%s2556 + $0x142] sm:$0xff]
        %v2649 = vld [vmem:[%s2556 + $0x152] sm:$0xff]
        %v2650 = vld [vmem:[%s2556 + $0x15a] sm:$0xff]
        %v2651 = vld [vmem:[%s2556 + $0x16a] sm:$0xff]
        %v2652 = vld [vmem:[%s2556 + $0x172] sm:$0xff]
        %v2653 = vpack.c.bf16 %v2365, %v2364
        %v2654 = vpack.c.bf16 %v2397, %v2396
        %v2655 = vpack.c.bf16 %v2429, %v2428
        %v2656 = vpack.c.bf16 %v2461, %v2460
        %v2657 = vpack.c.bf16 %v2493, %v2492
        %v2658 = vpack.c.bf16 %v2525, %v2524
        %v2659 = vpack.c.bf16 %v2558, %v2557
        %v2660 = vpack.c.bf16 %v2590, %v2589
        %v2661 = vpack.c.bf16 %v2622, %v2621
        %v2662 = vpack.c.bf16 %v2367, %v2366
        %v2663 = vpack.c.bf16 %v2399, %v2398
        %v2664 = vpack.c.bf16 %v2431, %v2430
        %v2665 = vpack.c.bf16 %v2463, %v2462
        %v2666 = vpack.c.bf16 %v2495, %v2494
        %v2667 = vpack.c.bf16 %v2527, %v2526
        %v2668 = vpack.c.bf16 %v2560, %v2559
        %v2669 = vpack.c.bf16 %v2592, %v2591
        %v2670 = vpack.c.bf16 %v2624, %v2623
        %v2671 = vpack.c.bf16 %v2369, %v2368
        %v2672 = vpack.c.bf16 %v2401, %v2400
        %v2673 = vpack.c.bf16 %v2433, %v2432
        %v2674 = vpack.c.bf16 %v2465, %v2464
        %v2675 = vpack.c.bf16 %v2497, %v2496
        %v2676 = vpack.c.bf16 %v2529, %v2528
        %v2677 = vpack.c.bf16 %v2562, %v2561
        %v2678 = vpack.c.bf16 %v2594, %v2593
        %v2679 = vpack.c.bf16 %v2626, %v2625
        %v2680 = vpack.c.bf16 %v2371, %v2370
        %v2681 = vpack.c.bf16 %v2403, %v2402
        %v2682 = vpack.c.bf16 %v2435, %v2434
        %v2683 = vpack.c.bf16 %v2467, %v2466
        %v2684 = vpack.c.bf16 %v2499, %v2498
        %v2685 = vpack.c.bf16 %v2531, %v2530
        %v2686 = vpack.c.bf16 %v2564, %v2563
        %v2687 = vpack.c.bf16 %v2596, %v2595
        %v2688 = vpack.c.bf16 %v2628, %v2627
        %v2689 = vpack.c.bf16 %v2373, %v2372
        %v2690 = vpack.c.bf16 %v2405, %v2404
        %v2691 = vpack.c.bf16 %v2437, %v2436
        %v2692 = vpack.c.bf16 %v2469, %v2468
        %v2693 = vpack.c.bf16 %v2501, %v2500
        %v2694 = vpack.c.bf16 %v2533, %v2532
        %v2695 = vpack.c.bf16 %v2566, %v2565
        %v2696 = vpack.c.bf16 %v2598, %v2597
        %v2697 = vpack.c.bf16 %v2630, %v2629
        %v2698 = vpack.c.bf16 %v2375, %v2374
        %v2699 = vpack.c.bf16 %v2407, %v2406
        %v2700 = vpack.c.bf16 %v2439, %v2438
        %v2701 = vpack.c.bf16 %v2471, %v2470
        %v2702 = vpack.c.bf16 %v2503, %v2502
        %v2703 = vpack.c.bf16 %v2535, %v2534
        %v2704 = vpack.c.bf16 %v2568, %v2567
        %v2705 = vpack.c.bf16 %v2600, %v2599
        %v2706 = vpack.c.bf16 %v2632, %v2631
        %v2707 = vpack.c.bf16 %v2377, %v2376
        %v2708 = vpack.c.bf16 %v2409, %v2408
        %v2709 = vpack.c.bf16 %v2441, %v2440
        %v2710 = vpack.c.bf16 %v2473, %v2472
        %v2711 = vpack.c.bf16 %v2505, %v2504
        %v2712 = vpack.c.bf16 %v2537, %v2536
        %v2713 = vpack.c.bf16 %v2570, %v2569
        %v2714 = vpack.c.bf16 %v2602, %v2601
        %v2715 = vpack.c.bf16 %v2634, %v2633
        %v2716 = vpack.c.bf16 %v2379, %v2378
        %v2717 = vpack.c.bf16 %v2411, %v2410
        %v2718 = vpack.c.bf16 %v2443, %v2442
        %v2719 = vpack.c.bf16 %v2475, %v2474
        %v2720 = vpack.c.bf16 %v2507, %v2506
        %v2721 = vpack.c.bf16 %v2539, %v2538
        %v2722 = vpack.c.bf16 %v2572, %v2571
        %v2723 = vpack.c.bf16 %v2604, %v2603
        %v2724 = vpack.c.bf16 %v2636, %v2635
        %v2725 = vpack.c.bf16 %v2381, %v2380
        %v2726 = vpack.c.bf16 %v2413, %v2412
        %v2727 = vpack.c.bf16 %v2445, %v2444
        %v2728 = vpack.c.bf16 %v2477, %v2476
        %v2729 = vpack.c.bf16 %v2509, %v2508
        %v2730 = vpack.c.bf16 %v2541, %v2540
        %v2731 = vpack.c.bf16 %v2574, %v2573
        %v2732 = vpack.c.bf16 %v2606, %v2605
        %v2733 = vpack.c.bf16 %v2638, %v2637
        %v2734 = vpack.c.bf16 %v2383, %v2382
        %v2735 = vpack.c.bf16 %v2415, %v2414
        %v2736 = vpack.c.bf16 %v2447, %v2446
        %v2737 = vpack.c.bf16 %v2479, %v2478
        %v2738 = vpack.c.bf16 %v2511, %v2510
        %v2739 = vpack.c.bf16 %v2543, %v2542
        %v2740 = vpack.c.bf16 %v2576, %v2575
        %v2741 = vpack.c.bf16 %v2608, %v2607
        %v2742 = vpack.c.bf16 %v2640, %v2639
        %v2743 = vpack.c.bf16 %v2385, %v2384
        %v2744 = vpack.c.bf16 %v2417, %v2416
        %v2745 = vpack.c.bf16 %v2449, %v2448
        %v2746 = vpack.c.bf16 %v2481, %v2480
        %v2747 = vpack.c.bf16 %v2513, %v2512
        %v2748 = vpack.c.bf16 %v2545, %v2544
        %v2749 = vpack.c.bf16 %v2578, %v2577
        %v2750 = vpack.c.bf16 %v2610, %v2609
        %v2751 = vpack.c.bf16 %v2642, %v2641
        %v2752 = vpack.c.bf16 %v2387, %v2386
        %v2753 = vpack.c.bf16 %v2419, %v2418
        %v2754 = vpack.c.bf16 %v2451, %v2450
        %v2755 = vpack.c.bf16 %v2483, %v2482
        %v2756 = vpack.c.bf16 %v2515, %v2514
        %v2757 = vpack.c.bf16 %v2547, %v2546
        %v2758 = vpack.c.bf16 %v2580, %v2579
        %v2759 = vpack.c.bf16 %v2612, %v2611
        %v2760 = vpack.c.bf16 %v2644, %v2643
        %v2761 = vpack.c.bf16 %v2389, %v2388
        %v2762 = vpack.c.bf16 %v2421, %v2420
        %v2763 = vpack.c.bf16 %v2453, %v2452
        %v2764 = vpack.c.bf16 %v2485, %v2484
        %v2765 = vpack.c.bf16 %v2517, %v2516
        %v2766 = vpack.c.bf16 %v2549, %v2548
        %v2767 = vpack.c.bf16 %v2582, %v2581
        %v2768 = vpack.c.bf16 %v2614, %v2613
        %v2769 = vpack.c.bf16 %v2646, %v2645
        %v2770 = vpack.c.bf16 %v2391, %v2390
        %v2771 = vpack.c.bf16 %v2423, %v2422
        %v2772 = vpack.c.bf16 %v2455, %v2454
        %v2773 = vpack.c.bf16 %v2487, %v2486
        %v2774 = vpack.c.bf16 %v2519, %v2518
        %v2775 = vpack.c.bf16 %v2551, %v2550
        %v2776 = vpack.c.bf16 %v2584, %v2583
        %v2777 = vpack.c.bf16 %v2616, %v2615
        %v2778 = vpack.c.bf16 %v2648, %v2647
        %v2779 = vpack.c.bf16 %v2393, %v2392
        %v2780 = vpack.c.bf16 %v2425, %v2424
        %v2781 = vpack.c.bf16 %v2457, %v2456
        %v2782 = vpack.c.bf16 %v2489, %v2488
        %v2783 = vpack.c.bf16 %v2521, %v2520
        %v2784 = vpack.c.bf16 %v2553, %v2552
        %v2785 = vpack.c.bf16 %v2586, %v2585
        %v2786 = vpack.c.bf16 %v2618, %v2617
        %v2787 = vpack.c.bf16 %v2650, %v2649
        %v2788 = vpack.c.bf16 %v2395, %v2394
        %v2789 = vpack.c.bf16 %v2427, %v2426
        %v2790 = vpack.c.bf16 %v2459, %v2458
        %v2791 = vpack.c.bf16 %v2491, %v2490
        %v2792 = vpack.c.bf16 %v2523, %v2522
        %v2793 = vpack.c.bf16 %v2555, %v2554
        %v2794 = vpack.c.bf16 %v2588, %v2587
        %v2795 = vpack.c.bf16 %v2620, %v2619
        %v2796 = vpack.c.bf16 %v2652, %v2651
        %v2797 = vld [vmem:[#allocation9] sm:$0xf]
        %v2798 = vld [vmem:[#allocation9 + $0x4] sm:$0xf]
        %v2799 = vld [vmem:[#allocation9 + $0x8] sm:$0xf]
        %v2800 = vld [vmem:[#allocation9 + $0xc] sm:$0xf]
        %v2801 = vld [vmem:[#allocation9 + $0x10] sm:$0xf]
        %v2802 = vld [vmem:[#allocation9 + $0x14] sm:$0xf]
        %v2803 = vld [vmem:[#allocation9 + $0x18] sm:$0xf]
        %v2804 = vld [vmem:[#allocation9 + $0x1c] sm:$0xf]
        %v2805 = vld [vmem:[#allocation9 + $0x20] sm:$0xf]
        %v2806 = vld [vmem:[#allocation9 + $0x24] sm:$0xf]
        %v2807 = vld [vmem:[#allocation9 + $0x28] sm:$0xf]
        %v2808 = vld [vmem:[#allocation9 + $0x2c] sm:$0xf]
        %v2809 = vld [vmem:[#allocation9 + $0x30] sm:$0xf]
        %v2810 = vld [vmem:[#allocation9 + $0x34] sm:$0xf]
        %v2811 = vld [vmem:[#allocation9 + $0x38] sm:$0xf]
        %v2812 = vld [vmem:[#allocation9 + $0x3c] sm:$0xf]
        %v2813 = vld [vmem:[#allocation9 + $0x40] sm:$0xf]
        %v2814 = vld [vmem:[#allocation9 + $0x44] sm:$0xf]
        %v2815 = vld [vmem:[#allocation9 + $0x48] sm:$0xf]
        %v2816 = vld [vmem:[#allocation9 + $0x4c] sm:$0xf]
        %v2817 = vld [vmem:[#allocation9 + $0x50] sm:$0xf]
        %v2818 = vld [vmem:[#allocation9 + $0x54] sm:$0xf]
        %v2819 = vld [vmem:[#allocation9 + $0x58] sm:$0xf]
        %v2820 = vld [vmem:[#allocation9 + $0x5c] sm:$0xf]
        %v2821 = vld [vmem:[#allocation9 + $0x60] sm:$0xf]
        %v2822 = vld [vmem:[#allocation9 + $0x64] sm:$0xf]
        %v2823 = vld [vmem:[#allocation9 + $0x68] sm:$0xf]
        %v2824 = vld [vmem:[#allocation9 + $0x6c] sm:$0xf]
        %v2825 = vld [vmem:[#allocation9 + $0x70] sm:$0xf]
        %v2826 = vld [vmem:[#allocation9 + $0x74] sm:$0xf]
        %v2827 = vld [vmem:[#allocation9 + $0x78] sm:$0xf]
        %v2828 = vld [vmem:[#allocation9 + $0x7c] sm:$0xf]
        %v2829 = vld [vmem:[#allocation9 + $0x80] sm:$0xf]
        %v2830 = vld [vmem:[#allocation9 + $0x84] sm:$0xf]
        %v2831 = vld [vmem:[#allocation9 + $0x88] sm:$0xf]
        %v2832 = vld [vmem:[#allocation9 + $0x8c] sm:$0xf]
        %v2833 = vld [vmem:[#allocation9 + $0x90] sm:$0xf]
        %v2834 = vld [vmem:[#allocation9 + $0x94] sm:$0xf]
        %v2835 = vld [vmem:[#allocation9 + $0x98] sm:$0xf]
        %v2836 = vld [vmem:[#allocation9 + $0x9c] sm:$0xf]
        %v2837 = vld [vmem:[#allocation9 + $0xa0] sm:$0xf]
        %v2838 = vld [vmem:[#allocation9 + $0xa4] sm:$0xf]
        %v2839 = vld [vmem:[#allocation9 + $0xa8] sm:$0xf]
        %v2840 = vld [vmem:[#allocation9 + $0xac] sm:$0xf]
        %v2841 = vld [vmem:[#allocation9 + $0xb0] sm:$0xf]
        %v2842 = vld [vmem:[#allocation9 + $0xb4] sm:$0xf]
        %v2843 = vld [vmem:[#allocation9 + $0xb8] sm:$0xf]
        %v2844 = vld [vmem:[#allocation9 + $0xbc] sm:$0xf]
        %v2845 = vld [vmem:[#allocation9 + $0xc0] sm:$0xf]
        %v2846 = vld [vmem:[#allocation9 + $0xc4] sm:$0xf]
        %v2847 = vld [vmem:[#allocation9 + $0xc8] sm:$0xf]
        %v2848 = vld [vmem:[#allocation9 + $0xcc] sm:$0xf]
        %v2849 = vld [vmem:[#allocation9 + $0xd0] sm:$0xf]
        %v2850 = vld [vmem:[#allocation9 + $0xd4] sm:$0xf]
        %v2851 = vld [vmem:[#allocation9 + $0xd8] sm:$0xf]
        %v2852 = vld [vmem:[#allocation9 + $0xdc] sm:$0xf]
        %v2853 = vld [vmem:[#allocation9 + $0xe0] sm:$0xf]
        %v2854 = vld [vmem:[#allocation9 + $0xe4] sm:$0xf]
        %v2855 = vld [vmem:[#allocation9 + $0xe8] sm:$0xf]
        %v2856 = vld [vmem:[#allocation9 + $0xec] sm:$0xf]
        %v2857 = vld [vmem:[#allocation9 + $0xf0] sm:$0xf]
        %v2858 = vld [vmem:[#allocation9 + $0xf4] sm:$0xf]
        %v2859 = vld [vmem:[#allocation9 + $0xf8] sm:$0xf]
        %v2860 = vld [vmem:[#allocation9 + $0xfc] sm:$0xf]
        %v2861 = vld [vmem:[#allocation9 + $0x100] sm:$0xf]
        %v2862 = vld [vmem:[#allocation9 + $0x104] sm:$0xf]
        %v2863 = vld [vmem:[#allocation9 + $0x108] sm:$0xf]
        %v2864 = vld [vmem:[#allocation9 + $0x10c] sm:$0xf]
        %v2865 = vld [vmem:[#allocation9 + $0x110] sm:$0xf]
        %v2866 = vld [vmem:[#allocation9 + $0x114] sm:$0xf]
        %v2867 = vld [vmem:[#allocation9 + $0x118] sm:$0xf]
        %v2868 = vld [vmem:[#allocation9 + $0x11c] sm:$0xf]
        %v2869 = vld [vmem:[#allocation9 + $0x120] sm:$0xf]
        %v2870 = vld [vmem:[#allocation9 + $0x124] sm:$0xf]
        %v2871 = vld [vmem:[#allocation9 + $0x128] sm:$0xf]
        %v2872 = vld [vmem:[#allocation9 + $0x12c] sm:$0xf]
        %v2873 = vld [vmem:[#allocation9 + $0x130] sm:$0xf]
        %v2874 = vld [vmem:[#allocation9 + $0x134] sm:$0xf]
        %v2875 = vld [vmem:[#allocation9 + $0x138] sm:$0xf]
        %v2876 = vld [vmem:[#allocation9 + $0x13c] sm:$0xf]
        %v2877 = vld [vmem:[#allocation9 + $0x140] sm:$0xf]
        %v2878 = vld [vmem:[#allocation9 + $0x144] sm:$0xf]
        %v2879 = vld [vmem:[#allocation9 + $0x148] sm:$0xf]
        %v2880 = vld [vmem:[#allocation9 + $0x14c] sm:$0xf]
        %v2881 = vld [vmem:[#allocation9 + $0x150] sm:$0xf]
        %v2882 = vld [vmem:[#allocation9 + $0x154] sm:$0xf]
        %v2883 = vld [vmem:[#allocation9 + $0x158] sm:$0xf]
        %v2884 = vld [vmem:[#allocation9 + $0x15c] sm:$0xf]
        %v2885 = vld [vmem:[#allocation9 + $0x160] sm:$0xf]
        %v2886 = vld [vmem:[#allocation9 + $0x164] sm:$0xf]
        %v2887 = vld [vmem:[#allocation9 + $0x168] sm:$0xf]
        %v2888 = vld [vmem:[#allocation9 + $0x16c] sm:$0xf]
        %v2889 = vld [vmem:[#allocation9 + $0x170] sm:$0xf]
        %v2890 = vld [vmem:[#allocation9 + $0x174] sm:$0xf]
        %v2891 = vld [vmem:[#allocation9 + $0x178] sm:$0xf]
        %v2892 = vld [vmem:[#allocation9 + $0x17c] sm:$0xf]
        %v2893 = vld [vmem:[#allocation9 + $0x180] sm:$0xf]
        %v2894 = vld [vmem:[#allocation9 + $0x184] sm:$0xf]
        %v2895 = vld [vmem:[#allocation9 + $0x188] sm:$0xf]
        %v2896 = vld [vmem:[#allocation9 + $0x18c] sm:$0xf]
        %v2897 = vld [vmem:[#allocation9 + $0x190] sm:$0xf]
        %v2898 = vld [vmem:[#allocation9 + $0x194] sm:$0xf]
        %v2899 = vld [vmem:[#allocation9 + $0x198] sm:$0xf]
        %v2900 = vld [vmem:[#allocation9 + $0x19c] sm:$0xf]
        %v2901 = vld [vmem:[#allocation9 + $0x1a0] sm:$0xf]
        %v2902 = vld [vmem:[#allocation9 + $0x1a4] sm:$0xf]
        %v2903 = vld [vmem:[#allocation9 + $0x1a8] sm:$0xf]
        %v2904 = vld [vmem:[#allocation9 + $0x1ac] sm:$0xf]
        %v2905 = vld [vmem:[#allocation9 + $0x1b0] sm:$0xf]
        %v2906 = vld [vmem:[#allocation9 + $0x1b4] sm:$0xf]
        %v2907 = vld [vmem:[#allocation9 + $0x1b8] sm:$0xf]
        %v2908 = vld [vmem:[#allocation9 + $0x1bc] sm:$0xf]
        %v2909 = vld [vmem:[#allocation9 + $0x1c0] sm:$0xf]
        %v2910 = vld [vmem:[#allocation9 + $0x1c4] sm:$0xf]
        %v2911 = vld [vmem:[#allocation9 + $0x1c8] sm:$0xf]
        %v2912 = vld [vmem:[#allocation9 + $0x1cc] sm:$0xf]
        %v2913 = vld [vmem:[#allocation9 + $0x1d0] sm:$0xf]
        %v2914 = vld [vmem:[#allocation9 + $0x1d4] sm:$0xf]
        %v2915 = vld [vmem:[#allocation9 + $0x1d8] sm:$0xf]
        %v2916 = vld [vmem:[#allocation9 + $0x1dc] sm:$0xf]
        %v2917 = vld [vmem:[#allocation9 + $0x1e0] sm:$0xf]
        %v2918 = vld [vmem:[#allocation9 + $0x1e4] sm:$0xf]
        %v2919 = vld [vmem:[#allocation9 + $0x1e8] sm:$0xf]
        %v2920 = vld [vmem:[#allocation9 + $0x1ec] sm:$0xf]
        %v2921 = vld [vmem:[#allocation9 + $0x1f0] sm:$0xf]
        %v2922 = vld [vmem:[#allocation9 + $0x1f4] sm:$0xf]
        %v2923 = vld [vmem:[#allocation9 + $0x1f8] sm:$0xf]
        %v2924 = vld [vmem:[#allocation9 + $0x1fc] sm:$0xf]
        %v2925 = vld [vmem:[#allocation9 + $0x200] sm:$0xf]
        %v2926 = vld [vmem:[#allocation9 + $0x204] sm:$0xf]
        %v2927 = vld [vmem:[#allocation9 + $0x208] sm:$0xf]
        %v2928 = vld [vmem:[#allocation9 + $0x20c] sm:$0xf]
        %v2929 = vld [vmem:[#allocation9 + $0x210] sm:$0xf]
        %v2930 = vld [vmem:[#allocation9 + $0x214] sm:$0xf]
        %v2931 = vld [vmem:[#allocation9 + $0x218] sm:$0xf]
        %v2932 = vld [vmem:[#allocation9 + $0x21c] sm:$0xf]
        %v2933 = vld [vmem:[#allocation9 + $0x220] sm:$0xf]
        %v2934 = vld [vmem:[#allocation9 + $0x224] sm:$0xf]
        %v2935 = vld [vmem:[#allocation9 + $0x228] sm:$0xf]
        %v2936 = vld [vmem:[#allocation9 + $0x22c] sm:$0xf]
        %v2937 = vld [vmem:[#allocation9 + $0x230] sm:$0xf]
        %v2938 = vld [vmem:[#allocation9 + $0x234] sm:$0xf]
        %v2939 = vld [vmem:[#allocation9 + $0x238] sm:$0xf]
        %v2940 = vld [vmem:[#allocation9 + $0x23c] sm:$0xf]
        %v2941 = vld [vmem:[%s4] sm:$0x1]
        %v2943 = vlaneseq
        %v2944 = vshrl.u32 %v2943, 7
        %v2945 = vsub.s32 0, %v2944
        %v2946 = vrot.slane %v2941, %v2945
        %v3092 = vunpack.c.l.b16 %v2797
        %v3093 = vunpack.c.l.b16 %v2798
        %v3094 = vunpack.c.l.b16 %v2799
        %v3095 = vunpack.c.l.b16 %v2800
        %v3096 = vunpack.c.l.b16 %v2801
        %v3097 = vunpack.c.l.b16 %v2802
        %v3098 = vunpack.c.l.b16 %v2803
        %v3099 = vunpack.c.l.b16 %v2804
        %v3100 = vunpack.c.l.b16 %v2805
        %v3101 = vunpack.c.l.b16 %v2806
        %v3102 = vunpack.c.l.b16 %v2807
        %v3103 = vunpack.c.l.b16 %v2808
        %v3104 = vunpack.c.l.b16 %v2809
        %v3105 = vunpack.c.l.b16 %v2810
        %v3106 = vunpack.c.l.b16 %v2811
        %v3107 = vunpack.c.l.b16 %v2812
        %v3108 = vunpack.c.l.b16 %v2813
        %v3109 = vunpack.c.l.b16 %v2814
        %v3110 = vunpack.c.l.b16 %v2815
        %v3111 = vunpack.c.l.b16 %v2816
        %v3112 = vunpack.c.l.b16 %v2817
        %v3113 = vunpack.c.l.b16 %v2818
        %v3114 = vunpack.c.l.b16 %v2819
        %v3115 = vunpack.c.l.b16 %v2820
        %v3116 = vunpack.c.l.b16 %v2821
        %v3117 = vunpack.c.l.b16 %v2822
        %v3118 = vunpack.c.l.b16 %v2823
        %v3119 = vunpack.c.l.b16 %v2824
        %v3120 = vunpack.c.l.b16 %v2825
        %v3121 = vunpack.c.l.b16 %v2826
        %v3122 = vunpack.c.l.b16 %v2827
        %v3123 = vunpack.c.l.b16 %v2828
        %v3124 = vunpack.c.l.b16 %v2829
        %v3125 = vunpack.c.l.b16 %v2830
        %v3126 = vunpack.c.l.b16 %v2831
        %v3127 = vunpack.c.l.b16 %v2832
        %v3128 = vunpack.c.l.b16 %v2833
        %v3129 = vunpack.c.l.b16 %v2834
        %v3130 = vunpack.c.l.b16 %v2835
        %v3131 = vunpack.c.l.b16 %v2836
        %v3132 = vunpack.c.l.b16 %v2837
        %v3133 = vunpack.c.l.b16 %v2838
        %v3134 = vunpack.c.l.b16 %v2839
        %v3135 = vunpack.c.l.b16 %v2840
        %v3136 = vunpack.c.l.b16 %v2841
        %v3137 = vunpack.c.l.b16 %v2842
        %v3138 = vunpack.c.l.b16 %v2843
        %v3139 = vunpack.c.l.b16 %v2844
        %v3140 = vunpack.c.l.b16 %v2845
        %v3141 = vunpack.c.l.b16 %v2846
        %v3142 = vunpack.c.l.b16 %v2847
        %v3143 = vunpack.c.l.b16 %v2848
        %v3144 = vunpack.c.l.b16 %v2849
        %v3145 = vunpack.c.l.b16 %v2850
        %v3146 = vunpack.c.l.b16 %v2851
        %v3147 = vunpack.c.l.b16 %v2852
        %v3148 = vunpack.c.l.b16 %v2853
        %v3149 = vunpack.c.l.b16 %v2854
        %v3150 = vunpack.c.l.b16 %v2855
        %v3151 = vunpack.c.l.b16 %v2856
        %v3152 = vunpack.c.l.b16 %v2857
        %v3153 = vunpack.c.l.b16 %v2858
        %v3154 = vunpack.c.l.b16 %v2859
        %v3155 = vunpack.c.l.b16 %v2860
        %v3156 = vunpack.c.l.b16 %v2861
        %v3157 = vunpack.c.l.b16 %v2862
        %v3158 = vunpack.c.l.b16 %v2863
        %v3159 = vunpack.c.l.b16 %v2864
        %v3160 = vunpack.c.l.b16 %v2865
        %v3161 = vunpack.c.l.b16 %v2866
        %v3162 = vunpack.c.l.b16 %v2867
        %v3163 = vunpack.c.l.b16 %v2868
        %v3164 = vunpack.c.l.b16 %v2869
        %v3165 = vunpack.c.l.b16 %v2870
        %v3166 = vunpack.c.l.b16 %v2871
        %v3167 = vunpack.c.l.b16 %v2872
        %v3168 = vunpack.c.l.b16 %v2873
        %v3169 = vunpack.c.l.b16 %v2874
        %v3170 = vunpack.c.l.b16 %v2875
        %v3171 = vunpack.c.l.b16 %v2876
        %v3172 = vunpack.c.l.b16 %v2877
        %v3173 = vunpack.c.l.b16 %v2878
        %v3174 = vunpack.c.l.b16 %v2879
        %v3175 = vunpack.c.l.b16 %v2880
        %v3176 = vunpack.c.l.b16 %v2881
        %v3177 = vunpack.c.l.b16 %v2882
        %v3178 = vunpack.c.l.b16 %v2883
        %v3179 = vunpack.c.l.b16 %v2884
        %v3180 = vunpack.c.l.b16 %v2885
        %v3181 = vunpack.c.l.b16 %v2886
        %v3182 = vunpack.c.l.b16 %v2887
        %v3183 = vunpack.c.l.b16 %v2888
        %v3184 = vunpack.c.l.b16 %v2889
        %v3185 = vunpack.c.l.b16 %v2890
        %v3186 = vunpack.c.l.b16 %v2891
        %v3187 = vunpack.c.l.b16 %v2892
        %v3188 = vunpack.c.l.b16 %v2893
        %v3189 = vunpack.c.l.b16 %v2894
        %v3190 = vunpack.c.l.b16 %v2895
        %v3191 = vunpack.c.l.b16 %v2896
        %v3192 = vunpack.c.l.b16 %v2897
        %v3193 = vunpack.c.l.b16 %v2898
        %v3194 = vunpack.c.l.b16 %v2899
        %v3195 = vunpack.c.l.b16 %v2900
        %v3196 = vunpack.c.l.b16 %v2901
        %v3197 = vunpack.c.l.b16 %v2902
        %v3198 = vunpack.c.l.b16 %v2903
        %v3199 = vunpack.c.l.b16 %v2904
        %v3200 = vunpack.c.l.b16 %v2905
        %v3201 = vunpack.c.l.b16 %v2906
        %v3202 = vunpack.c.l.b16 %v2907
        %v3203 = vunpack.c.l.b16 %v2908
        %v3204 = vunpack.c.l.b16 %v2909
        %v3205 = vunpack.c.l.b16 %v2910
        %v3206 = vunpack.c.l.b16 %v2911
        %v3207 = vunpack.c.l.b16 %v2912
        %v3208 = vunpack.c.l.b16 %v2913
        %v3209 = vunpack.c.l.b16 %v2914
        %v3210 = vunpack.c.l.b16 %v2915
        %v3211 = vunpack.c.l.b16 %v2916
        %v3212 = vunpack.c.l.b16 %v2917
        %v3213 = vunpack.c.l.b16 %v2918
        %v3214 = vunpack.c.l.b16 %v2919
        %v3215 = vunpack.c.l.b16 %v2920
        %v3216 = vunpack.c.l.b16 %v2921
        %v3217 = vunpack.c.l.b16 %v2922
        %v3218 = vunpack.c.l.b16 %v2923
        %v3219 = vunpack.c.l.b16 %v2924
        %v3220 = vunpack.c.l.b16 %v2925
        %v3221 = vunpack.c.l.b16 %v2926
        %v3222 = vunpack.c.l.b16 %v2927
        %v3223 = vunpack.c.l.b16 %v2928
        %v3224 = vunpack.c.l.b16 %v2929
        %v3225 = vunpack.c.l.b16 %v2930
        %v3226 = vunpack.c.l.b16 %v2931
        %v3227 = vunpack.c.l.b16 %v2932
        %v3228 = vunpack.c.l.b16 %v2933
        %v3229 = vunpack.c.l.b16 %v2934
        %v3230 = vunpack.c.l.b16 %v2935
        %v3231 = vunpack.c.l.b16 %v2936
        %v3232 = vunpack.c.l.b16 %v2937
        %v3233 = vunpack.c.l.b16 %v2938
        %v3234 = vunpack.c.l.b16 %v2939
        %v3235 = vunpack.c.l.b16 %v2940
        %v3236 = vpack.c.b16 %v3093, %v3092
        %v3237 = vpack.c.b16 %v3095, %v3094
        %v3238 = vpack.c.b16 %v3097, %v3096
        %v3239 = vpack.c.b16 %v3099, %v3098
        %v3240 = vpack.c.b16 %v3101, %v3100
        %v3241 = vpack.c.b16 %v3103, %v3102
        %v3242 = vpack.c.b16 %v3105, %v3104
        %v3243 = vpack.c.b16 %v3107, %v3106
        %v3244 = vpack.c.b16 %v3109, %v3108
        %v3245 = vpack.c.b16 %v3111, %v3110
        %v3246 = vpack.c.b16 %v3113, %v3112
        %v3247 = vpack.c.b16 %v3115, %v3114
        %v3248 = vpack.c.b16 %v3117, %v3116
        %v3249 = vpack.c.b16 %v3119, %v3118
        %v3250 = vpack.c.b16 %v3121, %v3120
        %v3251 = vpack.c.b16 %v3123, %v3122
        %v3252 = vpack.c.b16 %v3125, %v3124
        %v3253 = vpack.c.b16 %v3127, %v3126
        %v3254 = vpack.c.b16 %v3129, %v3128
        %v3255 = vpack.c.b16 %v3131, %v3130
        %v3256 = vpack.c.b16 %v3133, %v3132
        %v3257 = vpack.c.b16 %v3135, %v3134
        %v3258 = vpack.c.b16 %v3137, %v3136
        %v3259 = vpack.c.b16 %v3139, %v3138
        %v3260 = vpack.c.b16 %v3141, %v3140
        %v3261 = vpack.c.b16 %v3143, %v3142
        %v3262 = vpack.c.b16 %v3145, %v3144
        %v3263 = vpack.c.b16 %v3147, %v3146
        %v3264 = vpack.c.b16 %v3149, %v3148
        %v3265 = vpack.c.b16 %v3151, %v3150
        %v3266 = vpack.c.b16 %v3153, %v3152
        %v3267 = vpack.c.b16 %v3155, %v3154
        %v3268 = vpack.c.b16 %v3157, %v3156
        %v3269 = vpack.c.b16 %v3159, %v3158
        %v3270 = vpack.c.b16 %v3161, %v3160
        %v3271 = vpack.c.b16 %v3163, %v3162
        %v3272 = vpack.c.b16 %v3165, %v3164
        %v3273 = vpack.c.b16 %v3167, %v3166
        %v3274 = vpack.c.b16 %v3169, %v3168
        %v3275 = vpack.c.b16 %v3171, %v3170
        %v3276 = vpack.c.b16 %v3173, %v3172
        %v3277 = vpack.c.b16 %v3175, %v3174
        %v3278 = vpack.c.b16 %v3177, %v3176
        %v3279 = vpack.c.b16 %v3179, %v3178
        %v3280 = vpack.c.b16 %v3181, %v3180
        %v3281 = vpack.c.b16 %v3183, %v3182
        %v3282 = vpack.c.b16 %v3185, %v3184
        %v3283 = vpack.c.b16 %v3187, %v3186
        %v3284 = vpack.c.b16 %v3189, %v3188
        %v3285 = vpack.c.b16 %v3191, %v3190
        %v3286 = vpack.c.b16 %v3193, %v3192
        %v3287 = vpack.c.b16 %v3195, %v3194
        %v3288 = vpack.c.b16 %v3197, %v3196
        %v3289 = vpack.c.b16 %v3199, %v3198
        %v3290 = vpack.c.b16 %v3201, %v3200
        %v3291 = vpack.c.b16 %v3203, %v3202
        %v3292 = vpack.c.b16 %v3205, %v3204
        %v3293 = vpack.c.b16 %v3207, %v3206
        %v3294 = vpack.c.b16 %v3209, %v3208
        %v3295 = vpack.c.b16 %v3211, %v3210
        %v3296 = vpack.c.b16 %v3213, %v3212
        %v3297 = vpack.c.b16 %v3215, %v3214
        %v3298 = vpack.c.b16 %v3217, %v3216
        %v3299 = vpack.c.b16 %v3219, %v3218
        %v3300 = vpack.c.b16 %v3221, %v3220
        %v3301 = vpack.c.b16 %v3223, %v3222
        %v3302 = vpack.c.b16 %v3225, %v3224
        %v3303 = vpack.c.b16 %v3227, %v3226
        %v3304 = vpack.c.b16 %v3229, %v3228
        %v3305 = vpack.c.b16 %v3231, %v3230
        %v3306 = vpack.c.b16 %v3233, %v3232
        %v3307 = vpack.c.b16 %v3235, %v3234
        %3380 = vmatprep.subr.bf16.mxu0 0
        %3381 = vmatpush1.bf16.msra.mxu0 %v3236
        %3382 = vmatprep.subr.bf16.mxu0 0
        %3383 = vmatpush1.bf16.msra.mxu0 %v3237
        %3384 = vmatprep.subr.bf16.mxu0 0
        %3385 = vmatpush1.bf16.msra.mxu0 %v3238
        %3386 = vmatprep.subr.bf16.mxu0 0
        %3387 = vmatpush1.bf16.msra.mxu0 %v3239
        %3388 = vmatprep.subr.bf16.mxu0 0
        %3389 = vmatpush1.bf16.msra.mxu0 %v3240
        %3390 = vmatprep.subr.bf16.mxu0 0
        %3391 = vmatpush1.bf16.msra.mxu0 %v3241
        %3392 = vmatprep.subr.bf16.mxu0 0
        %3393 = vmatpush1.bf16.msra.mxu0 %v3242
        %3394 = vmatprep.subr.bf16.mxu0 0
        %3395 = vmatpush1.bf16.msra.mxu0 %v3243
        %3396 = vmatprep.subr.bf16.mxu0 0
        %3397 = vmatpush1.bf16.msra.mxu0 %v3244
        %3398 = vmatprep.subr.bf16.mxu0 0
        %3399 = vmatpush1.bf16.msra.mxu0 %v3245
        %3400 = vmatprep.subr.bf16.mxu0 0
        %3401 = vmatpush1.bf16.msra.mxu0 %v3246
        %3402 = vmatprep.subr.bf16.mxu0 0
        %3403 = vmatpush1.bf16.msra.mxu0 %v3247
        %3404 = vmatprep.subr.bf16.mxu0 0
        %3405 = vmatpush1.bf16.msra.mxu0 %v3248
        %3406 = vmatprep.subr.bf16.mxu0 0
        %3407 = vmatpush1.bf16.msra.mxu0 %v3249
        %3408 = vmatprep.subr.bf16.mxu0 0
        %3409 = vmatpush1.bf16.msra.mxu0 %v3250
        %3410 = vmatprep.subr.bf16.mxu0 0
        %3411 = vmatpush1.bf16.msra.mxu0 %v3251
        %3412 = vmatprep.mubr.bf16.mxu0 %v2654
        %3413 = vmatmul.mubr.bf16.gmra.mrb[0].mxu0 %v2653
        %v3414 = vpop.f32.mrb[0].mxu0
        %v3415 = vadd.f32 %v2946, %v3414
        %v3416 = vpop.f32.mrb[0].mxu0
        %v3417 = vpop.f32.mrb[0].mxu0
        %v3418 = vadd.f32 %v2946, %v3417
        %v3419 = vpop.f32.mrb[0].mxu0
        %3420 = vmatprep.mubr.bf16.mxu0 %v2663
        %3421 = vmatmul.mubr.bf16.gmra.mrb[0].mxu0 %v2662
        %v3422 = vpop.f32.mrb[0].mxu0
        %v3423 = vadd.f32 %v2946, %v3422
        %v3424 = vpop.f32.mrb[0].mxu0
        %v3425 = vpop.f32.mrb[0].mxu0
        %v3426 = vadd.f32 %v2946, %v3425
        %v3427 = vpop.f32.mrb[0].mxu0
        %3428 = vmatprep.mubr.bf16.mxu0 %v2672
        %3429 = vmatmul.mubr.bf16.gmra.mrb[0].mxu0 %v2671
        %v3430 = vpop.f32.mrb[0].mxu0
        %v3431 = vadd.f32 %v2946, %v3430
        %v3432 = vpop.f32.mrb[0].mxu0
        %v3433 = vpop.f32.mrb[0].mxu0
        %v3434 = vadd.f32 %v2946, %v3433
        %v3435 = vpop.f32.mrb[0].mxu0
        %3436 = vmatprep.mubr.bf16.mxu0 %v2681
        %3437 = vmatmul.mubr.bf16.gmra.mrb[0].mxu0 %v2680
        %v3438 = vpop.f32.mrb[0].mxu0
        %v3439 = vadd.f32 %v2946, %v3438
        %v3440 = vpop.f32.mrb[0].mxu0
        %v3441 = vpop.f32.mrb[0].mxu0
        %v3442 = vadd.f32 %v2946, %v3441
        %v3443 = vpop.f32.mrb[0].mxu0
        %3444 = vmatprep.mubr.bf16.mxu0 %v2690
        %3445 = vmatmul.mubr.bf16.gmra.mrb[0].mxu0 %v2689
        %v3446 = vpop.f32.mrb[0].mxu0
        %v3447 = vadd.f32 %v2946, %v3446
        %v3448 = vpop.f32.mrb[0].mxu0
        %v3449 = vpop.f32.mrb[0].mxu0
        %v3450 = vadd.f32 %v2946, %v3449
        %v3451 = vpop.f32.mrb[0].mxu0
        %3452 = vmatprep.mubr.bf16.mxu0 %v2699
        %3453 = vmatmul.mubr.bf16.gmra.mrb[0].mxu0 %v2698
        %v3454 = vpop.f32.mrb[0].mxu0
        %v3455 = vadd.f32 %v2946, %v3454
        %v3456 = vpop.f32.mrb[0].mxu0
        %v3457 = vpop.f32.mrb[0].mxu0
        %v3458 = vadd.f32 %v2946, %v3457
        %v3459 = vpop.f32.mrb[0].mxu0
        %3460 = vmatprep.mubr.bf16.mxu0 %v2708
        %3461 = vmatmul.mubr.bf16.gmra.mrb[0].mxu0 %v2707
        %v3462 = vpop.f32.mrb[0].mxu0
        %v3463 = vadd.f32 %v2946, %v3462
        %v3464 = vpop.f32.mrb[0].mxu0
        %v3465 = vpop.f32.mrb[0].mxu0
        %v3466 = vadd.f32 %v2946, %v3465
        %v3467 = vpop.f32.mrb[0].mxu0
        %3468 = vmatprep.mubr.bf16.mxu0 %v2717
        %3469 = vmatmul.mubr.bf16.gmra.mrb[0].mxu0 %v2716
        %v3470 = vpop.f32.mrb[0].mxu0
        %v3471 = vadd.f32 %v2946, %v3470
        %v3472 = vpop.f32.mrb[0].mxu0
        %v3473 = vpop.f32.mrb[0].mxu0
        %v3474 = vadd.f32 %v2946, %v3473
        %v3475 = vpop.f32.mrb[0].mxu0
        %3476 = vmatprep.mubr.bf16.mxu0 %v2726
        %3477 = vmatmul.mubr.bf16.gmra.mrb[0].mxu0 %v2725
        %v3478 = vpop.f32.mrb[0].mxu0
        %v3479 = vadd.f32 %v2946, %v3478
        %v3480 = vpop.f32.mrb[0].mxu0
        %v3481 = vpop.f32.mrb[0].mxu0
        %v3482 = vadd.f32 %v2946, %v3481
        %v3483 = vpop.f32.mrb[0].mxu0
        %3484 = vmatprep.mubr.bf16.mxu0 %v2735
        %3485 = vmatmul.mubr.bf16.gmra.mrb[0].mxu0 %v2734
        %v3486 = vpop.f32.mrb[0].mxu0
        %v3487 = vadd.f32 %v2946, %v3486
        %v3488 = vpop.f32.mrb[0].mxu0
        %v3489 = vpop.f32.mrb[0].mxu0
        %v3490 = vadd.f32 %v2946, %v3489
        %v3491 = vpop.f32.mrb[0].mxu0
        %3492 = vmatprep.mubr.bf16.mxu0 %v2744
        %3493 = vmatmul.mubr.bf16.gmra.mrb[0].mxu0 %v2743
        %v3494 = vpop.f32.mrb[0].mxu0
        %v3495 = vadd.f32 %v2946, %v3494
        %v3496 = vpop.f32.mrb[0].mxu0
        %v3497 = vpop.f32.mrb[0].mxu0
        %v3498 = vadd.f32 %v2946, %v3497
        %v3499 = vpop.f32.mrb[0].mxu0
        %3500 = vmatprep.mubr.bf16.mxu0 %v2753
        %3501 = vmatmul.mubr.bf16.gmra.mrb[0].mxu0 %v2752
        %v3502 = vpop.f32.mrb[0].mxu0
        %v3503 = vadd.f32 %v2946, %v3502
        %v3504 = vpop.f32.mrb[0].mxu0
        %v3505 = vpop.f32.mrb[0].mxu0
        %v3506 = vadd.f32 %v2946, %v3505
        %v3507 = vpop.f32.mrb[0].mxu0
        %3508 = vmatprep.mubr.bf16.mxu0 %v2762
        %3509 = vmatmul.mubr.bf16.gmra.mrb[0].mxu0 %v2761
        %v3510 = vpop.f32.mrb[0].mxu0
        %v3511 = vadd.f32 %v2946, %v3510
        %v3512 = vpop.f32.mrb[0].mxu0
        %v3513 = vpop.f32.mrb[0].mxu0
        %v3514 = vadd.f32 %v2946, %v3513
        %v3515 = vpop.f32.mrb[0].mxu0
        %3516 = vmatprep.mubr.bf16.mxu0 %v2771
        %3517 = vmatmul.mubr.bf16.gmra.mrb[0].mxu0 %v2770
        %v3518 = vpop.f32.mrb[0].mxu0
        %v3519 = vadd.f32 %v2946, %v3518
        %v3520 = vpop.f32.mrb[0].mxu0
        %v3521 = vpop.f32.mrb[0].mxu0
        %v3522 = vadd.f32 %v2946, %v3521
        %v3523 = vpop.f32.mrb[0].mxu0
        %3524 = vmatprep.mubr.bf16.mxu0 %v2780
        %3525 = vmatmul.mubr.bf16.gmra.mrb[0].mxu0 %v2779
        %v3526 = vpop.f32.mrb[0].mxu0
        %v3527 = vadd.f32 %v2946, %v3526
        %v3528 = vpop.f32.mrb[0].mxu0
        %v3529 = vpop.f32.mrb[0].mxu0
        %v3530 = vadd.f32 %v2946, %v3529
        %v3531 = vpop.f32.mrb[0].mxu0
        %3532 = vmatprep.mubr.bf16.mxu0 %v2789
        %3533 = vmatmul.mubr.bf16.gmra.mrb[0].mxu0 %v2788
        %v3534 = vpop.f32.mrb[0].mxu0
        %v3535 = vadd.f32 %v2946, %v3534
        %v3536 = vpop.f32.mrb[0].mxu0
        %v3537 = vpop.f32.mrb[0].mxu0
        %v3538 = vadd.f32 %v2946, %v3537
        %v3539 = vpop.f32.mrb[0].mxu0
        %3540 = vdwg.mxu0
        %3541 = vmatprep.subr.bf16.mxu0 0
        %3542 = vmatpush1.bf16.msra.mxu0 %v3252
        %3543 = vmatprep.subr.bf16.mxu0 0
        %3544 = vmatpush1.bf16.msra.mxu0 %v3253
        %3545 = vmatprep.subr.bf16.mxu0 0
        %3546 = vmatpush1.bf16.msra.mxu0 %v3254
        %3547 = vmatprep.subr.bf16.mxu0 0
        %3548 = vmatpush1.bf16.msra.mxu0 %v3255
        %3549 = vmatprep.subr.bf16.mxu0 0
        %3550 = vmatpush1.bf16.msra.mxu0 %v3256
        %3551 = vmatprep.subr.bf16.mxu0 0
        %3552 = vmatpush1.bf16.msra.mxu0 %v3257
        %3553 = vmatprep.subr.bf16.mxu0 0
        %3554 = vmatpush1.bf16.msra.mxu0 %v3258
        %3555 = vmatprep.subr.bf16.mxu0 0
        %3556 = vmatpush1.bf16.msra.mxu0 %v3259
        %3557 = vmatprep.subr.bf16.mxu0 0
        %3558 = vmatpush1.bf16.msra.mxu0 %v3260
        %3559 = vmatprep.subr.bf16.mxu0 0
        %3560 = vmatpush1.bf16.msra.mxu0 %v3261
        %3561 = vmatprep.subr.bf16.mxu0 0
        %3562 = vmatpush1.bf16.msra.mxu0 %v3262
        %3563 = vmatprep.subr.bf16.mxu0 0
        %3564 = vmatpush1.bf16.msra.mxu0 %v3263
        %3565 = vmatprep.subr.bf16.mxu0 0
        %3566 = vmatpush1.bf16.msra.mxu0 %v3264
        %3567 = vmatprep.subr.bf16.mxu0 0
        %3568 = vmatpush1.bf16.msra.mxu0 %v3265
        %3569 = vmatprep.subr.bf16.mxu0 0
        %3570 = vmatpush1.bf16.msra.mxu0 %v3266
        %3571 = vmatprep.subr.bf16.mxu0 0
        %3572 = vmatpush1.bf16.msra.mxu0 %v3267
        %3573 = vmatprep.mubr.bf16.mxu0 %v2656
        %3574 = vmatmul.mubr.bf16.gmra.mrb[0].mxu0 %v2655
        %v3575 = vpop.f32.mrb[0].mxu0
        %v3576 = vadd.f32 %v3415, %v3575
        %v3577 = vpop.f32.mrb[0].mxu0
        %v3578 = vpop.f32.mrb[0].mxu0
        %v3579 = vadd.f32 %v3418, %v3578
        %v3580 = vpop.f32.mrb[0].mxu0
        %3581 = vmatprep.mubr.bf16.mxu0 %v2665
        %3582 = vmatmul.mubr.bf16.gmra.mrb[0].mxu0 %v2664
        %v3583 = vpop.f32.mrb[0].mxu0
        %v3584 = vadd.f32 %v3423, %v3583
        %v3585 = vpop.f32.mrb[0].mxu0
        %v3586 = vpop.f32.mrb[0].mxu0
        %v3587 = vadd.f32 %v3426, %v3586
        %v3588 = vpop.f32.mrb[0].mxu0
        %3589 = vmatprep.mubr.bf16.mxu0 %v2674
        %3590 = vmatmul.mubr.bf16.gmra.mrb[0].mxu0 %v2673
        %v3591 = vpop.f32.mrb[0].mxu0
        %v3592 = vadd.f32 %v3431, %v3591
        %v3593 = vpop.f32.mrb[0].mxu0
        %v3594 = vpop.f32.mrb[0].mxu0
        %v3595 = vadd.f32 %v3434, %v3594
        %v3596 = vpop.f32.mrb[0].mxu0
        %3597 = vmatprep.mubr.bf16.mxu0 %v2683
        %3598 = vmatmul.mubr.bf16.gmra.mrb[0].mxu0 %v2682
        %v3599 = vpop.f32.mrb[0].mxu0
        %v3600 = vadd.f32 %v3439, %v3599
        %v3601 = vpop.f32.mrb[0].mxu0
        %v3602 = vpop.f32.mrb[0].mxu0
        %v3603 = vadd.f32 %v3442, %v3602
        %v3604 = vpop.f32.mrb[0].mxu0
        %3605 = vmatprep.mubr.bf16.mxu0 %v2692
        %3606 = vmatmul.mubr.bf16.gmra.mrb[0].mxu0 %v2691
        %v3607 = vpop.f32.mrb[0].mxu0
        %v3608 = vadd.f32 %v3447, %v3607
        %v3609 = vpop.f32.mrb[0].mxu0
        %v3610 = vpop.f32.mrb[0].mxu0
        %v3611 = vadd.f32 %v3450, %v3610
        %v3612 = vpop.f32.mrb[0].mxu0
        %3613 = vmatprep.mubr.bf16.mxu0 %v2701
        %3614 = vmatmul.mubr.bf16.gmra.mrb[0].mxu0 %v2700
        %v3615 = vpop.f32.mrb[0].mxu0
        %v3616 = vadd.f32 %v3455, %v3615
        %v3617 = vpop.f32.mrb[0].mxu0
        %v3618 = vpop.f32.mrb[0].mxu0
        %v3619 = vadd.f32 %v3458, %v3618
        %v3620 = vpop.f32.mrb[0].mxu0
        %3621 = vmatprep.mubr.bf16.mxu0 %v2710
        %3622 = vmatmul.mubr.bf16.gmra.mrb[0].mxu0 %v2709
        %v3623 = vpop.f32.mrb[0].mxu0
        %v3624 = vadd.f32 %v3463, %v3623
        %v3625 = vpop.f32.mrb[0].mxu0
        %v3626 = vpop.f32.mrb[0].mxu0
        %v3627 = vadd.f32 %v3466, %v3626
        %v3628 = vpop.f32.mrb[0].mxu0
        %3629 = vmatprep.mubr.bf16.mxu0 %v2719
        %3630 = vmatmul.mubr.bf16.gmra.mrb[0].mxu0 %v2718
        %v3631 = vpop.f32.mrb[0].mxu0
        %v3632 = vadd.f32 %v3471, %v3631
        %v3633 = vpop.f32.mrb[0].mxu0
        %v3634 = vpop.f32.mrb[0].mxu0
        %v3635 = vadd.f32 %v3474, %v3634
        %v3636 = vpop.f32.mrb[0].mxu0
        %3637 = vmatprep.mubr.bf16.mxu0 %v2728
        %3638 = vmatmul.mubr.bf16.gmra.mrb[0].mxu0 %v2727
        %v3639 = vpop.f32.mrb[0].mxu0
        %v3640 = vadd.f32 %v3479, %v3639
        %v3641 = vpop.f32.mrb[0].mxu0
        %v3642 = vpop.f32.mrb[0].mxu0
        %v3643 = vadd.f32 %v3482, %v3642
        %v3644 = vpop.f32.mrb[0].mxu0
        %3645 = vmatprep.mubr.bf16.mxu0 %v2737
        %3646 = vmatmul.mubr.bf16.gmra.mrb[0].mxu0 %v2736
        %v3647 = vpop.f32.mrb[0].mxu0
        %v3648 = vadd.f32 %v3487, %v3647
        %v3649 = vpop.f32.mrb[0].mxu0
        %v3650 = vpop.f32.mrb[0].mxu0
        %v3651 = vadd.f32 %v3490, %v3650
        %v3652 = vpop.f32.mrb[0].mxu0
        %3653 = vmatprep.mubr.bf16.mxu0 %v2746
        %3654 = vmatmul.mubr.bf16.gmra.mrb[0].mxu0 %v2745
        %v3655 = vpop.f32.mrb[0].mxu0
        %v3656 = vadd.f32 %v3495, %v3655
        %v3657 = vpop.f32.mrb[0].mxu0
        %v3658 = vpop.f32.mrb[0].mxu0
        %v3659 = vadd.f32 %v3498, %v3658
        %v3660 = vpop.f32.mrb[0].mxu0
        %3661 = vmatprep.mubr.bf16.mxu0 %v2755
        %3662 = vmatmul.mubr.bf16.gmra.mrb[0].mxu0 %v2754
        %v3663 = vpop.f32.mrb[0].mxu0
        %v3664 = vadd.f32 %v3503, %v3663
        %v3665 = vpop.f32.mrb[0].mxu0
        %v3666 = vpop.f32.mrb[0].mxu0
        %v3667 = vadd.f32 %v3506, %v3666
        %v3668 = vpop.f32.mrb[0].mxu0
        %3669 = vmatprep.mubr.bf16.mxu0 %v2764
        %3670 = vmatmul.mubr.bf16.gmra.mrb[0].mxu0 %v2763
        %v3671 = vpop.f32.mrb[0].mxu0
        %v3672 = vadd.f32 %v3511, %v3671
        %v3673 = vpop.f32.mrb[0].mxu0
        %v3674 = vpop.f32.mrb[0].mxu0
        %v3675 = vadd.f32 %v3514, %v3674
        %v3676 = vpop.f32.mrb[0].mxu0
        %3677 = vmatprep.mubr.bf16.mxu0 %v2773
        %3678 = vmatmul.mubr.bf16.gmra.mrb[0].mxu0 %v2772
        %v3679 = vpop.f32.mrb[0].mxu0
        %v3680 = vadd.f32 %v3519, %v3679
        %v3681 = vpop.f32.mrb[0].mxu0
        %v3682 = vpop.f32.mrb[0].mxu0
        %v3683 = vadd.f32 %v3522, %v3682
        %v3684 = vpop.f32.mrb[0].mxu0
        %3685 = vmatprep.mubr.bf16.mxu0 %v2782
        %3686 = vmatmul.mubr.bf16.gmra.mrb[0].mxu0 %v2781
        %v3687 = vpop.f32.mrb[0].mxu0
        %v3688 = vadd.f32 %v3527, %v3687
        %v3689 = vpop.f32.mrb[0].mxu0
        %v3690 = vpop.f32.mrb[0].mxu0
        %v3691 = vadd.f32 %v3530, %v3690
        %v3692 = vpop.f32.mrb[0].mxu0
        %3693 = vmatprep.mubr.bf16.mxu0 %v2791
        %3694 = vmatmul.mubr.bf16.gmra.mrb[0].mxu0 %v2790
        %v3695 = vpop.f32.mrb[0].mxu0
        %v3696 = vadd.f32 %v3535, %v3695
        %v3697 = vpop.f32.mrb[0].mxu0
        %v3698 = vpop.f32.mrb[0].mxu0
        %v3699 = vadd.f32 %v3538, %v3698
        %v3700 = vpop.f32.mrb[0].mxu0
        %3701 = vdwg.mxu0
        %3702 = vmatprep.subr.bf16.mxu0 0
        %3703 = vmatpush1.bf16.msra.mxu0 %v3268
        %3704 = vmatprep.subr.bf16.mxu0 0
        %3705 = vmatpush1.bf16.msra.mxu0 %v3269
        %3706 = vmatprep.subr.bf16.mxu0 0
        %3707 = vmatpush1.bf16.msra.mxu0 %v3270
        %3708 = vmatprep.subr.bf16.mxu0 0
        %3709 = vmatpush1.bf16.msra.mxu0 %v3271
        %3710 = vmatprep.subr.bf16.mxu0 0
        %3711 = vmatpush1.bf16.msra.mxu0 %v3272
        %3712 = vmatprep.subr.bf16.mxu0 0
        %3713 = vmatpush1.bf16.msra.mxu0 %v3273
        %3714 = vmatprep.subr.bf16.mxu0 0
        %3715 = vmatpush1.bf16.msra.mxu0 %v3274
        %3716 = vmatprep.subr.bf16.mxu0 0
        %3717 = vmatpush1.bf16.msra.mxu0 %v3275
        %3718 = vmatprep.subr.bf16.mxu0 0
        %3719 = vmatpush1.bf16.msra.mxu0 %v3276
        %3720 = vmatprep.subr.bf16.mxu0 0
        %3721 = vmatpush1.bf16.msra.mxu0 %v3277
        %3722 = vmatprep.subr.bf16.mxu0 0
        %3723 = vmatpush1.bf16.msra.mxu0 %v3278
        %3724 = vmatprep.subr.bf16.mxu0 0
        %3725 = vmatpush1.bf16.msra.mxu0 %v3279
        %3726 = vmatprep.subr.bf16.mxu0 0
        %3727 = vmatpush1.bf16.msra.mxu0 %v3280
        %3728 = vmatprep.subr.bf16.mxu0 0
        %3729 = vmatpush1.bf16.msra.mxu0 %v3281
        %3730 = vmatprep.subr.bf16.mxu0 0
        %3731 = vmatpush1.bf16.msra.mxu0 %v3282
        %3732 = vmatprep.subr.bf16.mxu0 0
        %3733 = vmatpush1.bf16.msra.mxu0 %v3283
        %3734 = vmatprep.mubr.bf16.mxu0 %v2658
        %3735 = vmatmul.mubr.bf16.gmra.mrb[0].mxu0 %v2657
        %v3736 = vpop.f32.mrb[0].mxu0
        %v3737 = vadd.f32 %v3576, %v3736
        %v3738 = vpop.f32.mrb[0].mxu0
        %v3739 = vpop.f32.mrb[0].mxu0
        %v3740 = vadd.f32 %v3579, %v3739
        %v3741 = vpop.f32.mrb[0].mxu0
        %3742 = vmatprep.mubr.bf16.mxu0 %v2667
        %3743 = vmatmul.mubr.bf16.gmra.mrb[0].mxu0 %v2666
        %v3744 = vpop.f32.mrb[0].mxu0
        %v3745 = vadd.f32 %v3584, %v3744
        %v3746 = vpop.f32.mrb[0].mxu0
        %v3747 = vpop.f32.mrb[0].mxu0
        %v3748 = vadd.f32 %v3587, %v3747
        %v3749 = vpop.f32.mrb[0].mxu0
        %3750 = vmatprep.mubr.bf16.mxu0 %v2676
        %3751 = vmatmul.mubr.bf16.gmra.mrb[0].mxu0 %v2675
        %v3752 = vpop.f32.mrb[0].mxu0
        %v3753 = vadd.f32 %v3592, %v3752
        %v3754 = vpop.f32.mrb[0].mxu0
        %v3755 = vpop.f32.mrb[0].mxu0
        %v3756 = vadd.f32 %v3595, %v3755
        %v3757 = vpop.f32.mrb[0].mxu0
        %3758 = vmatprep.mubr.bf16.mxu0 %v2685
        %3759 = vmatmul.mubr.bf16.gmra.mrb[0].mxu0 %v2684
        %v3760 = vpop.f32.mrb[0].mxu0
        %v3761 = vadd.f32 %v3600, %v3760
        %v3762 = vpop.f32.mrb[0].mxu0
        %v3763 = vpop.f32.mrb[0].mxu0
        %v3764 = vadd.f32 %v3603, %v3763
        %v3765 = vpop.f32.mrb[0].mxu0
        %3766 = vmatprep.mubr.bf16.mxu0 %v2694
        %3767 = vmatmul.mubr.bf16.gmra.mrb[0].mxu0 %v2693
        %v3768 = vpop.f32.mrb[0].mxu0
        %v3769 = vadd.f32 %v3608, %v3768
        %v3770 = vpop.f32.mrb[0].mxu0
        %v3771 = vpop.f32.mrb[0].mxu0
        %v3772 = vadd.f32 %v3611, %v3771
        %v3773 = vpop.f32.mrb[0].mxu0
        %3774 = vmatprep.mubr.bf16.mxu0 %v2703
        %3775 = vmatmul.mubr.bf16.gmra.mrb[0].mxu0 %v2702
        %v3776 = vpop.f32.mrb[0].mxu0
        %v3777 = vadd.f32 %v3616, %v3776
        %v3778 = vpop.f32.mrb[0].mxu0
        %v3779 = vpop.f32.mrb[0].mxu0
        %v3780 = vadd.f32 %v3619, %v3779
        %v3781 = vpop.f32.mrb[0].mxu0
        %3782 = vmatprep.mubr.bf16.mxu0 %v2712
        %3783 = vmatmul.mubr.bf16.gmra.mrb[0].mxu0 %v2711
        %v3784 = vpop.f32.mrb[0].mxu0
        %v3785 = vadd.f32 %v3624, %v3784
        %v3786 = vpop.f32.mrb[0].mxu0
        %v3787 = vpop.f32.mrb[0].mxu0
        %v3788 = vadd.f32 %v3627, %v3787
        %v3789 = vpop.f32.mrb[0].mxu0
        %3790 = vmatprep.mubr.bf16.mxu0 %v2721
        %3791 = vmatmul.mubr.bf16.gmra.mrb[0].mxu0 %v2720
        %v3792 = vpop.f32.mrb[0].mxu0
        %v3793 = vadd.f32 %v3632, %v3792
        %v3794 = vpop.f32.mrb[0].mxu0
        %v3795 = vpop.f32.mrb[0].mxu0
        %v3796 = vadd.f32 %v3635, %v3795
        %v3797 = vpop.f32.mrb[0].mxu0
        %3798 = vmatprep.mubr.bf16.mxu0 %v2730
        %3799 = vmatmul.mubr.bf16.gmra.mrb[0].mxu0 %v2729
        %v3800 = vpop.f32.mrb[0].mxu0
        %v3801 = vadd.f32 %v3640, %v3800
        %v3802 = vpop.f32.mrb[0].mxu0
        %v3803 = vpop.f32.mrb[0].mxu0
        %v3804 = vadd.f32 %v3643, %v3803
        %v3805 = vpop.f32.mrb[0].mxu0
        %3806 = vmatprep.mubr.bf16.mxu0 %v2739
        %3807 = vmatmul.mubr.bf16.gmra.mrb[0].mxu0 %v2738
        %v3808 = vpop.f32.mrb[0].mxu0
        %v3809 = vadd.f32 %v3648, %v3808
        %v3810 = vpop.f32.mrb[0].mxu0
        %v3811 = vpop.f32.mrb[0].mxu0
        %v3812 = vadd.f32 %v3651, %v3811
        %v3813 = vpop.f32.mrb[0].mxu0
        %3814 = vmatprep.mubr.bf16.mxu0 %v2748
        %3815 = vmatmul.mubr.bf16.gmra.mrb[0].mxu0 %v2747
        %v3816 = vpop.f32.mrb[0].mxu0
        %v3817 = vadd.f32 %v3656, %v3816
        %v3818 = vpop.f32.mrb[0].mxu0
        %v3819 = vpop.f32.mrb[0].mxu0
        %v3820 = vadd.f32 %v3659, %v3819
        %v3821 = vpop.f32.mrb[0].mxu0
        %3822 = vmatprep.mubr.bf16.mxu0 %v2757
        %3823 = vmatmul.mubr.bf16.gmra.mrb[0].mxu0 %v2756
        %v3824 = vpop.f32.mrb[0].mxu0
        %v3825 = vadd.f32 %v3664, %v3824
        %v3826 = vpop.f32.mrb[0].mxu0
        %v3827 = vpop.f32.mrb[0].mxu0
        %v3828 = vadd.f32 %v3667, %v3827
        %v3829 = vpop.f32.mrb[0].mxu0
        %3830 = vmatprep.mubr.bf16.mxu0 %v2766
        %3831 = vmatmul.mubr.bf16.gmra.mrb[0].mxu0 %v2765
        %v3832 = vpop.f32.mrb[0].mxu0
        %v3833 = vadd.f32 %v3672, %v3832
        %v3834 = vpop.f32.mrb[0].mxu0
        %v3835 = vpop.f32.mrb[0].mxu0
        %v3836 = vadd.f32 %v3675, %v3835
        %v3837 = vpop.f32.mrb[0].mxu0
        %3838 = vmatprep.mubr.bf16.mxu0 %v2775
        %3839 = vmatmul.mubr.bf16.gmra.mrb[0].mxu0 %v2774
        %v3840 = vpop.f32.mrb[0].mxu0
        %v3841 = vadd.f32 %v3680, %v3840
        %v3842 = vpop.f32.mrb[0].mxu0
        %v3843 = vpop.f32.mrb[0].mxu0
        %v3844 = vadd.f32 %v3683, %v3843
        %v3845 = vpop.f32.mrb[0].mxu0
        %3846 = vmatprep.mubr.bf16.mxu0 %v2784
        %3847 = vmatmul.mubr.bf16.gmra.mrb[0].mxu0 %v2783
        %v3848 = vpop.f32.mrb[0].mxu0
        %v3849 = vadd.f32 %v3688, %v3848
        %v3850 = vpop.f32.mrb[0].mxu0
        %v3851 = vpop.f32.mrb[0].mxu0
        %v3852 = vadd.f32 %v3691, %v3851
        %v3853 = vpop.f32.mrb[0].mxu0
        %3854 = vmatprep.mubr.bf16.mxu0 %v2793
        %3855 = vmatmul.mubr.bf16.gmra.mrb[0].mxu0 %v2792
        %v3856 = vpop.f32.mrb[0].mxu0
        %v3857 = vadd.f32 %v3696, %v3856
        %v3858 = vpop.f32.mrb[0].mxu0
        %v3859 = vpop.f32.mrb[0].mxu0
        %v3860 = vadd.f32 %v3699, %v3859
        %v3861 = vpop.f32.mrb[0].mxu0
        %3862 = vdwg.mxu0
        %3863 = vmatprep.subr.bf16.mxu0 0
        %3864 = vmatpush1.bf16.msra.mxu0 %v3284
        %3865 = vmatprep.subr.bf16.mxu0 0
        %3866 = vmatpush1.bf16.msra.mxu0 %v3285
        %3867 = vmatprep.subr.bf16.mxu0 0
        %3868 = vmatpush1.bf16.msra.mxu0 %v3286
        %3869 = vmatprep.subr.bf16.mxu0 0
        %3870 = vmatpush1.bf16.msra.mxu0 %v3287
        %3871 = vmatprep.subr.bf16.mxu0 0
        %3872 = vmatpush1.bf16.msra.mxu0 %v3288
        %3873 = vmatprep.subr.bf16.mxu0 0
        %3874 = vmatpush1.bf16.msra.mxu0 %v3289
        %3875 = vmatprep.subr.bf16.mxu0 0
        %3876 = vmatpush1.bf16.msra.mxu0 %v3290
        %3877 = vmatprep.subr.bf16.mxu0 0
        %3878 = vmatpush1.bf16.msra.mxu0 %v3291
        %3879 = vmatprep.subr.bf16.mxu0 0
        %3880 = vmatpush1.bf16.msra.mxu0 %v3292
        %3881 = vmatprep.subr.bf16.mxu0 0
        %3882 = vmatpush1.bf16.msra.mxu0 %v3293
        %3883 = vmatprep.subr.bf16.mxu0 0
        %3884 = vmatpush1.bf16.msra.mxu0 %v3294
        %3885 = vmatprep.subr.bf16.mxu0 0
        %3886 = vmatpush1.bf16.msra.mxu0 %v3295
        %3887 = vmatprep.subr.bf16.mxu0 0
        %3888 = vmatpush1.bf16.msra.mxu0 %v3296
        %3889 = vmatprep.subr.bf16.mxu0 0
        %3890 = vmatpush1.bf16.msra.mxu0 %v3297
        %3891 = vmatprep.subr.bf16.mxu0 0
        %3892 = vmatpush1.bf16.msra.mxu0 %v3298
        %3893 = vmatprep.subr.bf16.mxu0 0
        %3894 = vmatpush1.bf16.msra.mxu0 %v3299
        %3895 = vmatprep.mubr.bf16.mxu0 %v2660
        %3896 = vmatmul.mubr.bf16.gmra.mrb[0].mxu0 %v2659
        %v3897 = vpop.f32.mrb[0].mxu0
        %v3898 = vadd.f32 %v3737, %v3897
        %v3899 = vpop.f32.mrb[0].mxu0
        %v3900 = vpop.f32.mrb[0].mxu0
        %v3901 = vadd.f32 %v3740, %v3900
        %v3902 = vpop.f32.mrb[0].mxu0
        %3903 = vmatprep.mubr.bf16.mxu0 %v2669
        %3904 = vmatmul.mubr.bf16.gmra.mrb[0].mxu0 %v2668
        %v3905 = vpop.f32.mrb[0].mxu0
        %v3906 = vadd.f32 %v3745, %v3905
        %v3907 = vpop.f32.mrb[0].mxu0
        %v3908 = vpop.f32.mrb[0].mxu0
        %v3909 = vadd.f32 %v3748, %v3908
        %v3910 = vpop.f32.mrb[0].mxu0
        %3911 = vmatprep.mubr.bf16.mxu0 %v2678
        %3912 = vmatmul.mubr.bf16.gmra.mrb[0].mxu0 %v2677
        %v3913 = vpop.f32.mrb[0].mxu0
        %v3914 = vadd.f32 %v3753, %v3913
        %v3915 = vpop.f32.mrb[0].mxu0
        %v3916 = vpop.f32.mrb[0].mxu0
        %v3917 = vadd.f32 %v3756, %v3916
        %v3918 = vpop.f32.mrb[0].mxu0
        %3919 = vmatprep.mubr.bf16.mxu0 %v2687
        %3920 = vmatmul.mubr.bf16.gmra.mrb[0].mxu0 %v2686
        %v3921 = vpop.f32.mrb[0].mxu0
        %v3922 = vadd.f32 %v3761, %v3921
        %v3923 = vpop.f32.mrb[0].mxu0
        %v3924 = vpop.f32.mrb[0].mxu0
        %v3925 = vadd.f32 %v3764, %v3924
        %v3926 = vpop.f32.mrb[0].mxu0
        %3927 = vmatprep.mubr.bf16.mxu0 %v2696
        %3928 = vmatmul.mubr.bf16.gmra.mrb[0].mxu0 %v2695
        %v3929 = vpop.f32.mrb[0].mxu0
        %v3930 = vadd.f32 %v3769, %v3929
        %v3931 = vpop.f32.mrb[0].mxu0
        %v3932 = vpop.f32.mrb[0].mxu0
        %v3933 = vadd.f32 %v3772, %v3932
        %v3934 = vpop.f32.mrb[0].mxu0
        %3935 = vmatprep.mubr.bf16.mxu0 %v2705
        %3936 = vmatmul.mubr.bf16.gmra.mrb[0].mxu0 %v2704
        %v3937 = vpop.f32.mrb[0].mxu0
        %v3938 = vadd.f32 %v3777, %v3937
        %v3939 = vpop.f32.mrb[0].mxu0
        %v3940 = vpop.f32.mrb[0].mxu0
        %v3941 = vadd.f32 %v3780, %v3940
        %v3942 = vpop.f32.mrb[0].mxu0
        %3943 = vmatprep.mubr.bf16.mxu0 %v2714
        %3944 = vmatmul.mubr.bf16.gmra.mrb[0].mxu0 %v2713
        %v3945 = vpop.f32.mrb[0].mxu0
        %v3946 = vadd.f32 %v3785, %v3945
        %v3947 = vpop.f32.mrb[0].mxu0
        %v3948 = vpop.f32.mrb[0].mxu0
        %v3949 = vadd.f32 %v3788, %v3948
        %v3950 = vpop.f32.mrb[0].mxu0
        %3951 = vmatprep.mubr.bf16.mxu0 %v2723
        %3952 = vmatmul.mubr.bf16.gmra.mrb[0].mxu0 %v2722
        %v3953 = vpop.f32.mrb[0].mxu0
        %v3954 = vadd.f32 %v3793, %v3953
        %v3955 = vpop.f32.mrb[0].mxu0
        %v3956 = vpop.f32.mrb[0].mxu0
        %v3957 = vadd.f32 %v3796, %v3956
        %v3958 = vpop.f32.mrb[0].mxu0
        %3959 = vmatprep.mubr.bf16.mxu0 %v2732
        %3960 = vmatmul.mubr.bf16.gmra.mrb[0].mxu0 %v2731
        %v3961 = vpop.f32.mrb[0].mxu0
        %v3962 = vadd.f32 %v3801, %v3961
        %v3963 = vpop.f32.mrb[0].mxu0
        %v3964 = vpop.f32.mrb[0].mxu0
        %v3965 = vadd.f32 %v3804, %v3964
        %v3966 = vpop.f32.mrb[0].mxu0
        %3967 = vmatprep.mubr.bf16.mxu0 %v2741
        %3968 = vmatmul.mubr.bf16.gmra.mrb[0].mxu0 %v2740
        %v3969 = vpop.f32.mrb[0].mxu0
        %v3970 = vadd.f32 %v3809, %v3969
        %v3971 = vpop.f32.mrb[0].mxu0
        %v3972 = vpop.f32.mrb[0].mxu0
        %v3973 = vadd.f32 %v3812, %v3972
        %v3974 = vpop.f32.mrb[0].mxu0
        %3975 = vmatprep.mubr.bf16.mxu0 %v2750
        %3976 = vmatmul.mubr.bf16.gmra.mrb[0].mxu0 %v2749
        %v3977 = vpop.f32.mrb[0].mxu0
        %v3978 = vadd.f32 %v3817, %v3977
        %v3979 = vpop.f32.mrb[0].mxu0
        %v3980 = vpop.f32.mrb[0].mxu0
        %v3981 = vadd.f32 %v3820, %v3980
        %v3982 = vpop.f32.mrb[0].mxu0
        %3983 = vmatprep.mubr.bf16.mxu0 %v2759
        %3984 = vmatmul.mubr.bf16.gmra.mrb[0].mxu0 %v2758
        %v3985 = vpop.f32.mrb[0].mxu0
        %v3986 = vadd.f32 %v3825, %v3985
        %v3987 = vpop.f32.mrb[0].mxu0
        %v3988 = vpop.f32.mrb[0].mxu0
        %v3989 = vadd.f32 %v3828, %v3988
        %v3990 = vpop.f32.mrb[0].mxu0
        %3991 = vmatprep.mubr.bf16.mxu0 %v2768
        %3992 = vmatmul.mubr.bf16.gmra.mrb[0].mxu0 %v2767
        %v3993 = vpop.f32.mrb[0].mxu0
        %v3994 = vadd.f32 %v3833, %v3993
        %v3995 = vpop.f32.mrb[0].mxu0
        %v3996 = vpop.f32.mrb[0].mxu0
        %v3997 = vadd.f32 %v3836, %v3996
        %v3998 = vpop.f32.mrb[0].mxu0
        %3999 = vmatprep.mubr.bf16.mxu0 %v2777
        %4000 = vmatmul.mubr.bf16.gmra.mrb[0].mxu0 %v2776
        %v4001 = vpop.f32.mrb[0].mxu0
        %v4002 = vadd.f32 %v3841, %v4001
        %v4003 = vpop.f32.mrb[0].mxu0
        %v4004 = vpop.f32.mrb[0].mxu0
        %v4005 = vadd.f32 %v3844, %v4004
        %v4006 = vpop.f32.mrb[0].mxu0
        %4007 = vmatprep.mubr.bf16.mxu0 %v2786
        %4008 = vmatmul.mubr.bf16.gmra.mrb[0].mxu0 %v2785
        %v4009 = vpop.f32.mrb[0].mxu0
        %v4010 = vadd.f32 %v3849, %v4009
        %v4011 = vpop.f32.mrb[0].mxu0
        %v4012 = vpop.f32.mrb[0].mxu0
        %v4013 = vadd.f32 %v3852, %v4012
        %v4014 = vpop.f32.mrb[0].mxu0
        %4015 = vmatprep.mubr.bf16.mxu0 %v2795
        %4016 = vmatmul.mubr.bf16.gmra.mrb[0].mxu0 %v2794
        %v4017 = vpop.f32.mrb[0].mxu0
        %v4018 = vadd.f32 %v3857, %v4017
        %v4019 = vpop.f32.mrb[0].mxu0
        %v4020 = vpop.f32.mrb[0].mxu0
        %v4021 = vadd.f32 %v3860, %v4020
        %v4022 = vpop.f32.mrb[0].mxu0
        %4023 = vdwg.mxu0
        %4024 = vmatprep.subr.bf16.mxu0 0
        %4025 = vmatpush1.bf16.msra.mxu0 %v3300
        %4026 = vmatprep.subr.bf16.mxu0 0
        %4027 = vmatpush1.bf16.msra.mxu0 %v3301
        %4028 = vmatprep.subr.bf16.mxu0 0
        %4029 = vmatpush1.bf16.msra.mxu0 %v3302
        %4030 = vmatprep.subr.bf16.mxu0 0
        %4031 = vmatpush1.bf16.msra.mxu0 %v3303
        %4032 = vmatprep.subr.bf16.mxu0 0
        %4033 = vmatpush1.bf16.msra.mxu0 %v3304
        %4034 = vmatprep.subr.bf16.mxu0 0
        %4035 = vmatpush1.bf16.msra.mxu0 %v3305
        %4036 = vmatprep.subr.bf16.mxu0 0
        %4037 = vmatpush1.bf16.msra.mxu0 %v3306
        %4038 = vmatprep.subr.bf16.mxu0 0
        %4039 = vmatpush1.bf16.msra.mxu0 %v3307
        %4040 = vmatprep.subr.bf16.mxu0 0
        %4041 = vmatpush1.bf16.msra.mxu0 0
        %4042 = vmatprep.subr.bf16.mxu0 0
        %4043 = vmatpush1.bf16.msra.mxu0 0
        %4044 = vmatprep.subr.bf16.mxu0 0
        %4045 = vmatpush1.bf16.msra.mxu0 0
        %4046 = vmatprep.subr.bf16.mxu0 0
        %4047 = vmatpush1.bf16.msra.mxu0 0
        %4048 = vmatprep.subr.bf16.mxu0 0
        %4049 = vmatpush1.bf16.msra.mxu0 0
        %4050 = vmatprep.subr.bf16.mxu0 0
        %4051 = vmatpush1.bf16.msra.mxu0 0
        %4052 = vmatprep.subr.bf16.mxu0 0
        %4053 = vmatpush1.bf16.msra.mxu0 0
        %4054 = vmatprep.subr.bf16.mxu0 0
        %4055 = vmatpush1.bf16.msra.mxu0 0
        %4056 = vmatprep.mubr.bf16.mxu0 0
        %4057 = vmatmul.mubr.bf16.gmra.mrb[0].mxu0 %v2661
        %v4058 = vpop.f32.mrb[0].mxu0
        %v4059 = vadd.f32 %v3898, %v4058
        %v4060 = vpop.f32.mrb[0].mxu0
        %v4061 = vpop.f32.mrb[0].mxu0
        %v4062 = vadd.f32 %v3901, %v4061
        %v4063 = vpop.f32.mrb[0].mxu0
        %4064 = vmatprep.mubr.bf16.mxu0 0
        %4065 = vmatmul.mubr.bf16.gmra.mrb[0].mxu0 %v2670
        %v4066 = vpop.f32.mrb[0].mxu0
        %v4067 = vadd.f32 %v3906, %v4066
        %v4068 = vpop.f32.mrb[0].mxu0
        %v4069 = vpop.f32.mrb[0].mxu0
        %v4070 = vadd.f32 %v3909, %v4069
        %v4071 = vpop.f32.mrb[0].mxu0
        %4072 = vmatprep.mubr.bf16.mxu0 0
        %4073 = vmatmul.mubr.bf16.gmra.mrb[0].mxu0 %v2679
        %v4074 = vpop.f32.mrb[0].mxu0
        %v4075 = vadd.f32 %v3914, %v4074
        %v4076 = vpop.f32.mrb[0].mxu0
        %v4077 = vpop.f32.mrb[0].mxu0
        %v4078 = vadd.f32 %v3917, %v4077
        %v4079 = vpop.f32.mrb[0].mxu0
        %4080 = vmatprep.mubr.bf16.mxu0 0
        %4081 = vmatmul.mubr.bf16.gmra.mrb[0].mxu0 %v2688
        %v4082 = vpop.f32.mrb[0].mxu0
        %v4083 = vadd.f32 %v3922, %v4082
        %v4084 = vpop.f32.mrb[0].mxu0
        %v4085 = vpop.f32.mrb[0].mxu0
        %v4086 = vadd.f32 %v3925, %v4085
        %v4087 = vpop.f32.mrb[0].mxu0
        %4088 = vmatprep.mubr.bf16.mxu0 0
        %4089 = vmatmul.mubr.bf16.gmra.mrb[0].mxu0 %v2697
        %v4090 = vpop.f32.mrb[0].mxu0
        %v4091 = vadd.f32 %v3930, %v4090
        %v4092 = vpop.f32.mrb[0].mxu0
        %v4093 = vpop.f32.mrb[0].mxu0
        %v4094 = vadd.f32 %v3933, %v4093
        %v4095 = vpop.f32.mrb[0].mxu0
        %4096 = vmatprep.mubr.bf16.mxu0 0
        %4097 = vmatmul.mubr.bf16.gmra.mrb[0].mxu0 %v2706
        %v4098 = vpop.f32.mrb[0].mxu0
        %v4099 = vadd.f32 %v3938, %v4098
        %v4100 = vpop.f32.mrb[0].mxu0
        %v4101 = vpop.f32.mrb[0].mxu0
        %v4102 = vadd.f32 %v3941, %v4101
        %v4103 = vpop.f32.mrb[0].mxu0
        %4104 = vmatprep.mubr.bf16.mxu0 0
        %4105 = vmatmul.mubr.bf16.gmra.mrb[0].mxu0 %v2715
        %v4106 = vpop.f32.mrb[0].mxu0
        %v4107 = vadd.f32 %v3946, %v4106
        %v4108 = vpop.f32.mrb[0].mxu0
        %v4109 = vpop.f32.mrb[0].mxu0
        %v4110 = vadd.f32 %v3949, %v4109
        %v4111 = vpop.f32.mrb[0].mxu0
        %4112 = vmatprep.mubr.bf16.mxu0 0
        %4113 = vmatmul.mubr.bf16.gmra.mrb[0].mxu0 %v2724
        %v4114 = vpop.f32.mrb[0].mxu0
        %v4115 = vadd.f32 %v3954, %v4114
        %v4116 = vpop.f32.mrb[0].mxu0
        %v4117 = vpop.f32.mrb[0].mxu0
        %v4118 = vadd.f32 %v3957, %v4117
        %v4119 = vpop.f32.mrb[0].mxu0
        %4120 = vmatprep.mubr.bf16.mxu0 0
        %4121 = vmatmul.mubr.bf16.gmra.mrb[0].mxu0 %v2733
        %v4122 = vpop.f32.mrb[0].mxu0
        %v4123 = vadd.f32 %v3962, %v4122
        %v4124 = vpop.f32.mrb[0].mxu0
        %v4125 = vpop.f32.mrb[0].mxu0
        %v4126 = vadd.f32 %v3965, %v4125
        %v4127 = vpop.f32.mrb[0].mxu0
        %4128 = vmatprep.mubr.bf16.mxu0 0
        %4129 = vmatmul.mubr.bf16.gmra.mrb[0].mxu0 %v2742
        %v4130 = vpop.f32.mrb[0].mxu0
        %v4131 = vadd.f32 %v3970, %v4130
        %v4132 = vpop.f32.mrb[0].mxu0
        %v4133 = vpop.f32.mrb[0].mxu0
        %v4134 = vadd.f32 %v3973, %v4133
        %v4135 = vpop.f32.mrb[0].mxu0
        %4136 = vmatprep.mubr.bf16.mxu0 0
        %4137 = vmatmul.mubr.bf16.gmra.mrb[0].mxu0 %v2751
        %v4138 = vpop.f32.mrb[0].mxu0
        %v4139 = vadd.f32 %v3978, %v4138
        %v4140 = vpop.f32.mrb[0].mxu0
        %v4141 = vpop.f32.mrb[0].mxu0
        %v4142 = vadd.f32 %v3981, %v4141
        %v4143 = vpop.f32.mrb[0].mxu0
        %4144 = vmatprep.mubr.bf16.mxu0 0
        %4145 = vmatmul.mubr.bf16.gmra.mrb[0].mxu0 %v2760
        %v4146 = vpop.f32.mrb[0].mxu0
        %v4147 = vadd.f32 %v3986, %v4146
        %v4148 = vpop.f32.mrb[0].mxu0
        %v4149 = vpop.f32.mrb[0].mxu0
        %v4150 = vadd.f32 %v3989, %v4149
        %v4151 = vpop.f32.mrb[0].mxu0
        %4152 = vmatprep.mubr.bf16.mxu0 0
        %4153 = vmatmul.mubr.bf16.gmra.mrb[0].mxu0 %v2769
        %v4154 = vpop.f32.mrb[0].mxu0
        %v4155 = vadd.f32 %v3994, %v4154
        %v4156 = vpop.f32.mrb[0].mxu0
        %v4157 = vpop.f32.mrb[0].mxu0
        %v4158 = vadd.f32 %v3997, %v4157
        %v4159 = vpop.f32.mrb[0].mxu0
        %4160 = vmatprep.mubr.bf16.mxu0 0
        %4161 = vmatmul.mubr.bf16.gmra.mrb[0].mxu0 %v2778
        %v4162 = vpop.f32.mrb[0].mxu0
        %v4163 = vadd.f32 %v4002, %v4162
        %v4164 = vpop.f32.mrb[0].mxu0
        %v4165 = vpop.f32.mrb[0].mxu0
        %v4166 = vadd.f32 %v4005, %v4165
        %v4167 = vpop.f32.mrb[0].mxu0
        %4168 = vmatprep.mubr.bf16.mxu0 0
        %4169 = vmatmul.mubr.bf16.gmra.mrb[0].mxu0 %v2787
        %v4170 = vpop.f32.mrb[0].mxu0
        %v4171 = vadd.f32 %v4010, %v4170
        %v4172 = vpop.f32.mrb[0].mxu0
        %v4173 = vpop.f32.mrb[0].mxu0
        %v4174 = vadd.f32 %v4013, %v4173
        %v4175 = vpop.f32.mrb[0].mxu0
        %4176 = vmatprep.mubr.bf16.mxu0 0
        %4177 = vmatmul.mubr.bf16.gmra.mrb[0].mxu0 %v2796
        %v4178 = vpop.f32.mrb[0].mxu0
        %v4179 = vadd.f32 %v4018, %v4178
        %v4180 = vpop.f32.mrb[0].mxu0
        %v4181 = vpop.f32.mrb[0].mxu0
        %v4182 = vadd.f32 %v4021, %v4181
        %v4183 = vpop.f32.mrb[0].mxu0
        %4184 = vdwg.mxu0
        %v4185 = vmax.f32 %v4059, 0.0
        %v4186 = vmax.f32 %v4062, 0.0
        %v4187 = vmax.f32 %v4067, 0.0
        %v4188 = vmax.f32 %v4070, 0.0
        %v4189 = vmax.f32 %v4075, 0.0
        %v4190 = vmax.f32 %v4078, 0.0
        %v4191 = vmax.f32 %v4083, 0.0
        %v4192 = vmax.f32 %v4086, 0.0
        %v4193 = vmax.f32 %v4091, 0.0
        %v4194 = vmax.f32 %v4094, 0.0
        %v4195 = vmax.f32 %v4099, 0.0
        %v4196 = vmax.f32 %v4102, 0.0
        %v4197 = vmax.f32 %v4107, 0.0
        %v4198 = vmax.f32 %v4110, 0.0
        %v4199 = vmax.f32 %v4115, 0.0
        %v4200 = vmax.f32 %v4118, 0.0
        %v4201 = vmax.f32 %v4123, 0.0
        %v4202 = vmax.f32 %v4126, 0.0
        %v4203 = vmax.f32 %v4131, 0.0
        %v4204 = vmax.f32 %v4134, 0.0
        %v4205 = vmax.f32 %v4139, 0.0
        %v4206 = vmax.f32 %v4142, 0.0
        %v4207 = vmax.f32 %v4147, 0.0
        %v4208 = vmax.f32 %v4150, 0.0
        %v4209 = vmax.f32 %v4155, 0.0
        %v4210 = vmax.f32 %v4158, 0.0
        %v4211 = vmax.f32 %v4163, 0.0
        %v4212 = vmax.f32 %v4166, 0.0
        %v4213 = vmax.f32 %v4171, 0.0
        %v4214 = vmax.f32 %v4174, 0.0
        %v4215 = vmax.f32 %v4179, 0.0
        %v4216 = vmax.f32 %v4182, 0.0
        %4217 = vst [vmem:[%s271] sm:$0xff] %v4185
        %4218 = vst [vmem:[%s271 + $0x8] sm:$0xff] %v4186
        %4219 = vst [vmem:[%s271 + $0x10] sm:$0xff] %v4187
        %4220 = vst [vmem:[%s271 + $0x18] sm:$0xff] %v4188
        %4221 = vst [vmem:[%s271 + $0x20] sm:$0xff] %v4189
        %4222 = vst [vmem:[%s271 + $0x28] sm:$0xff] %v4190
        %4223 = vst [vmem:[%s271 + $0x30] sm:$0xff] %v4191
        %4224 = vst [vmem:[%s271 + $0x38] sm:$0xff] %v4192
        %4225 = vst [vmem:[%s271 + $0x40] sm:$0xff] %v4193
        %4226 = vst [vmem:[%s271 + $0x48] sm:$0xff] %v4194
        %4227 = vst [vmem:[%s271 + $0x50] sm:$0xff] %v4195
        %4228 = vst [vmem:[%s271 + $0x58] sm:$0xff] %v4196
        %4229 = vst [vmem:[%s271 + $0x60] sm:$0xff] %v4197
        %4230 = vst [vmem:[%s271 + $0x68] sm:$0xff] %v4198
        %4231 = vst [vmem:[%s271 + $0x70] sm:$0xff] %v4199
        %4232 = vst [vmem:[%s271 + $0x78] sm:$0xff] %v4200
        %4233 = vst [vmem:[%s271 + $0x80] sm:$0xff] %v4201
        %4234 = vst [vmem:[%s271 + $0x88] sm:$0xff] %v4202
        %4235 = vst [vmem:[%s271 + $0x90] sm:$0xff] %v4203
        %4236 = vst [vmem:[%s271 + $0x98] sm:$0xff] %v4204
        %4237 = vst [vmem:[%s271 + $0xa0] sm:$0xff] %v4205
        %4238 = vst [vmem:[%s271 + $0xa8] sm:$0xff] %v4206
        %4239 = vst [vmem:[%s271 + $0xb0] sm:$0xff] %v4207
        %4240 = vst [vmem:[%s271 + $0xb8] sm:$0xff] %v4208
        %4241 = vst [vmem:[%s271 + $0xc0] sm:$0xff] %v4209
        %4242 = vst [vmem:[%s271 + $0xc8] sm:$0xff] %v4210
        %4243 = vst [vmem:[%s271 + $0xd0] sm:$0xff] %v4211
        %4244 = vst [vmem:[%s271 + $0xd8] sm:$0xff] %v4212
        %4245 = vst [vmem:[%s271 + $0xe0] sm:$0xff] %v4213
        %4246 = vst [vmem:[%s271 + $0xe8] sm:$0xff] %v4214
        %4247 = vst [vmem:[%s271 + $0xf0] sm:$0xff] %v4215
        %4248 = vst [vmem:[%s271 + $0xf8] sm:$0xff] %v4216
        %s4249 = sand.u32 %s141, 1
        %s4250 = scalar_lea.sflag [#allocation6], %s4249
        %s4251 = sand.u32 %s141, 1
        %s4252 = smul.addr %s4251, 256
        %s4253 = scalar_lea.vmem [#allocation10], %s4252
        // Predicated region
        $region53: #{tpu_custom_call.1} parent=39 // pred_check
          %p4254 = pneg %p151
        $region54: #{tpu_custom_call.1} parent=39 // pred_check_branch
          %4256 = sbr.rel (%p4254) target = $region56
        $region55: #{tpu_custom_call.1} parent=39 // pred_region
          %s4258 = ssub.s32 4096, 4096
          %4259 = vsyncadd %s4250, %s4258
          %s4260 = smul.addr %s23, 32
          %s4261 = smul.addr %s4260, 128
          %s4262 = scalar_lea.hbm %s5, %s4261
          %s4263 = sshll.u32 %s4253, 4
          %s4264 = int_to_ptr.vmem [resolvable:$true] %s4263
          %4269 = dma.vmem_to_hbm [thread:$0]  %s4264, 4096, %s4262, %s4250, 128, 128, 8
        $region56: #{tpu_custom_call.1} parent=39 // pred_fallthru
          _
      $region40: #{tpu_custom_call.1} parent=5 // pred_fallthru
        _
      %p4270 = scmp.le.s32.totalorder 2, %s18
      // Predicated region
      $region57: #{tpu_custom_call.1} parent=5 // pred_check
        %p4271 = pneg %p4270
      $region58: #{tpu_custom_call.1} parent=5 // pred_check_branch
        %4273 = sbr.rel (%p4271) target = $region60
      $region59: #{tpu_custom_call.1} parent=5 // pred_region
        %s4274 = ssub.s32 %s18, 2
        // Predicated region
        $region61: #{tpu_custom_call.1} parent=59 // pred_check
          %p4275 = pneg %p157
        $region62: #{tpu_custom_call.1} parent=59 // pred_check_branch
          %4277 = sbr.rel (%p4275) target = $region64
        $region63: #{tpu_custom_call.1} parent=59 // pred_region
          %s4278 = sand.u32 %s142, 1
          %s4279 = scalar_lea.sflag [#allocation6], %s4278
          %s4280 = sand.u32 %s142, 1
          %s4281 = smul.addr %s4280, 256
          %s4282 = scalar_lea.vmem [#allocation10], %s4281
          %4283 = dma.done %s4279, 4096
        $region64: #{tpu_custom_call.1} parent=59 // pred_fallthru
          _
      $region60: #{tpu_custom_call.1} parent=5 // pred_fallthru
        _
    $region6: #{tpu_custom_call.1} parent=1 // loop_footer
      %s22 = sadd.s32 1, %s18
    $region7: #{tpu_custom_call.1} parent=1 // loop_footer_branch
      %17 = sbr.rel target = $region3
    $region8: #{tpu_custom_call.1} parent=1 // loop_exit
      _
    %4284 = vsyncpa [#allocation5], 1
    %s4285 = scalar_lea.sflag [#allocation5], 1
    %4286 = vsyncpa %s4285, 1
    %4287 = vsyncpa [#allocation8], 1
    %4288 = vsyncpa [#allocation6], 1
    %s4289 = scalar_lea.sflag [#allocation6], 1
    %4290 = vsyncpa %s4289, 1

</llo_original>
